<compile_context>
chip_gen: v7x
topology: tpu7x:2x2x1
jax: 0.10.0
libtpu: 0.0.40
codegen_flags: <defaults>
</compile_context>

<pallas_src>
import functools

import jax
import jax.numpy as jnp
from jax.experimental import pallas as pl
from jax.experimental.pallas import tpu as pltpu


# ------------------------------- fused kernel ------------------------------

def _fused_kernel(x_ref, w1_ref, b1_ref, wd1_ref, bd1_ref, wd2_ref, bd2_ref,
                  w2_ref, b2_ref, o_ref, pad_ref, *, H, W, c3, hidden):
    """One batch image: PW1 -> DW pass1 -> DW pass2 -> PW2, all branches packed.

    Packed channel layout (cmid = 2*c3 + hidden):
      [0:c3)            branch3 path
      [c3:c3+hidden)    conv_block path
      [c3+hidden:cmid)  branch2 path
    Output channel layout (cout = 3*c3): [branch3 | conv_block | branch2],
    which is exactly the reference's channel_concatenate order.
    """
    cmid = 2 * c3 + hidden
    cout = 3 * c3

    # ---- stage 1: block-diagonal 1x1 conv + bias + ReLU6 (every branch's PW1) ----
    x = x_ref[0].astype(jnp.float32)                        # (H, W, cin)
    y = jnp.dot(x.reshape(H * W, x.shape[-1]), w1_ref[...],
                preferred_element_type=jnp.float32)
    y = jnp.clip(y + b1_ref[...], 0.0, 6.0)                 # all three PW1 are ReLU6
    y = y.reshape(H, W, cmid)

    # Zero the padded scratch once per grid step (borders stay zero, the
    # interior is overwritten by each depthwise pass).
    pad_ref[...] = jnp.zeros_like(pad_ref)

    def depthwise(val, w_ref, b_ref):
        # zero-padded 3x3 depthwise conv, stride 1, pad 1 (padding lives in VMEM)
        pad_ref[pl.ds(1, H), pl.ds(1, W), :] = val
        xp = pad_ref[...]                                   # (H+2, W+2, cmid)
        w = w_ref[...]                                      # (3, 3, cmid)
        acc = jnp.zeros((H, W, cmid), jnp.float32)
        for dh in range(3):
            for dw in range(3):
                acc = acc + xp[dh:dh + H, dw:dw + W, :] * w[dh, dw, :]
        return acc + b_ref[0, :]

    # ---- stage 2: packed depthwise pass 1 (b3 dw / cb dw / b2 dw1) ----
    y = depthwise(y, wd1_ref, bd1_ref)
    ch = jax.lax.broadcasted_iota(jnp.int32, (1, 1, cmid), 2)
    relu_mid = (ch >= c3) & (ch < c3 + hidden)              # only conv_block's dw is ReLU6
    y = jnp.where(relu_mid, jnp.clip(y, 0.0, 6.0), y)

    # ---- stage 3: packed depthwise pass 2 (identity except branch2's 2nd dw, Linear) ----
    y = depthwise(y, wd2_ref, bd2_ref)

    # ---- stage 4: block-diagonal 1x1 conv + bias + selective ReLU6 ----
    z = jnp.dot(y.reshape(H * W, cmid), w2_ref[...],
                preferred_element_type=jnp.float32)
    z = z + b2_ref[...]
    co = jax.lax.broadcasted_iota(jnp.int32, (1, cout), 1)
    relu_out = (co < c3) | (co >= 2 * c3)                   # conv_block's last PW is Linear
    z = jnp.where(relu_out, jnp.clip(z, 0.0, 6.0), z)

    o_ref[0] = z.reshape(H, W, cout).astype(o_ref.dtype)    # already-concatenated slab


# ------------------------ parameter initialization -------------------------

def _bn_affine(key, c):
    kg, kb, km, kv = jax.random.split(key, 4)
    gamma = 1.0 + 0.1 * jax.random.normal(kg, (c,), jnp.float32)
    beta = 0.1 * jax.random.normal(kb, (c,), jnp.float32)
    mean = 0.05 * jax.random.normal(km, (c,), jnp.float32)
    var = jnp.abs(1.0 + 0.1 * jax.random.normal(kv, (c,), jnp.float32))
    scale = gamma * jax.lax.rsqrt(var + 1e-5)
    bias = beta - mean * scale
    return scale, bias


def make_pw(key, cin, cout):
    kw, kbn = jax.random.split(key)
    w = 0.2 * jax.random.normal(kw, (cin, cout), jnp.float32)
    scale, bias = _bn_affine(kbn, cout)
    return (w, scale, bias)


def make_dw(key, c):
    kw, kbn = jax.random.split(key)
    w = 0.2 * jax.random.normal(kw, (3, 3, c), jnp.float32)
    scale, bias = _bn_affine(kbn, c)
    return (w, scale, bias)


def init_params(key, in_c, out_c, expansion_factor):
    # use_connect path: stride == 1 and in_c == out_c
    hidden_c = round(in_c) * expansion_factor   # computed from original in_c
    out_half_c = out_c // 3                     # per-branch channel width
    keys = jax.random.split(key, 10)
    p = {}
    # conv_block (expansion_factor != 1): PW(ReLU6), DW(ReLU6), PW(Linear)
    p["cb_pw1"] = make_pw(keys[0], out_half_c, hidden_c)
    p["cb_dw"] = make_dw(keys[1], hidden_c)
    p["cb_pw2"] = make_pw(keys[2], hidden_c, out_half_c)
    # branch3: PW(ReLU6), DW(Linear), PW(ReLU6)
    p["b3_pw1"] = make_pw(keys[3], out_half_c, out_half_c)
    p["b3_dw"] = make_dw(keys[4], out_half_c)
    p["b3_pw2"] = make_pw(keys[5], out_half_c, out_half_c)
    # branch2: PW(ReLU6), DW(Linear), DW(Linear), PW(ReLU6)
    p["b2_pw1"] = make_pw(keys[6], out_half_c, out_half_c)
    p["b2_dw1"] = make_dw(keys[7], out_half_c)
    p["b2_dw2"] = make_dw(keys[8], out_half_c)
    p["b2_pw2"] = make_pw(keys[9], out_half_c, out_half_c)
    return p


def pack_params(p, *, c3, hidden):
    """Fold BN scale into weights and pack the three branches block-diagonally."""
    cmid = 2 * c3 + hidden
    cin = cout = 3 * c3

    def fold_pw(pw):   # y = (x @ w) * s + b  ==  x @ (w * s) + b
        w, s, b = pw
        return w * s[None, :], b

    def fold_dw(dw):
        w, s, b = dw
        return w * s[None, None, :], b

    # PW1: (cin, cmid) block-diagonal, all ReLU6
    w_b3, b_b3 = fold_pw(p["b3_pw1"])
    w_cb, b_cb = fold_pw(p["cb_pw1"])
    w_b2, b_b2 = fold_pw(p["b2_pw1"])
    W1 = jnp.zeros((cin, cmid), jnp.float32)
    W1 = W1.at[0:c3, 0:c3].set(w_b3)
    W1 = W1.at[c3:2 * c3, c3:c3 + hidden].set(w_cb)
    W1 = W1.at[2 * c3:3 * c3, c3 + hidden:cmid].set(w_b2)
    B1 = jnp.concatenate([b_b3, b_cb, b_b2])

    # DW pass 1: concat of each branch's first depthwise
    wd_b3, bd_b3 = fold_dw(p["b3_dw"])
    wd_cb, bd_cb = fold_dw(p["cb_dw"])
    wd_b2a, bd_b2a = fold_dw(p["b2_dw1"])
    WD1 = jnp.concatenate([wd_b3, wd_cb, wd_b2a], axis=-1)
    BD1 = jnp.concatenate([bd_b3, bd_cb, bd_b2a])

    # DW pass 2: identity (center tap = 1, bias 0) everywhere except branch2's 2nd dw
    wd_b2b, bd_b2b = fold_dw(p["b2_dw2"])
    ident = jnp.zeros((3, 3, c3 + hidden), jnp.float32).at[1, 1, :].set(1.0)
    WD2 = jnp.concatenate([ident, wd_b2b], axis=-1)
    BD2 = jnp.concatenate([jnp.zeros((c3 + hidden,), jnp.float32), bd_b2b])

    # PW2: (cmid, cout) block-diagonal; ReLU6 on b3/b2 columns, Linear on cb columns
    w_b3, b_b3 = fold_pw(p["b3_pw2"])
    w_cb, b_cb = fold_pw(p["cb_pw2"])
    w_b2, b_b2 = fold_pw(p["b2_pw2"])
    W2 = jnp.zeros((cmid, cout), jnp.float32)
    W2 = W2.at[0:c3, 0:c3].set(w_b3)
    W2 = W2.at[c3:c3 + hidden, c3:2 * c3].set(w_cb)
    W2 = W2.at[c3 + hidden:cmid, 2 * c3:3 * c3].set(w_b2)
    B2 = jnp.concatenate([b_b3, b_cb, b_b2])

    return dict(W1=W1, B1=B1.reshape(1, cmid),
                WD1=WD1, BD1=BD1.reshape(1, cmid),
                WD2=WD2, BD2=BD2.reshape(1, cmid),
                W2=W2, B2=B2.reshape(1, cout))


# ------------------------------ forward pass -------------------------------

def inverted_residual_as13_forward(x_nchw, packed, *, c3, hidden):
    # TODO(synk): BatchNorm is applied in inference mode (running stats folded
    # into the conv weights/bias); fresh-module train-mode batch statistics are
    # not reproduced.
    x = jnp.transpose(x_nchw, (0, 2, 3, 1))      # NCHW -> NHWC (layout plumbing)
    N, H, W, cin = x.shape
    cmid = 2 * c3 + hidden
    cout = 3 * c3
    assert cin == cout

    out = pl.pallas_call(
        functools.partial(_fused_kernel, H=H, W=W, c3=c3, hidden=hidden),
        out_shape=jax.ShapeDtypeStruct((N, H, W, cout), jnp.float32),
        grid_spec=pltpu.PrefetchScalarGridSpec(
            num_scalar_prefetch=0,
            grid=(N,),
            in_specs=[
                pl.BlockSpec((1, H, W, cin), lambda n: (n, 0, 0, 0)),
                pl.BlockSpec((cin, cmid), lambda n: (0, 0)),
                pl.BlockSpec((1, cmid), lambda n: (0, 0)),
                pl.BlockSpec((3, 3, cmid), lambda n: (0, 0, 0)),
                pl.BlockSpec((1, cmid), lambda n: (0, 0)),
                pl.BlockSpec((3, 3, cmid), lambda n: (0, 0, 0)),
                pl.BlockSpec((1, cmid), lambda n: (0, 0)),
                pl.BlockSpec((cmid, cout), lambda n: (0, 0)),
                pl.BlockSpec((1, cout), lambda n: (0, 0)),
            ],
            out_specs=pl.BlockSpec((1, H, W, cout), lambda n: (n, 0, 0, 0)),
            scratch_shapes=[pltpu.VMEM((H + 2, W + 2, cmid), jnp.float32)],
        ),
        compiler_params=pltpu.CompilerParams(
            dimension_semantics=("parallel",)),   # v7x: one image per TensorCore
    )(x, packed["W1"], packed["B1"], packed["WD1"], packed["BD1"],
      packed["WD2"], packed["BD2"], packed["W2"], packed["B2"])

    # channel_shuffle(out, 3): the reference discards the transpose result
    # (torch.transpose(...).contiguous() not assigned), so it is an identity.
    return jnp.transpose(out, (0, 3, 1, 2))       # NHWC -> NCHW


if __name__ == "__main__":
    in_c = out_c = 12          # use_connect: stride == 1 and in_c == out_c
    expansion = 2
    N, H, W = 2, 16, 16
    c3 = out_c // 3            # per-branch channel width (4)
    hidden = round(in_c) * expansion  # conv_block hidden width (24)

    key = jax.random.PRNGKey(0)
    kx, kp = jax.random.split(key)
    x = jax.random.normal(kx, (N, in_c, H, W), jnp.float32)
    params = init_params(kp, in_c, out_c, expansion)
    packed = pack_params(params, c3=c3, hidden=hidden)

    fwd = jax.jit(lambda xx: inverted_residual_as13_forward(
        xx, packed, c3=c3, hidden=hidden))
    out = fwd(x)
    jax.block_until_ready(out)
    assert out.shape == (N, out_c, H, W), out.shape
    print("KERNEL_OK")
</pallas_src>

<mosaic_0001>
module attributes {stable_mosaic.version = 11 : i64} {
  func.func @_fused_kernel(%arg0: i32, %arg1: memref<1x16x16x12xf32, #tpu.memory_space<vmem>>, %arg2: memref<12x32xf32, #tpu.memory_space<vmem>>, %arg3: memref<1x32xf32, #tpu.memory_space<vmem>>, %arg4: memref<3x3x32xf32, #tpu.memory_space<vmem>>, %arg5: memref<1x32xf32, #tpu.memory_space<vmem>>, %arg6: memref<3x3x32xf32, #tpu.memory_space<vmem>>, %arg7: memref<1x32xf32, #tpu.memory_space<vmem>>, %arg8: memref<32x12xf32, #tpu.memory_space<vmem>>, %arg9: memref<1x12xf32, #tpu.memory_space<vmem>>, %arg10: memref<1x16x16x12xf32, #tpu.memory_space<vmem>>, %arg11: memref<18x18x32xf32, #tpu.memory_space<vmem>>) attributes {dimension_semantics = [#tpu.dimension_semantics<parallel>], iteration_bounds = array<i64: 2>, scalar_prefetch = 0 : i64, scratch_operands = 1 : i64, tpu.core_type = #tpu.core_type<tc>, window_params = [{transform_indices = @transform_0, window_bounds = array<i64: 1, 16, 16, 12>}, {pipeline_mode = #tpu.pipeline_mode<synchronous>, transform_indices = @transform_1, window_bounds = array<i64: 12, 32>}, {pipeline_mode = #tpu.pipeline_mode<synchronous>, transform_indices = @transform_2, window_bounds = array<i64: 1, 32>}, {pipeline_mode = #tpu.pipeline_mode<synchronous>, transform_indices = @transform_3, window_bounds = array<i64: 3, 3, 32>}, {pipeline_mode = #tpu.pipeline_mode<synchronous>, transform_indices = @transform_4, window_bounds = array<i64: 1, 32>}, {pipeline_mode = #tpu.pipeline_mode<synchronous>, transform_indices = @transform_5, window_bounds = array<i64: 3, 3, 32>}, {pipeline_mode = #tpu.pipeline_mode<synchronous>, transform_indices = @transform_6, window_bounds = array<i64: 1, 32>}, {pipeline_mode = #tpu.pipeline_mode<synchronous>, transform_indices = @transform_7, window_bounds = array<i64: 32, 12>}, {pipeline_mode = #tpu.pipeline_mode<synchronous>, transform_indices = @transform_8, window_bounds = array<i64: 1, 12>}, {transform_indices = @transform_9, window_bounds = array<i64: 1, 16, 16, 12>}]} {
    %c0 = arith.constant 0 : index
    %c0_0 = arith.constant 0 : index
    %c0_1 = arith.constant 0 : index
    %c0_2 = arith.constant 0 : index
    %0 = vector.load %arg1[%c0, %c0_0, %c0_1, %c0_2] : memref<1x16x16x12xf32, #tpu.memory_space<vmem>>, vector<1x16x16x12xf32>
    %1 = vector.shape_cast %0 : vector<1x16x16x12xf32> to vector<16x16x12xf32>
    %2 = vector.shape_cast %1 : vector<16x16x12xf32> to vector<256x12xf32>
    %c0_3 = arith.constant 0 : index
    %c0_4 = arith.constant 0 : index
    %3 = vector.load %arg2[%c0_3, %c0_4] : memref<12x32xf32, #tpu.memory_space<vmem>>, vector<12x32xf32>
    %cst = arith.constant dense<0.000000e+00> : vector<256x32xf32>
    %4 = tpu.matmul %2, %3, %cst {dimension_numbers = #tpu.dot_dimension_numbers<[1], [0], [0], [1], [0, 0, 1, 1], [], []>} : vector<256x12xf32>, vector<12x32xf32>, vector<256x32xf32> -> vector<256x32xf32>
    %c0_5 = arith.constant 0 : index
    %c0_6 = arith.constant 0 : index
    %5 = vector.load %arg3[%c0_5, %c0_6] : memref<1x32xf32, #tpu.memory_space<vmem>>, vector<1x32xf32>
    %6 = vector.broadcast %5 : vector<1x32xf32> to vector<256x32xf32>
    %7 = arith.addf %4, %6 : vector<256x32xf32>
    %cst_7 = arith.constant 0.000000e+00 : f32
    %cst_8 = arith.constant 6.000000e+00 : f32
    %8 = vector.broadcast %cst_7 : f32 to vector<256x32xf32>
    %9 = arith.maximumf %8, %7 : vector<256x32xf32>
    %10 = vector.broadcast %cst_8 : f32 to vector<256x32xf32>
    %11 = arith.minimumf %10, %9 : vector<256x32xf32>
    %12 = vector.shape_cast %11 : vector<256x32xf32> to vector<16x16x32xf32>
    %cst_9 = arith.constant 0.000000e+00 : f32
    %13 = vector.broadcast %cst_9 : f32 to vector<18x18x32xf32>
    %c0_10 = arith.constant 0 : index
    %c0_11 = arith.constant 0 : index
    %c0_12 = arith.constant 0 : index
    %14 = vector.load %arg11[%c0_10, %c0_11, %c0_12] : memref<18x18x32xf32, #tpu.memory_space<vmem>>, vector<18x18x32xf32>
    tpu.vector_store %arg11[%c0_10, %c0_11, %c0_12], %13 {strides = array<i32>} : memref<18x18x32xf32, #tpu.memory_space<vmem>>, vector<18x18x32xf32>,
    %c1 = arith.constant 1 : index
    %c1_13 = arith.constant 1 : index
    %c0_14 = arith.constant 0 : index
    %15 = vector.load %arg11[%c1, %c1_13, %c0_14] : memref<18x18x32xf32, #tpu.memory_space<vmem>>, vector<16x16x32xf32>
    tpu.vector_store %arg11[%c1, %c1_13, %c0_14], %12 {strides = array<i32>} : memref<18x18x32xf32, #tpu.memory_space<vmem>>, vector<16x16x32xf32>,
    %c0_15 = arith.constant 0 : index
    %c0_16 = arith.constant 0 : index
    %c0_17 = arith.constant 0 : index
    %16 = vector.load %arg11[%c0_15, %c0_16, %c0_17] : memref<18x18x32xf32, #tpu.memory_space<vmem>>, vector<18x18x32xf32>
    %c0_18 = arith.constant 0 : index
    %c0_19 = arith.constant 0 : index
    %c0_20 = arith.constant 0 : index
    %17 = vector.load %arg4[%c0_18, %c0_19, %c0_20] : memref<3x3x32xf32, #tpu.memory_space<vmem>>, vector<3x3x32xf32>
    %cst_21 = arith.constant 0.000000e+00 : f32
    %18 = vector.broadcast %cst_21 : f32 to vector<16x16x32xf32>
    %19 = vector.extract_strided_slice %16 {offsets = [0, 0, 0], sizes = [16, 16, 32], strides = [1, 1, 1]} : vector<18x18x32xf32> to vector<16x16x32xf32>
    %20 = vector.extract_strided_slice %17 {offsets = [0, 0, 0], sizes = [1, 1, 32], strides = [1, 1, 1]} : vector<3x3x32xf32> to vector<1x1x32xf32>
    %21 = vector.shape_cast %20 : vector<1x1x32xf32> to vector<32xf32>
    %22 = vector.shape_cast %21 : vector<32xf32> to vector<1x1x32xf32>
    %23 = vector.broadcast %22 : vector<1x1x32xf32> to vector<16x16x32xf32>
    %24 = arith.mulf %19, %23 : vector<16x16x32xf32>
    %25 = arith.addf %18, %24 : vector<16x16x32xf32>
    %26 = vector.extract_strided_slice %16 {offsets = [0, 1, 0], sizes = [16, 16, 32], strides = [1, 1, 1]} : vector<18x18x32xf32> to vector<16x16x32xf32>
    %27 = vector.extract_strided_slice %17 {offsets = [0, 1, 0], sizes = [1, 1, 32], strides = [1, 1, 1]} : vector<3x3x32xf32> to vector<1x1x32xf32>
    %28 = vector.shape_cast %27 : vector<1x1x32xf32> to vector<32xf32>
    %29 = vector.shape_cast %28 : vector<32xf32> to vector<1x1x32xf32>
    %30 = vector.broadcast %29 : vector<1x1x32xf32> to vector<16x16x32xf32>
    %31 = arith.mulf %26, %30 : vector<16x16x32xf32>
    %32 = arith.addf %25, %31 : vector<16x16x32xf32>
    %33 = vector.extract_strided_slice %16 {offsets = [0, 2, 0], sizes = [16, 16, 32], strides = [1, 1, 1]} : vector<18x18x32xf32> to vector<16x16x32xf32>
    %34 = vector.extract_strided_slice %17 {offsets = [0, 2, 0], sizes = [1, 1, 32], strides = [1, 1, 1]} : vector<3x3x32xf32> to vector<1x1x32xf32>
    %35 = vector.shape_cast %34 : vector<1x1x32xf32> to vector<32xf32>
    %36 = vector.shape_cast %35 : vector<32xf32> to vector<1x1x32xf32>
    %37 = vector.broadcast %36 : vector<1x1x32xf32> to vector<16x16x32xf32>
    %38 = arith.mulf %33, %37 : vector<16x16x32xf32>
    %39 = arith.addf %32, %38 : vector<16x16x32xf32>
    %40 = vector.extract_strided_slice %16 {offsets = [1, 0, 0], sizes = [16, 16, 32], strides = [1, 1, 1]} : vector<18x18x32xf32> to vector<16x16x32xf32>
    %41 = vector.extract_strided_slice %17 {offsets = [1, 0, 0], sizes = [1, 1, 32], strides = [1, 1, 1]} : vector<3x3x32xf32> to vector<1x1x32xf32>
    %42 = vector.shape_cast %41 : vector<1x1x32xf32> to vector<32xf32>
    %43 = vector.shape_cast %42 : vector<32xf32> to vector<1x1x32xf32>
    %44 = vector.broadcast %43 : vector<1x1x32xf32> to vector<16x16x32xf32>
    %45 = arith.mulf %40, %44 : vector<16x16x32xf32>
    %46 = arith.addf %39, %45 : vector<16x16x32xf32>
    %47 = vector.extract_strided_slice %16 {offsets = [1, 1, 0], sizes = [16, 16, 32], strides = [1, 1, 1]} : vector<18x18x32xf32> to vector<16x16x32xf32>
    %48 = vector.extract_strided_slice %17 {offsets = [1, 1, 0], sizes = [1, 1, 32], strides = [1, 1, 1]} : vector<3x3x32xf32> to vector<1x1x32xf32>
    %49 = vector.shape_cast %48 : vector<1x1x32xf32> to vector<32xf32>
    %50 = vector.shape_cast %49 : vector<32xf32> to vector<1x1x32xf32>
    %51 = vector.broadcast %50 : vector<1x1x32xf32> to vector<16x16x32xf32>
    %52 = arith.mulf %47, %51 : vector<16x16x32xf32>
    %53 = arith.addf %46, %52 : vector<16x16x32xf32>
    %54 = vector.extract_strided_slice %16 {offsets = [1, 2, 0], sizes = [16, 16, 32], strides = [1, 1, 1]} : vector<18x18x32xf32> to vector<16x16x32xf32>
    %55 = vector.extract_strided_slice %17 {offsets = [1, 2, 0], sizes = [1, 1, 32], strides = [1, 1, 1]} : vector<3x3x32xf32> to vector<1x1x32xf32>
    %56 = vector.shape_cast %55 : vector<1x1x32xf32> to vector<32xf32>
    %57 = vector.shape_cast %56 : vector<32xf32> to vector<1x1x32xf32>
    %58 = vector.broadcast %57 : vector<1x1x32xf32> to vector<16x16x32xf32>
    %59 = arith.mulf %54, %58 : vector<16x16x32xf32>
    %60 = arith.addf %53, %59 : vector<16x16x32xf32>
    %61 = vector.extract_strided_slice %16 {offsets = [2, 0, 0], sizes = [16, 16, 32], strides = [1, 1, 1]} : vector<18x18x32xf32> to vector<16x16x32xf32>
    %62 = vector.extract_strided_slice %17 {offsets = [2, 0, 0], sizes = [1, 1, 32], strides = [1, 1, 1]} : vector<3x3x32xf32> to vector<1x1x32xf32>
    %63 = vector.shape_cast %62 : vector<1x1x32xf32> to vector<32xf32>
    %64 = vector.shape_cast %63 : vector<32xf32> to vector<1x1x32xf32>
    %65 = vector.broadcast %64 : vector<1x1x32xf32> to vector<16x16x32xf32>
    %66 = arith.mulf %61, %65 : vector<16x16x32xf32>
    %67 = arith.addf %60, %66 : vector<16x16x32xf32>
    %68 = vector.extract_strided_slice %16 {offsets = [2, 1, 0], sizes = [16, 16, 32], strides = [1, 1, 1]} : vector<18x18x32xf32> to vector<16x16x32xf32>
    %69 = vector.extract_strided_slice %17 {offsets = [2, 1, 0], sizes = [1, 1, 32], strides = [1, 1, 1]} : vector<3x3x32xf32> to vector<1x1x32xf32>
    %70 = vector.shape_cast %69 : vector<1x1x32xf32> to vector<32xf32>
    %71 = vector.shape_cast %70 : vector<32xf32> to vector<1x1x32xf32>
    %72 = vector.broadcast %71 : vector<1x1x32xf32> to vector<16x16x32xf32>
    %73 = arith.mulf %68, %72 : vector<16x16x32xf32>
    %74 = arith.addf %67, %73 : vector<16x16x32xf32>
    %75 = vector.extract_strided_slice %16 {offsets = [2, 2, 0], sizes = [16, 16, 32], strides = [1, 1, 1]} : vector<18x18x32xf32> to vector<16x16x32xf32>
    %76 = vector.extract_strided_slice %17 {offsets = [2, 2, 0], sizes = [1, 1, 32], strides = [1, 1, 1]} : vector<3x3x32xf32> to vector<1x1x32xf32>
    %77 = vector.shape_cast %76 : vector<1x1x32xf32> to vector<32xf32>
    %78 = vector.shape_cast %77 : vector<32xf32> to vector<1x1x32xf32>
    %79 = vector.broadcast %78 : vector<1x1x32xf32> to vector<16x16x32xf32>
    %80 = arith.mulf %75, %79 : vector<16x16x32xf32>
    %81 = arith.addf %74, %80 : vector<16x16x32xf32>
    %c0_22 = arith.constant 0 : index
    %c0_23 = arith.constant 0 : index
    %82 = vector.load %arg5[%c0_22, %c0_23] : memref<1x32xf32, #tpu.memory_space<vmem>>, vector<1x32xf32>
    %83 = vector.shape_cast %82 : vector<1x32xf32> to vector<32xf32>
    %84 = vector.shape_cast %83 : vector<32xf32> to vector<1x1x32xf32>
    %85 = vector.broadcast %84 : vector<1x1x32xf32> to vector<16x16x32xf32>
    %86 = arith.addf %81, %85 : vector<16x16x32xf32>
    %87 = tpu.iota {dimensions = array<i32: 2>} : vector<1x1x32xi32>
    %c4_i32 = arith.constant 4 : i32
    %88 = vector.broadcast %c4_i32 : i32 to vector<1x1x32xi32>
    %89 = arith.cmpi sge, %87, %88 : vector<1x1x32xi32>
    %c28_i32 = arith.constant 28 : i32
    %90 = vector.broadcast %c28_i32 : i32 to vector<1x1x32xi32>
    %91 = arith.cmpi slt, %87, %90 : vector<1x1x32xi32>
    %92 = arith.andi %89, %91 : vector<1x1x32xi1>
    %cst_24 = arith.constant 0.000000e+00 : f32
    %cst_25 = arith.constant 6.000000e+00 : f32
    %93 = vector.broadcast %cst_24 : f32 to vector<16x16x32xf32>
    %94 = arith.maximumf %93, %86 : vector<16x16x32xf32>
    %95 = vector.broadcast %cst_25 : f32 to vector<16x16x32xf32>
    %96 = arith.minimumf %95, %94 : vector<16x16x32xf32>
    %97 = vector.shape_cast %92 : vector<1x1x32xi1> to vector<1x1x32xi1>
    %98 = vector.broadcast %97 : vector<1x1x32xi1> to vector<16x16x32xi1>
    %99 = arith.select %98, %96, %86 : vector<16x16x32xi1>, vector<16x16x32xf32>
    %c1_26 = arith.constant 1 : index
    %c1_27 = arith.constant 1 : index
    %c0_28 = arith.constant 0 : index
    %100 = vector.load %arg11[%c1_26, %c1_27, %c0_28] : memref<18x18x32xf32, #tpu.memory_space<vmem>>, vector<16x16x32xf32>
    tpu.vector_store %arg11[%c1_26, %c1_27, %c0_28], %99 {strides = array<i32>} : memref<18x18x32xf32, #tpu.memory_space<vmem>>, vector<16x16x32xf32>,
    %c0_29 = arith.constant 0 : index
    %c0_30 = arith.constant 0 : index
    %c0_31 = arith.constant 0 : index
    %101 = vector.load %arg11[%c0_29, %c0_30, %c0_31] : memref<18x18x32xf32, #tpu.memory_space<vmem>>, vector<18x18x32xf32>
    %c0_32 = arith.constant 0 : index
    %c0_33 = arith.constant 0 : index
    %c0_34 = arith.constant 0 : index
    %102 = vector.load %arg6[%c0_32, %c0_33, %c0_34] : memref<3x3x32xf32, #tpu.memory_space<vmem>>, vector<3x3x32xf32>
    %cst_35 = arith.constant 0.000000e+00 : f32
    %103 = vector.broadcast %cst_35 : f32 to vector<16x16x32xf32>
    %104 = vector.extract_strided_slice %101 {offsets = [0, 0, 0], sizes = [16, 16, 32], strides = [1, 1, 1]} : vector<18x18x32xf32> to vector<16x16x32xf32>
    %105 = vector.extract_strided_slice %102 {offsets = [0, 0, 0], sizes = [1, 1, 32], strides = [1, 1, 1]} : vector<3x3x32xf32> to vector<1x1x32xf32>
    %106 = vector.shape_cast %105 : vector<1x1x32xf32> to vector<32xf32>
    %107 = vector.shape_cast %106 : vector<32xf32> to vector<1x1x32xf32>
    %108 = vector.broadcast %107 : vector<1x1x32xf32> to vector<16x16x32xf32>
    %109 = arith.mulf %104, %108 : vector<16x16x32xf32>
    %110 = arith.addf %103, %109 : vector<16x16x32xf32>
    %111 = vector.extract_strided_slice %101 {offsets = [0, 1, 0], sizes = [16, 16, 32], strides = [1, 1, 1]} : vector<18x18x32xf32> to vector<16x16x32xf32>
    %112 = vector.extract_strided_slice %102 {offsets = [0, 1, 0], sizes = [1, 1, 32], strides = [1, 1, 1]} : vector<3x3x32xf32> to vector<1x1x32xf32>
    %113 = vector.shape_cast %112 : vector<1x1x32xf32> to vector<32xf32>
    %114 = vector.shape_cast %113 : vector<32xf32> to vector<1x1x32xf32>
    %115 = vector.broadcast %114 : vector<1x1x32xf32> to vector<16x16x32xf32>
    %116 = arith.mulf %111, %115 : vector<16x16x32xf32>
    %117 = arith.addf %110, %116 : vector<16x16x32xf32>
    %118 = vector.extract_strided_slice %101 {offsets = [0, 2, 0], sizes = [16, 16, 32], strides = [1, 1, 1]} : vector<18x18x32xf32> to vector<16x16x32xf32>
    %119 = vector.extract_strided_slice %102 {offsets = [0, 2, 0], sizes = [1, 1, 32], strides = [1, 1, 1]} : vector<3x3x32xf32> to vector<1x1x32xf32>
    %120 = vector.shape_cast %119 : vector<1x1x32xf32> to vector<32xf32>
    %121 = vector.shape_cast %120 : vector<32xf32> to vector<1x1x32xf32>
    %122 = vector.broadcast %121 : vector<1x1x32xf32> to vector<16x16x32xf32>
    %123 = arith.mulf %118, %122 : vector<16x16x32xf32>
    %124 = arith.addf %117, %123 : vector<16x16x32xf32>
    %125 = vector.extract_strided_slice %101 {offsets = [1, 0, 0], sizes = [16, 16, 32], strides = [1, 1, 1]} : vector<18x18x32xf32> to vector<16x16x32xf32>
    %126 = vector.extract_strided_slice %102 {offsets = [1, 0, 0], sizes = [1, 1, 32], strides = [1, 1, 1]} : vector<3x3x32xf32> to vector<1x1x32xf32>
    %127 = vector.shape_cast %126 : vector<1x1x32xf32> to vector<32xf32>
    %128 = vector.shape_cast %127 : vector<32xf32> to vector<1x1x32xf32>
    %129 = vector.broadcast %128 : vector<1x1x32xf32> to vector<16x16x32xf32>
    %130 = arith.mulf %125, %129 : vector<16x16x32xf32>
    %131 = arith.addf %124, %130 : vector<16x16x32xf32>
    %132 = vector.extract_strided_slice %101 {offsets = [1, 1, 0], sizes = [16, 16, 32], strides = [1, 1, 1]} : vector<18x18x32xf32> to vector<16x16x32xf32>
    %133 = vector.extract_strided_slice %102 {offsets = [1, 1, 0], sizes = [1, 1, 32], strides = [1, 1, 1]} : vector<3x3x32xf32> to vector<1x1x32xf32>
    %134 = vector.shape_cast %133 : vector<1x1x32xf32> to vector<32xf32>
    %135 = vector.shape_cast %134 : vector<32xf32> to vector<1x1x32xf32>
    %136 = vector.broadcast %135 : vector<1x1x32xf32> to vector<16x16x32xf32>
    %137 = arith.mulf %132, %136 : vector<16x16x32xf32>
    %138 = arith.addf %131, %137 : vector<16x16x32xf32>
    %139 = vector.extract_strided_slice %101 {offsets = [1, 2, 0], sizes = [16, 16, 32], strides = [1, 1, 1]} : vector<18x18x32xf32> to vector<16x16x32xf32>
    %140 = vector.extract_strided_slice %102 {offsets = [1, 2, 0], sizes = [1, 1, 32], strides = [1, 1, 1]} : vector<3x3x32xf32> to vector<1x1x32xf32>
    %141 = vector.shape_cast %140 : vector<1x1x32xf32> to vector<32xf32>
    %142 = vector.shape_cast %141 : vector<32xf32> to vector<1x1x32xf32>
    %143 = vector.broadcast %142 : vector<1x1x32xf32> to vector<16x16x32xf32>
    %144 = arith.mulf %139, %143 : vector<16x16x32xf32>
    %145 = arith.addf %138, %144 : vector<16x16x32xf32>
    %146 = vector.extract_strided_slice %101 {offsets = [2, 0, 0], sizes = [16, 16, 32], strides = [1, 1, 1]} : vector<18x18x32xf32> to vector<16x16x32xf32>
    %147 = vector.extract_strided_slice %102 {offsets = [2, 0, 0], sizes = [1, 1, 32], strides = [1, 1, 1]} : vector<3x3x32xf32> to vector<1x1x32xf32>
    %148 = vector.shape_cast %147 : vector<1x1x32xf32> to vector<32xf32>
    %149 = vector.shape_cast %148 : vector<32xf32> to vector<1x1x32xf32>
    %150 = vector.broadcast %149 : vector<1x1x32xf32> to vector<16x16x32xf32>
    %151 = arith.mulf %146, %150 : vector<16x16x32xf32>
    %152 = arith.addf %145, %151 : vector<16x16x32xf32>
    %153 = vector.extract_strided_slice %101 {offsets = [2, 1, 0], sizes = [16, 16, 32], strides = [1, 1, 1]} : vector<18x18x32xf32> to vector<16x16x32xf32>
    %154 = vector.extract_strided_slice %102 {offsets = [2, 1, 0], sizes = [1, 1, 32], strides = [1, 1, 1]} : vector<3x3x32xf32> to vector<1x1x32xf32>
    %155 = vector.shape_cast %154 : vector<1x1x32xf32> to vector<32xf32>
    %156 = vector.shape_cast %155 : vector<32xf32> to vector<1x1x32xf32>
    %157 = vector.broadcast %156 : vector<1x1x32xf32> to vector<16x16x32xf32>
    %158 = arith.mulf %153, %157 : vector<16x16x32xf32>
    %159 = arith.addf %152, %158 : vector<16x16x32xf32>
    %160 = vector.extract_strided_slice %101 {offsets = [2, 2, 0], sizes = [16, 16, 32], strides = [1, 1, 1]} : vector<18x18x32xf32> to vector<16x16x32xf32>
    %161 = vector.extract_strided_slice %102 {offsets = [2, 2, 0], sizes = [1, 1, 32], strides = [1, 1, 1]} : vector<3x3x32xf32> to vector<1x1x32xf32>
    %162 = vector.shape_cast %161 : vector<1x1x32xf32> to vector<32xf32>
    %163 = vector.shape_cast %162 : vector<32xf32> to vector<1x1x32xf32>
    %164 = vector.broadcast %163 : vector<1x1x32xf32> to vector<16x16x32xf32>
    %165 = arith.mulf %160, %164 : vector<16x16x32xf32>
    %166 = arith.addf %159, %165 : vector<16x16x32xf32>
    %c0_36 = arith.constant 0 : index
    %c0_37 = arith.constant 0 : index
    %167 = vector.load %arg7[%c0_36, %c0_37] : memref<1x32xf32, #tpu.memory_space<vmem>>, vector<1x32xf32>
    %168 = vector.shape_cast %167 : vector<1x32xf32> to vector<32xf32>
    %169 = vector.shape_cast %168 : vector<32xf32> to vector<1x1x32xf32>
    %170 = vector.broadcast %169 : vector<1x1x32xf32> to vector<16x16x32xf32>
    %171 = arith.addf %166, %170 : vector<16x16x32xf32>
    %172 = vector.shape_cast %171 : vector<16x16x32xf32> to vector<256x32xf32>
    %c0_38 = arith.constant 0 : index
    %c0_39 = arith.constant 0 : index
    %173 = vector.load %arg8[%c0_38, %c0_39] : memref<32x12xf32, #tpu.memory_space<vmem>>, vector<32x12xf32>
    %cst_40 = arith.constant dense<0.000000e+00> : vector<256x12xf32>
    %174 = tpu.matmul %172, %173, %cst_40 {dimension_numbers = #tpu.dot_dimension_numbers<[1], [0], [0], [1], [0, 0, 1, 1], [], []>} : vector<256x32xf32>, vector<32x12xf32>, vector<256x12xf32> -> vector<256x12xf32>
    %c0_41 = arith.constant 0 : index
    %c0_42 = arith.constant 0 : index
    %175 = vector.load %arg9[%c0_41, %c0_42] : memref<1x12xf32, #tpu.memory_space<vmem>>, vector<1x12xf32>
    %176 = vector.broadcast %175 : vector<1x12xf32> to vector<256x12xf32>
    %177 = arith.addf %174, %176 : vector<256x12xf32>
    %178 = tpu.iota {dimensions = array<i32: 1>} : vector<1x12xi32>
    %c4_i32_43 = arith.constant 4 : i32
    %179 = vector.broadcast %c4_i32_43 : i32 to vector<1x12xi32>
    %180 = arith.cmpi slt, %178, %179 : vector<1x12xi32>
    %c8_i32 = arith.constant 8 : i32
    %181 = vector.broadcast %c8_i32 : i32 to vector<1x12xi32>
    %182 = arith.cmpi sge, %178, %181 : vector<1x12xi32>
    %183 = arith.ori %180, %182 : vector<1x12xi1>
    %cst_44 = arith.constant 0.000000e+00 : f32
    %cst_45 = arith.constant 6.000000e+00 : f32
    %184 = vector.broadcast %cst_44 : f32 to vector<256x12xf32>
    %185 = arith.maximumf %184, %177 : vector<256x12xf32>
    %186 = vector.broadcast %cst_45 : f32 to vector<256x12xf32>
    %187 = arith.minimumf %186, %185 : vector<256x12xf32>
    %188 = vector.shape_cast %183 : vector<1x12xi1> to vector<1x12xi1>
    %189 = vector.broadcast %188 : vector<1x12xi1> to vector<256x12xi1>
    %190 = arith.select %189, %187, %177 : vector<256x12xi1>, vector<256x12xf32>
    %191 = vector.shape_cast %190 : vector<256x12xf32> to vector<16x16x12xf32>
    %c0_46 = arith.constant 0 : index
    %c0_47 = arith.constant 0 : index
    %c0_48 = arith.constant 0 : index
    %c0_49 = arith.constant 0 : index
    %192 = vector.load %arg10[%c0_46, %c0_47, %c0_48, %c0_49] : memref<1x16x16x12xf32, #tpu.memory_space<vmem>>, vector<1x16x16x12xf32>
    %193 = vector.shape_cast %192 : vector<1x16x16x12xf32> to vector<16x16x12xf32>
    %194 = vector.shape_cast %191 : vector<16x16x12xf32> to vector<1x16x16x12xf32>
    tpu.vector_store %arg10[%c0_46, %c0_47, %c0_48, %c0_49], %194 {strides = array<i32>} : memref<1x16x16x12xf32, #tpu.memory_space<vmem>>, vector<1x16x16x12xf32>,
    return
  }
  func.func @transform_0(%arg0: i32) -> (i32, i32, i32, i32) {
    %c0_i32 = arith.constant 0 : i32
    %c0_i32_0 = arith.constant 0 : i32
    %c0_i32_1 = arith.constant 0 : i32
    %c0_i32_2 = arith.constant 0 : i32
    return %arg0, %c0_i32, %c0_i32_0, %c0_i32_1 : i32, i32, i32, i32
  }
  func.func @transform_1(%arg0: i32) -> (i32, i32) {
    %c0_i32 = arith.constant 0 : i32
    %c0_i32_0 = arith.constant 0 : i32
    %c0_i32_1 = arith.constant 0 : i32
    return %c0_i32, %c0_i32_0 : i32, i32
  }
  func.func @transform_2(%arg0: i32) -> (i32, i32) {
    %c0_i32 = arith.constant 0 : i32
    %c0_i32_0 = arith.constant 0 : i32
    %c0_i32_1 = arith.constant 0 : i32
    return %c0_i32, %c0_i32_0 : i32, i32
  }
  func.func @transform_3(%arg0: i32) -> (i32, i32, i32) {
    %c0_i32 = arith.constant 0 : i32
    %c0_i32_0 = arith.constant 0 : i32
    %c0_i32_1 = arith.constant 0 : i32
    %c0_i32_2 = arith.constant 0 : i32
    return %c0_i32, %c0_i32_0, %c0_i32_1 : i32, i32, i32
  }
  func.func @transform_4(%arg0: i32) -> (i32, i32) {
    %c0_i32 = arith.constant 0 : i32
    %c0_i32_0 = arith.constant 0 : i32
    %c0_i32_1 = arith.constant 0 : i32
    return %c0_i32, %c0_i32_0 : i32, i32
  }
  func.func @transform_5(%arg0: i32) -> (i32, i32, i32) {
    %c0_i32 = arith.constant 0 : i32
    %c0_i32_0 = arith.constant 0 : i32
    %c0_i32_1 = arith.constant 0 : i32
    %c0_i32_2 = arith.constant 0 : i32
    return %c0_i32, %c0_i32_0, %c0_i32_1 : i32, i32, i32
  }
  func.func @transform_6(%arg0: i32) -> (i32, i32) {
    %c0_i32 = arith.constant 0 : i32
    %c0_i32_0 = arith.constant 0 : i32
    %c0_i32_1 = arith.constant 0 : i32
    return %c0_i32, %c0_i32_0 : i32, i32
  }
  func.func @transform_7(%arg0: i32) -> (i32, i32) {
    %c0_i32 = arith.constant 0 : i32
    %c0_i32_0 = arith.constant 0 : i32
    %c0_i32_1 = arith.constant 0 : i32
    return %c0_i32, %c0_i32_0 : i32, i32
  }
  func.func @transform_8(%arg0: i32) -> (i32, i32) {
    %c0_i32 = arith.constant 0 : i32
    %c0_i32_0 = arith.constant 0 : i32
    %c0_i32_1 = arith.constant 0 : i32
    return %c0_i32, %c0_i32_0 : i32, i32
  }
  func.func @transform_9(%arg0: i32) -> (i32, i32, i32, i32) {
    %c0_i32 = arith.constant 0 : i32
    %c0_i32_0 = arith.constant 0 : i32
    %c0_i32_1 = arith.constant 0 : i32
    %c0_i32_2 = arith.constant 0 : i32
    return %arg0, %c0_i32, %c0_i32_0, %c0_i32_1 : i32, i32, i32, i32
  }
}

</mosaic_0001>

<llo_original>
// kernel: _lambda_.1
$region0: #{_lambda_.1}
  #allocation0 [shape = 'u32[]', space=smem, size = 0x4, offset = 0x4, fixed_abs, tag = 'smem constant byte address 0x4 - core index']
  #allocation1 [shape = 'u32[144,128]{1,0:T(1,128)}', space=vmem, size = 0x12000, scoped, tag = 'internal scratch']
  #allocation2 [shape = 'f32[18,18,32]{2,1,0:T(8,128)}', space=vmem, size = 0x36000, scoped, tag = 'scratch operand']
  %s0 = inlined_call_operand.vmem [shape: f32[2,16,16,12], index: 0, kind: input, shape index: {}]
  %s1 = inlined_call_operand.vmem [shape: f32[12,32], index: 1, kind: input, shape index: {}]
  %s2 = inlined_call_operand.vmem [shape: f32[1,32], index: 2, kind: input, shape index: {}]
  %s3 = inlined_call_operand.vmem [shape: f32[3,3,32], index: 3, kind: input, shape index: {}]
  %s4 = inlined_call_operand.vmem [shape: f32[1,32], index: 4, kind: input, shape index: {}]
  %s5 = inlined_call_operand.vmem [shape: f32[3,3,32], index: 5, kind: input, shape index: {}]
  %s6 = inlined_call_operand.vmem [shape: f32[1,32], index: 6, kind: input, shape index: {}]
  %s7 = inlined_call_operand.vmem [shape: f32[32,12], index: 7, kind: input, shape index: {}]
  %s8 = inlined_call_operand.vmem [shape: f32[1,12], index: 8, kind: input, shape index: {}]
  %s9 = inlined_call_operand.vmem [shape: f32[2,16,16,12], index: 9, kind: output, shape index: {}]
  %s10 = sld [smem:[#allocation0]]
  $region69: #{_lambda_.1} parent=0
    _
  %s12 = ssub.s32 1, %s10
  %s13 = scalar_select 0, %s12, %s10
  loop: start=0, step=1, limit=4
  $region2: #{_lambda_.1} parent=0 // loop_pre_header
    _
  $region3: #{_lambda_.1} parent=0 // loop_header
    %s15 = sphi 0, %s19
    %p16 = scmp.ge.s32.totalorder %s15, 4
    %s25 = sphi 0, %s27
    %s28 = sphi 0, %s25
    %s29 = sphi 0, %s28
    %s45 = sphi 0, %s29
    %s49 = sphi 0, %s49
    %s51 = sphi 0, %s49
    %s52 = sphi 0, %s51
    %s66 = sphi 0, %s52
    %s70 = sphi 0, %s70
    %s72 = sphi 0, %s70
    %s73 = sphi 0, %s72
    %s87 = sphi 0, %s73
    %s91 = sphi 0, %s91
    %s93 = sphi 0, %s91
    %s94 = sphi 0, %s93
    %s108 = sphi 0, %s94
    %s112 = sphi 0, %s112
    %s114 = sphi 0, %s112
    %s115 = sphi 0, %s114
    %s129 = sphi 0, %s115
    %s133 = sphi 0, %s133
    %s135 = sphi 0, %s133
    %s136 = sphi 0, %s135
    %s150 = sphi 0, %s136
    %s154 = sphi 0, %s154
    %s156 = sphi 0, %s154
    %s157 = sphi 0, %s156
    %s171 = sphi 0, %s157
    %s175 = sphi 0, %s175
    %s177 = sphi 0, %s175
    %s178 = sphi 0, %s177
    %s192 = sphi 0, %s178
    %s196 = sphi 0, %s196
    %s198 = sphi 0, %s196
    %s199 = sphi 0, %s198
    %s213 = sphi 0, %s199
    %s219 = sphi 0, %s221
    %s222 = sphi 0, %s219
    %s223 = sphi 0, %s222
    %s239 = sphi 0, %s223
  $region4: #{_lambda_.1} parent=0 // loop_header_branch
    %18 = sbr.rel (%p16) target = $region8
  $region5: #{_lambda_.1} parent=0 // loop_body
    %s20 = ssub.s32 %s15, 1
    %s21 = ssub.s32 %s15, 2
    %s22 = sadd.s32 %s15, 1
    %s23 = ssub.s32 %s15, %s22
    %p24 = scmp.eq.s32.totalorder %s23, 0
    %s26 = sadd.s32 %s25, 1
    %s27 = scalar_select %p24, %s25, %s26
    %p30 = pneg %p24
    %p31 = scmp.eq.s32.totalorder %s15, 1
    %p32 = por %p30, %p31
    %p33 = scmp.ne.s32.totalorder %s25, %s28
    %p34 = scmp.eq.s32.totalorder %s15, 0
    %p35 = por %p33, %p34
    %p36 = scmp.ne.s32.totalorder %s25, %s28
    %p37 = scmp.eq.s32.totalorder %s20, 1
    %p38 = por %p36, %p37
    %p39 = scmp.ne.s32.totalorder %s28, %s29
    %p40 = scmp.eq.s32.totalorder %s20, 0
    %p41 = por %p39, %p40
    %p42 = scmp.ne.s32.totalorder %s28, %s29
    %p43 = scmp.eq.s32.totalorder %s21, 1
    %p44 = por %p42, %p43
    %p46 = scmp.ne.s32.totalorder %s29, %s45
    %p47 = scmp.eq.s32.totalorder %s21, 0
    %p48 = por %p46, %p47
    %s50 = sadd.s32 %s49, 1
    %p53 = scmp.eq.s32.totalorder %s15, 1
    %p54 = scmp.ne.s32.totalorder %s49, %s51
    %p55 = scmp.eq.s32.totalorder %s15, 0
    %p56 = por %p54, %p55
    %p57 = scmp.ne.s32.totalorder %s49, %s51
    %p58 = scmp.eq.s32.totalorder %s20, 1
    %p59 = por %p57, %p58
    %p60 = scmp.ne.s32.totalorder %s51, %s52
    %p61 = scmp.eq.s32.totalorder %s20, 0
    %p62 = por %p60, %p61
    %p63 = scmp.ne.s32.totalorder %s51, %s52
    %p64 = scmp.eq.s32.totalorder %s21, 1
    %p65 = por %p63, %p64
    %p67 = scmp.ne.s32.totalorder %s52, %s66
    %p68 = scmp.eq.s32.totalorder %s21, 0
    %p69 = por %p67, %p68
    %s71 = sadd.s32 %s70, 1
    %p74 = scmp.eq.s32.totalorder %s15, 1
    %p75 = scmp.ne.s32.totalorder %s70, %s72
    %p76 = scmp.eq.s32.totalorder %s15, 0
    %p77 = por %p75, %p76
    %p78 = scmp.ne.s32.totalorder %s70, %s72
    %p79 = scmp.eq.s32.totalorder %s20, 1
    %p80 = por %p78, %p79
    %p81 = scmp.ne.s32.totalorder %s72, %s73
    %p82 = scmp.eq.s32.totalorder %s20, 0
    %p83 = por %p81, %p82
    %p84 = scmp.ne.s32.totalorder %s72, %s73
    %p85 = scmp.eq.s32.totalorder %s21, 1
    %p86 = por %p84, %p85
    %p88 = scmp.ne.s32.totalorder %s73, %s87
    %p89 = scmp.eq.s32.totalorder %s21, 0
    %p90 = por %p88, %p89
    %s92 = sadd.s32 %s91, 1
    %p95 = scmp.eq.s32.totalorder %s15, 1
    %p96 = scmp.ne.s32.totalorder %s91, %s93
    %p97 = scmp.eq.s32.totalorder %s15, 0
    %p98 = por %p96, %p97
    %p99 = scmp.ne.s32.totalorder %s91, %s93
    %p100 = scmp.eq.s32.totalorder %s20, 1
    %p101 = por %p99, %p100
    %p102 = scmp.ne.s32.totalorder %s93, %s94
    %p103 = scmp.eq.s32.totalorder %s20, 0
    %p104 = por %p102, %p103
    %p105 = scmp.ne.s32.totalorder %s93, %s94
    %p106 = scmp.eq.s32.totalorder %s21, 1
    %p107 = por %p105, %p106
    %p109 = scmp.ne.s32.totalorder %s94, %s108
    %p110 = scmp.eq.s32.totalorder %s21, 0
    %p111 = por %p109, %p110
    %s113 = sadd.s32 %s112, 1
    %p116 = scmp.eq.s32.totalorder %s15, 1
    %p117 = scmp.ne.s32.totalorder %s112, %s114
    %p118 = scmp.eq.s32.totalorder %s15, 0
    %p119 = por %p117, %p118
    %p120 = scmp.ne.s32.totalorder %s112, %s114
    %p121 = scmp.eq.s32.totalorder %s20, 1
    %p122 = por %p120, %p121
    %p123 = scmp.ne.s32.totalorder %s114, %s115
    %p124 = scmp.eq.s32.totalorder %s20, 0
    %p125 = por %p123, %p124
    %p126 = scmp.ne.s32.totalorder %s114, %s115
    %p127 = scmp.eq.s32.totalorder %s21, 1
    %p128 = por %p126, %p127
    %p130 = scmp.ne.s32.totalorder %s115, %s129
    %p131 = scmp.eq.s32.totalorder %s21, 0
    %p132 = por %p130, %p131
    %s134 = sadd.s32 %s133, 1
    %p137 = scmp.eq.s32.totalorder %s15, 1
    %p138 = scmp.ne.s32.totalorder %s133, %s135
    %p139 = scmp.eq.s32.totalorder %s15, 0
    %p140 = por %p138, %p139
    %p141 = scmp.ne.s32.totalorder %s133, %s135
    %p142 = scmp.eq.s32.totalorder %s20, 1
    %p143 = por %p141, %p142
    %p144 = scmp.ne.s32.totalorder %s135, %s136
    %p145 = scmp.eq.s32.totalorder %s20, 0
    %p146 = por %p144, %p145
    %p147 = scmp.ne.s32.totalorder %s135, %s136
    %p148 = scmp.eq.s32.totalorder %s21, 1
    %p149 = por %p147, %p148
    %p151 = scmp.ne.s32.totalorder %s136, %s150
    %p152 = scmp.eq.s32.totalorder %s21, 0
    %p153 = por %p151, %p152
    %s155 = sadd.s32 %s154, 1
    %p158 = scmp.eq.s32.totalorder %s15, 1
    %p159 = scmp.ne.s32.totalorder %s154, %s156
    %p160 = scmp.eq.s32.totalorder %s15, 0
    %p161 = por %p159, %p160
    %p162 = scmp.ne.s32.totalorder %s154, %s156
    %p163 = scmp.eq.s32.totalorder %s20, 1
    %p164 = por %p162, %p163
    %p165 = scmp.ne.s32.totalorder %s156, %s157
    %p166 = scmp.eq.s32.totalorder %s20, 0
    %p167 = por %p165, %p166
    %p168 = scmp.ne.s32.totalorder %s156, %s157
    %p169 = scmp.eq.s32.totalorder %s21, 1
    %p170 = por %p168, %p169
    %p172 = scmp.ne.s32.totalorder %s157, %s171
    %p173 = scmp.eq.s32.totalorder %s21, 0
    %p174 = por %p172, %p173
    %s176 = sadd.s32 %s175, 1
    %p179 = scmp.eq.s32.totalorder %s15, 1
    %p180 = scmp.ne.s32.totalorder %s175, %s177
    %p181 = scmp.eq.s32.totalorder %s15, 0
    %p182 = por %p180, %p181
    %p183 = scmp.ne.s32.totalorder %s175, %s177
    %p184 = scmp.eq.s32.totalorder %s20, 1
    %p185 = por %p183, %p184
    %p186 = scmp.ne.s32.totalorder %s177, %s178
    %p187 = scmp.eq.s32.totalorder %s20, 0
    %p188 = por %p186, %p187
    %p189 = scmp.ne.s32.totalorder %s177, %s178
    %p190 = scmp.eq.s32.totalorder %s21, 1
    %p191 = por %p189, %p190
    %p193 = scmp.ne.s32.totalorder %s178, %s192
    %p194 = scmp.eq.s32.totalorder %s21, 0
    %p195 = por %p193, %p194
    %s197 = sadd.s32 %s196, 1
    %p200 = scmp.eq.s32.totalorder %s15, 1
    %p201 = scmp.ne.s32.totalorder %s196, %s198
    %p202 = scmp.eq.s32.totalorder %s15, 0
    %p203 = por %p201, %p202
    %p204 = scmp.ne.s32.totalorder %s196, %s198
    %p205 = scmp.eq.s32.totalorder %s20, 1
    %p206 = por %p204, %p205
    %p207 = scmp.ne.s32.totalorder %s198, %s199
    %p208 = scmp.eq.s32.totalorder %s20, 0
    %p209 = por %p207, %p208
    %p210 = scmp.ne.s32.totalorder %s198, %s199
    %p211 = scmp.eq.s32.totalorder %s21, 1
    %p212 = por %p210, %p211
    %p214 = scmp.ne.s32.totalorder %s199, %s213
    %p215 = scmp.eq.s32.totalorder %s21, 0
    %p216 = por %p214, %p215
    %s217 = ssub.s32 %s15, %s22
    %p218 = scmp.eq.s32.totalorder %s217, 0
    %s220 = sadd.s32 %s219, 1
    %s221 = scalar_select %p218, %s219, %s220
    %p224 = pneg %p218
    %p225 = scmp.eq.s32.totalorder %s15, 1
    %p226 = por %p224, %p225
    %p227 = scmp.ne.s32.totalorder %s219, %s222
    %p228 = scmp.eq.s32.totalorder %s15, 0
    %p229 = por %p227, %p228
    %p230 = scmp.ne.s32.totalorder %s219, %s222
    %p231 = scmp.eq.s32.totalorder %s20, 1
    %p232 = por %p230, %p231
    %p233 = scmp.ne.s32.totalorder %s222, %s223
    %p234 = scmp.eq.s32.totalorder %s20, 0
    %p235 = por %p233, %p234
    %p236 = scmp.ne.s32.totalorder %s222, %s223
    %p237 = scmp.eq.s32.totalorder %s21, 1
    %p238 = por %p236, %p237
    %p240 = scmp.ne.s32.totalorder %s223, %s239
    %p241 = scmp.eq.s32.totalorder %s21, 0
    %p242 = por %p240, %p241
    %p243 = scmp.le.s32.totalorder 1, %s15
    %p244 = scmp.lt.s32.totalorder %s15, 3
    %p245 = pnand %p243, %p244
    %p246 = pneg %p245
    // Predicated region
    $region9: #{_lambda_.1} parent=5 // pred_check
      _
    $region10: #{_lambda_.1} parent=5 // pred_check_branch
      %248 = sbr.rel (%p245) target = $region12
    $region11: #{_lambda_.1} parent=5 // pred_region
      %s249 = ssub.s32 %s15, 1
      // Predicated region
      $region13: #{_lambda_.1} parent=11 // pred_check
        %p250 = pneg %p62
      $region14: #{_lambda_.1} parent=11 // pred_check_branch
        %252 = sbr.rel (%p250) target = $region16
      $region15: #{_lambda_.1} parent=11 // pred_region
        _
      $region16: #{_lambda_.1} parent=11 // pred_fallthru
        _
      // Predicated region
      $region17: #{_lambda_.1} parent=11 // pred_check
        %p253 = pneg %p83
      $region18: #{_lambda_.1} parent=11 // pred_check_branch
        %255 = sbr.rel (%p253) target = $region20
      $region19: #{_lambda_.1} parent=11 // pred_region
        _
      $region20: #{_lambda_.1} parent=11 // pred_fallthru
        _
      // Predicated region
      $region21: #{_lambda_.1} parent=11 // pred_check
        %p256 = pneg %p104
      $region22: #{_lambda_.1} parent=11 // pred_check_branch
        %258 = sbr.rel (%p256) target = $region24
      $region23: #{_lambda_.1} parent=11 // pred_region
        _
      $region24: #{_lambda_.1} parent=11 // pred_fallthru
        _
      // Predicated region
      $region25: #{_lambda_.1} parent=11 // pred_check
        %p259 = pneg %p125
      $region26: #{_lambda_.1} parent=11 // pred_check_branch
        %261 = sbr.rel (%p259) target = $region28
      $region27: #{_lambda_.1} parent=11 // pred_region
        _
      $region28: #{_lambda_.1} parent=11 // pred_fallthru
        _
      // Predicated region
      $region29: #{_lambda_.1} parent=11 // pred_check
        %p262 = pneg %p146
      $region30: #{_lambda_.1} parent=11 // pred_check_branch
        %264 = sbr.rel (%p262) target = $region32
      $region31: #{_lambda_.1} parent=11 // pred_region
        _
      $region32: #{_lambda_.1} parent=11 // pred_fallthru
        _
      // Predicated region
      $region33: #{_lambda_.1} parent=11 // pred_check
        %p265 = pneg %p167
      $region34: #{_lambda_.1} parent=11 // pred_check_branch
        %267 = sbr.rel (%p265) target = $region36
      $region35: #{_lambda_.1} parent=11 // pred_region
        _
      $region36: #{_lambda_.1} parent=11 // pred_fallthru
        _
      // Predicated region
      $region37: #{_lambda_.1} parent=11 // pred_check
        %p268 = pneg %p188
      $region38: #{_lambda_.1} parent=11 // pred_check_branch
        %270 = sbr.rel (%p268) target = $region40
      $region39: #{_lambda_.1} parent=11 // pred_region
        _
      $region40: #{_lambda_.1} parent=11 // pred_fallthru
        _
      // Predicated region
      $region41: #{_lambda_.1} parent=11 // pred_check
        %p271 = pneg %p209
      $region42: #{_lambda_.1} parent=11 // pred_check_branch
        %273 = sbr.rel (%p271) target = $region44
      $region43: #{_lambda_.1} parent=11 // pred_region
        _
      $region44: #{_lambda_.1} parent=11 // pred_fallthru
        _
    $region12: #{_lambda_.1} parent=5 // pred_fallthru
      _
    %p274 = scmp.lt.s32.totalorder %s15, 2
    // Predicated region
    $region45: #{_lambda_.1} parent=5 // pred_check
      %p275 = pneg %p274
    $region46: #{_lambda_.1} parent=5 // pred_check_branch
      %277 = sbr.rel (%p275) target = $region48
    $region47: #{_lambda_.1} parent=5 // pred_region
      // Predicated region
      $region49: #{_lambda_.1} parent=47 // pred_check
        %p278 = pneg %p35
      $region50: #{_lambda_.1} parent=47 // pred_check_branch
        %280 = sbr.rel (%p278) target = $region52
      $region51: #{_lambda_.1} parent=47 // pred_region
        %p281 = scmp.lt.s32.totalorder %s15, 1
        %s282 = scalar_select %p281, %s15, 1
        %s283 = smul.addr %s282, 32
        %s284 = smul.addr %s283, 8
        %s285 = scalar_lea.vmem %s0, %s284
      $region52: #{_lambda_.1} parent=47 // pred_fallthru
        _
    $region48: #{_lambda_.1} parent=5 // pred_fallthru
      _
    %p286 = scmp.le.s32.totalorder 1, %s15
    %p287 = scmp.lt.s32.totalorder %s15, 3
    %p288 = pnand %p286, %p287
    %p289 = pneg %p288
    // Predicated region
    $region53: #{_lambda_.1} parent=5 // pred_check
      _
    $region54: #{_lambda_.1} parent=5 // pred_check_branch
      %291 = sbr.rel (%p288) target = $region56
    $region55: #{_lambda_.1} parent=5 // pred_region
      %s292 = ssub.s32 %s15, 1
      %p293 = scmp.lt.s32.totalorder %s20, 1
      %s294 = scalar_select %p293, %s20, 1
      %s295 = smul.addr %s294, 32
      %s296 = smul.addr %s295, 8
      %s297 = scalar_lea.vmem %s0, %s296
      %p298 = pneg %p41
      %p299 = pneg %p38
      %p300 = pneg %p62
      %p301 = pneg %p59
      %p302 = pneg %p83
      %p303 = pneg %p80
      %p304 = pneg %p104
      %p305 = pneg %p101
      %p306 = pneg %p125
      %p307 = pneg %p122
      %p308 = pneg %p146
      %p309 = pneg %p143
      %p310 = pneg %p167
      %p311 = pneg %p164
      %p312 = pneg %p188
      %p313 = pneg %p185
      %p314 = pneg %p209
      %p315 = pneg %p206
      %p316 = pneg %p235
      %p317 = pneg %p232
      %p318 = scmp.lt.s32.totalorder %s20, 1
      %s319 = scalar_select %p318, %s20, 1
      %s320 = smul.addr %s319, 32
      %s321 = smul.addr %s320, 8
      %s322 = scalar_lea.vmem %s9, %s321
      %p323 = scmp.lt.s32.totalorder %s20, 1
      %s324 = scalar_select %p323, %s20, 1
      %s325 = smul.addr %s324, 32
      %s326 = smul.addr %s325, 8
      %s327 = scalar_lea.vmem %s0, %s326
      %p328 = scmp.lt.s32.totalorder %s20, 1
      %s329 = scalar_select %p328, %s20, 1
      %s330 = smul.addr %s329, 32
      %s331 = smul.addr %s330, 8
      %s332 = scalar_lea.vmem %s9, %s331
      %v333 = vld [vmem:[%s327] sm:$0xff]
      %v334 = vld [vmem:[%s327 + $0x8] sm:$0xff]
      %v335 = vld [vmem:[%s327 + $0x10] sm:$0xff]
      %v336 = vld [vmem:[%s327 + $0x18] sm:$0xff]
      %v337 = vld [vmem:[%s327 + $0x20] sm:$0xff]
      %v338 = vld [vmem:[%s327 + $0x28] sm:$0xff]
      %v339 = vld [vmem:[%s327 + $0x30] sm:$0xff]
      %v340 = vld [vmem:[%s327 + $0x38] sm:$0xff]
      %v341 = vld [vmem:[%s327 + $0x40] sm:$0xff]
      %v342 = vld [vmem:[%s327 + $0x48] sm:$0xff]
      %v343 = vld [vmem:[%s327 + $0x50] sm:$0xff]
      %v344 = vld [vmem:[%s327 + $0x58] sm:$0xff]
      %v345 = vld [vmem:[%s327 + $0x60] sm:$0xff]
      %v346 = vld [vmem:[%s327 + $0x68] sm:$0xff]
      %v347 = vld [vmem:[%s327 + $0x70] sm:$0xff]
      %v348 = vld [vmem:[%s327 + $0x78] sm:$0xff]
      %v349 = vld [vmem:[%s327 + $0x80] sm:$0xff]
      %v350 = vld [vmem:[%s327 + $0x88] sm:$0xff]
      %v351 = vld [vmem:[%s327 + $0x90] sm:$0xff]
      %v352 = vld [vmem:[%s327 + $0x98] sm:$0xff]
      %v353 = vld [vmem:[%s327 + $0xa0] sm:$0xff]
      %v354 = vld [vmem:[%s327 + $0xa8] sm:$0xff]
      %v355 = vld [vmem:[%s327 + $0xb0] sm:$0xff]
      %v356 = vld [vmem:[%s327 + $0xb8] sm:$0xff]
      %v357 = vld [vmem:[%s327 + $0xc0] sm:$0xff]
      %v358 = vld [vmem:[%s327 + $0xc8] sm:$0xff]
      %v359 = vld [vmem:[%s327 + $0xd0] sm:$0xff]
      %v360 = vld [vmem:[%s327 + $0xd8] sm:$0xff]
      %v361 = vld [vmem:[%s327 + $0xe0] sm:$0xff]
      %v362 = vld [vmem:[%s327 + $0xe8] sm:$0xff]
      %v363 = vld [vmem:[%s327 + $0xf0] sm:$0xff]
      %v364 = vld [vmem:[%s327 + $0xf8] sm:$0xff]
      %v365 = vld [vmem:[%s1] sm:$0xff]
      %v366 = vld [vmem:[%s1 + $0x8] sm:$0xf]
      %v367 = vld [vmem:[%s2] sm:$0x1]
      %v369 = vlaneseq
      %v370 = vshrl.u32 %v369, 7
      %v371 = vsub.s32 0, %v370
      %v372 = vrot.slane %v367, %v371
      %vm374 = vcmask 97280
      %v376 = vsel %vm374, %v333, 0
      %v379 = vsel %vm374, %v334, 0
      %v382 = vsel %vm374, %v335, 0
      %v385 = vsel %vm374, %v336, 0
      %v388 = vsel %vm374, %v337, 0
      %v391 = vsel %vm374, %v338, 0
      %v394 = vsel %vm374, %v339, 0
      %v397 = vsel %vm374, %v340, 0
      %v400 = vsel %vm374, %v341, 0
      %v403 = vsel %vm374, %v342, 0
      %v406 = vsel %vm374, %v343, 0
      %v409 = vsel %vm374, %v344, 0
      %v412 = vsel %vm374, %v345, 0
      %v415 = vsel %vm374, %v346, 0
      %v418 = vsel %vm374, %v347, 0
      %v421 = vsel %vm374, %v348, 0
      %v424 = vsel %vm374, %v349, 0
      %v427 = vsel %vm374, %v350, 0
      %v430 = vsel %vm374, %v351, 0
      %v433 = vsel %vm374, %v352, 0
      %v436 = vsel %vm374, %v353, 0
      %v439 = vsel %vm374, %v354, 0
      %v442 = vsel %vm374, %v355, 0
      %v445 = vsel %vm374, %v356, 0
      %v448 = vsel %vm374, %v357, 0
      %v451 = vsel %vm374, %v358, 0
      %v454 = vsel %vm374, %v359, 0
      %v457 = vsel %vm374, %v360, 0
      %v460 = vsel %vm374, %v361, 0
      %v463 = vsel %vm374, %v362, 0
      %v466 = vsel %vm374, %v363, 0
      %v469 = vsel %vm374, %v364, 0
      %vm471 = vcmask 1043456
      %v473 = vsel %vm471, %v366, 0
      %475 = vmatprep.subr.mxu0 0.0
      %476 = vmatpush1.msra.mxu0 %v365
      %477 = vmatprep.subr.mxu0 0.0
      %478 = vmatpush1.msra.mxu0 %v473
      %479 = vmatprep.subr.mxu0 0.0
      %480 = vmatpush1.msra.mxu0 0.0
      %481 = vmatprep.subr.mxu0 0.0
      %482 = vmatpush1.msra.mxu0 0.0
      %483 = vmatprep.subr.mxu0 0.0
      %484 = vmatpush1.msra.mxu0 0.0
      %485 = vmatprep.subr.mxu0 0.0
      %486 = vmatpush1.msra.mxu0 0.0
      %487 = vmatprep.subr.mxu0 0.0
      %488 = vmatpush1.msra.mxu0 0.0
      %489 = vmatprep.subr.mxu0 0.0
      %490 = vmatpush1.msra.mxu0 0.0
      %491 = vmatprep.subr.mxu0 0.0
      %492 = vmatpush1.msra.mxu0 0.0
      %493 = vmatprep.subr.mxu0 0.0
      %494 = vmatpush1.msra.mxu0 0.0
      %495 = vmatprep.subr.mxu0 0.0
      %496 = vmatpush1.msra.mxu0 0.0
      %497 = vmatprep.subr.mxu0 0.0
      %498 = vmatpush1.msra.mxu0 0.0
      %499 = vmatprep.subr.mxu0 0.0
      %500 = vmatpush1.msra.mxu0 0.0
      %501 = vmatprep.subr.mxu0 0.0
      %502 = vmatpush1.msra.mxu0 0.0
      %503 = vmatprep.subr.mxu0 0.0
      %504 = vmatpush1.msra.mxu0 0.0
      %505 = vmatprep.subr.mxu0 0.0
      %506 = vmatpush1.msra.mxu0 0.0
      %507 = vmatprep.subr.mxu0 0.0
      %508 = vmatpush1.msra.mxu0 0.0
      %509 = vmatprep.subr.mxu0 0.0
      %510 = vmatpush1.msra.mxu0 0.0
      %511 = vmatprep.subr.mxu0 0.0
      %512 = vmatpush1.msra.mxu0 0.0
      %513 = vmatprep.subr.mxu0 0.0
      %514 = vmatpush1.msra.mxu0 0.0
      %515 = vmatprep.subr.mxu0 0.0
      %516 = vmatpush1.msra.mxu0 0.0
      %517 = vmatprep.subr.mxu0 0.0
      %518 = vmatpush1.msra.mxu0 0.0
      %519 = vmatprep.subr.mxu0 0.0
      %520 = vmatpush1.msra.mxu0 0.0
      %521 = vmatprep.subr.mxu0 0.0
      %522 = vmatpush1.msra.mxu0 0.0
      %523 = vmatprep.subr.mxu0 0.0
      %524 = vmatpush1.msra.mxu0 0.0
      %525 = vmatprep.subr.mxu0 0.0
      %526 = vmatpush1.msra.mxu0 0.0
      %527 = vmatprep.subr.mxu0 0.0
      %528 = vmatpush1.msra.mxu0 0.0
      %529 = vmatprep.subr.mxu0 0.0
      %530 = vmatpush1.msra.mxu0 0.0
      %531 = vmatprep.subr.mxu0 0.0
      %532 = vmatpush1.msra.mxu0 0.0
      %533 = vmatprep.subr.mxu0 0.0
      %534 = vmatpush1.msra.mxu0 0.0
      %535 = vmatprep.subr.mxu0 0.0
      %536 = vmatpush1.msra.mxu0 0.0
      %537 = vmatprep.subr.mxu0 0.0
      %538 = vmatpush1.msra.mxu0 0.0
      %539 = vmatprep.mubr.f32.mxu0 0.0
      %540 = vmatmul.mubr.f32.gmra.mrb[0].mxu0 %v376
      %v541 = vpop.f32.mrb[0].mxu0
      %v542 = vadd.f32 %v372, %v541
      %v543 = vpop.f32.mrb[0].mxu0
      %544 = vmatprep.mubr.f32.mxu0 0.0
      %545 = vmatmul.mubr.f32.gmra.mrb[0].mxu0 %v379
      %v546 = vpop.f32.mrb[0].mxu0
      %v547 = vadd.f32 %v372, %v546
      %v548 = vpop.f32.mrb[0].mxu0
      %549 = vmatprep.mubr.f32.mxu0 0.0
      %550 = vmatmul.mubr.f32.gmra.mrb[0].mxu0 %v382
      %v551 = vpop.f32.mrb[0].mxu0
      %v552 = vadd.f32 %v372, %v551
      %v553 = vpop.f32.mrb[0].mxu0
      %554 = vmatprep.mubr.f32.mxu0 0.0
      %555 = vmatmul.mubr.f32.gmra.mrb[0].mxu0 %v385
      %v556 = vpop.f32.mrb[0].mxu0
      %v557 = vadd.f32 %v372, %v556
      %v558 = vpop.f32.mrb[0].mxu0
      %559 = vmatprep.mubr.f32.mxu0 0.0
      %560 = vmatmul.mubr.f32.gmra.mrb[0].mxu0 %v388
      %v561 = vpop.f32.mrb[0].mxu0
      %v562 = vadd.f32 %v372, %v561
      %v563 = vpop.f32.mrb[0].mxu0
      %564 = vmatprep.mubr.f32.mxu0 0.0
      %565 = vmatmul.mubr.f32.gmra.mrb[0].mxu0 %v391
      %v566 = vpop.f32.mrb[0].mxu0
      %v567 = vadd.f32 %v372, %v566
      %v568 = vpop.f32.mrb[0].mxu0
      %569 = vmatprep.mubr.f32.mxu0 0.0
      %570 = vmatmul.mubr.f32.gmra.mrb[0].mxu0 %v394
      %v571 = vpop.f32.mrb[0].mxu0
      %v572 = vadd.f32 %v372, %v571
      %v573 = vpop.f32.mrb[0].mxu0
      %574 = vmatprep.mubr.f32.mxu0 0.0
      %575 = vmatmul.mubr.f32.gmra.mrb[0].mxu0 %v397
      %v576 = vpop.f32.mrb[0].mxu0
      %v577 = vadd.f32 %v372, %v576
      %v578 = vpop.f32.mrb[0].mxu0
      %579 = vmatprep.mubr.f32.mxu0 0.0
      %580 = vmatmul.mubr.f32.gmra.mrb[0].mxu0 %v400
      %v581 = vpop.f32.mrb[0].mxu0
      %v582 = vadd.f32 %v372, %v581
      %v583 = vpop.f32.mrb[0].mxu0
      %584 = vmatprep.mubr.f32.mxu0 0.0
      %585 = vmatmul.mubr.f32.gmra.mrb[0].mxu0 %v403
      %v586 = vpop.f32.mrb[0].mxu0
      %v587 = vadd.f32 %v372, %v586
      %v588 = vpop.f32.mrb[0].mxu0
      %589 = vmatprep.mubr.f32.mxu0 0.0
      %590 = vmatmul.mubr.f32.gmra.mrb[0].mxu0 %v406
      %v591 = vpop.f32.mrb[0].mxu0
      %v592 = vadd.f32 %v372, %v591
      %v593 = vpop.f32.mrb[0].mxu0
      %594 = vmatprep.mubr.f32.mxu0 0.0
      %595 = vmatmul.mubr.f32.gmra.mrb[0].mxu0 %v409
      %v596 = vpop.f32.mrb[0].mxu0
      %v597 = vadd.f32 %v372, %v596
      %v598 = vpop.f32.mrb[0].mxu0
      %599 = vmatprep.mubr.f32.mxu0 0.0
      %600 = vmatmul.mubr.f32.gmra.mrb[0].mxu0 %v412
      %v601 = vpop.f32.mrb[0].mxu0
      %v602 = vadd.f32 %v372, %v601
      %v603 = vpop.f32.mrb[0].mxu0
      %604 = vmatprep.mubr.f32.mxu0 0.0
      %605 = vmatmul.mubr.f32.gmra.mrb[0].mxu0 %v415
      %v606 = vpop.f32.mrb[0].mxu0
      %v607 = vadd.f32 %v372, %v606
      %v608 = vpop.f32.mrb[0].mxu0
      %609 = vmatprep.mubr.f32.mxu0 0.0
      %610 = vmatmul.mubr.f32.gmra.mrb[0].mxu0 %v418
      %v611 = vpop.f32.mrb[0].mxu0
      %v612 = vadd.f32 %v372, %v611
      %v613 = vpop.f32.mrb[0].mxu0
      %614 = vmatprep.mubr.f32.mxu0 0.0
      %615 = vmatmul.mubr.f32.gmra.mrb[0].mxu0 %v421
      %v616 = vpop.f32.mrb[0].mxu0
      %v617 = vadd.f32 %v372, %v616
      %v618 = vpop.f32.mrb[0].mxu0
      %619 = vmatprep.mubr.f32.mxu0 0.0
      %620 = vmatmul.mubr.f32.gmra.mrb[0].mxu0 %v424
      %v621 = vpop.f32.mrb[0].mxu0
      %v622 = vadd.f32 %v372, %v621
      %v623 = vpop.f32.mrb[0].mxu0
      %624 = vmatprep.mubr.f32.mxu0 0.0
      %625 = vmatmul.mubr.f32.gmra.mrb[0].mxu0 %v427
      %v626 = vpop.f32.mrb[0].mxu0
      %v627 = vadd.f32 %v372, %v626
      %v628 = vpop.f32.mrb[0].mxu0
      %629 = vmatprep.mubr.f32.mxu0 0.0
      %630 = vmatmul.mubr.f32.gmra.mrb[0].mxu0 %v430
      %v631 = vpop.f32.mrb[0].mxu0
      %v632 = vadd.f32 %v372, %v631
      %v633 = vpop.f32.mrb[0].mxu0
      %634 = vmatprep.mubr.f32.mxu0 0.0
      %635 = vmatmul.mubr.f32.gmra.mrb[0].mxu0 %v433
      %v636 = vpop.f32.mrb[0].mxu0
      %v637 = vadd.f32 %v372, %v636
      %v638 = vpop.f32.mrb[0].mxu0
      %639 = vmatprep.mubr.f32.mxu0 0.0
      %640 = vmatmul.mubr.f32.gmra.mrb[0].mxu0 %v436
      %v641 = vpop.f32.mrb[0].mxu0
      %v642 = vadd.f32 %v372, %v641
      %v643 = vpop.f32.mrb[0].mxu0
      %644 = vmatprep.mubr.f32.mxu0 0.0
      %645 = vmatmul.mubr.f32.gmra.mrb[0].mxu0 %v439
      %v646 = vpop.f32.mrb[0].mxu0
      %v647 = vadd.f32 %v372, %v646
      %v648 = vpop.f32.mrb[0].mxu0
      %649 = vmatprep.mubr.f32.mxu0 0.0
      %650 = vmatmul.mubr.f32.gmra.mrb[0].mxu0 %v442
      %v651 = vpop.f32.mrb[0].mxu0
      %v652 = vadd.f32 %v372, %v651
      %v653 = vpop.f32.mrb[0].mxu0
      %654 = vmatprep.mubr.f32.mxu0 0.0
      %655 = vmatmul.mubr.f32.gmra.mrb[0].mxu0 %v445
      %v656 = vpop.f32.mrb[0].mxu0
      %v657 = vadd.f32 %v372, %v656
      %v658 = vpop.f32.mrb[0].mxu0
      %659 = vmatprep.mubr.f32.mxu0 0.0
      %660 = vmatmul.mubr.f32.gmra.mrb[0].mxu0 %v448
      %v661 = vpop.f32.mrb[0].mxu0
      %v662 = vadd.f32 %v372, %v661
      %v663 = vpop.f32.mrb[0].mxu0
      %664 = vmatprep.mubr.f32.mxu0 0.0
      %665 = vmatmul.mubr.f32.gmra.mrb[0].mxu0 %v451
      %v666 = vpop.f32.mrb[0].mxu0
      %v667 = vadd.f32 %v372, %v666
      %v668 = vpop.f32.mrb[0].mxu0
      %669 = vmatprep.mubr.f32.mxu0 0.0
      %670 = vmatmul.mubr.f32.gmra.mrb[0].mxu0 %v454
      %v671 = vpop.f32.mrb[0].mxu0
      %v672 = vadd.f32 %v372, %v671
      %v673 = vpop.f32.mrb[0].mxu0
      %674 = vmatprep.mubr.f32.mxu0 0.0
      %675 = vmatmul.mubr.f32.gmra.mrb[0].mxu0 %v457
      %v676 = vpop.f32.mrb[0].mxu0
      %v677 = vadd.f32 %v372, %v676
      %v678 = vpop.f32.mrb[0].mxu0
      %679 = vmatprep.mubr.f32.mxu0 0.0
      %680 = vmatmul.mubr.f32.gmra.mrb[0].mxu0 %v460
      %v681 = vpop.f32.mrb[0].mxu0
      %v682 = vadd.f32 %v372, %v681
      %v683 = vpop.f32.mrb[0].mxu0
      %684 = vmatprep.mubr.f32.mxu0 0.0
      %685 = vmatmul.mubr.f32.gmra.mrb[0].mxu0 %v463
      %v686 = vpop.f32.mrb[0].mxu0
      %v687 = vadd.f32 %v372, %v686
      %v688 = vpop.f32.mrb[0].mxu0
      %689 = vmatprep.mubr.f32.mxu0 0.0
      %690 = vmatmul.mubr.f32.gmra.mrb[0].mxu0 %v466
      %v691 = vpop.f32.mrb[0].mxu0
      %v692 = vadd.f32 %v372, %v691
      %v693 = vpop.f32.mrb[0].mxu0
      %694 = vmatprep.mubr.f32.mxu0 0.0
      %695 = vmatmul.mubr.f32.gmra.mrb[0].mxu0 %v469
      %v696 = vpop.f32.mrb[0].mxu0
      %v697 = vadd.f32 %v372, %v696
      %v698 = vpop.f32.mrb[0].mxu0
      %699 = vdwg.mxu0
      %v700 = vmax.f32 %v542, 0.0
      %v701 = vmax.f32 %v547, 0.0
      %v702 = vmax.f32 %v552, 0.0
      %v703 = vmax.f32 %v557, 0.0
      %v704 = vmax.f32 %v562, 0.0
      %v705 = vmax.f32 %v567, 0.0
      %v706 = vmax.f32 %v572, 0.0
      %v707 = vmax.f32 %v577, 0.0
      %v708 = vmax.f32 %v582, 0.0
      %v709 = vmax.f32 %v587, 0.0
      %v710 = vmax.f32 %v592, 0.0
      %v711 = vmax.f32 %v597, 0.0
      %v712 = vmax.f32 %v602, 0.0
      %v713 = vmax.f32 %v607, 0.0
      %v714 = vmax.f32 %v612, 0.0
      %v715 = vmax.f32 %v617, 0.0
      %v716 = vmax.f32 %v622, 0.0
      %v717 = vmax.f32 %v627, 0.0
      %v718 = vmax.f32 %v632, 0.0
      %v719 = vmax.f32 %v637, 0.0
      %v720 = vmax.f32 %v642, 0.0
      %v721 = vmax.f32 %v647, 0.0
      %v722 = vmax.f32 %v652, 0.0
      %v723 = vmax.f32 %v657, 0.0
      %v724 = vmax.f32 %v662, 0.0
      %v725 = vmax.f32 %v667, 0.0
      %v726 = vmax.f32 %v672, 0.0
      %v727 = vmax.f32 %v677, 0.0
      %v728 = vmax.f32 %v682, 0.0
      %v729 = vmax.f32 %v687, 0.0
      %v730 = vmax.f32 %v692, 0.0
      %v731 = vmax.f32 %v697, 0.0
      %v732 = vmin.f32 %v700, 6.0
      %v733 = vmin.f32 %v701, 6.0
      %v734 = vmin.f32 %v702, 6.0
      %v735 = vmin.f32 %v703, 6.0
      %v736 = vmin.f32 %v704, 6.0
      %v737 = vmin.f32 %v705, 6.0
      %v738 = vmin.f32 %v706, 6.0
      %v739 = vmin.f32 %v707, 6.0
      %v740 = vmin.f32 %v708, 6.0
      %v741 = vmin.f32 %v709, 6.0
      %v742 = vmin.f32 %v710, 6.0
      %v743 = vmin.f32 %v711, 6.0
      %v744 = vmin.f32 %v712, 6.0
      %v745 = vmin.f32 %v713, 6.0
      %v746 = vmin.f32 %v714, 6.0
      %v747 = vmin.f32 %v715, 6.0
      %v748 = vmin.f32 %v716, 6.0
      %v749 = vmin.f32 %v717, 6.0
      %v750 = vmin.f32 %v718, 6.0
      %v751 = vmin.f32 %v719, 6.0
      %v752 = vmin.f32 %v720, 6.0
      %v753 = vmin.f32 %v721, 6.0
      %v754 = vmin.f32 %v722, 6.0
      %v755 = vmin.f32 %v723, 6.0
      %v756 = vmin.f32 %v724, 6.0
      %v757 = vmin.f32 %v725, 6.0
      %v758 = vmin.f32 %v726, 6.0
      %v759 = vmin.f32 %v727, 6.0
      %v760 = vmin.f32 %v728, 6.0
      %v761 = vmin.f32 %v729, 6.0
      %v762 = vmin.f32 %v730, 6.0
      %v763 = vmin.f32 %v731, 6.0
      %vm764 = vcmask 261120
      %765 = vst.msk [vmem:[#allocation2] sm:$0xff] %vm764, 0.0
      %766 = vst.msk [vmem:[#allocation2 + $0x8] sm:$0xff] %vm764, 0.0
      %vm767 = vcmask 254976
      %768 = vst.msk [vmem:[#allocation2 + $0x10] sm:$0x3] %vm767, 0.0
      %769 = vst.msk [vmem:[#allocation2 + $0x18] sm:$0xff] %vm764, 0.0
      %770 = vst.msk [vmem:[#allocation2 + $0x20] sm:$0xff] %vm764, 0.0
      %771 = vst.msk [vmem:[#allocation2 + $0x28] sm:$0x3] %vm767, 0.0
      %772 = vst.msk [vmem:[#allocation2 + $0x30] sm:$0xff] %vm764, 0.0
      %773 = vst.msk [vmem:[#allocation2 + $0x38] sm:$0xff] %vm764, 0.0
      %774 = vst.msk [vmem:[#allocation2 + $0x40] sm:$0x3] %vm767, 0.0
      %775 = vst.msk [vmem:[#allocation2 + $0x48] sm:$0xff] %vm764, 0.0
      %776 = vst.msk [vmem:[#allocation2 + $0x50] sm:$0xff] %vm764, 0.0
      %777 = vst.msk [vmem:[#allocation2 + $0x58] sm:$0x3] %vm767, 0.0
      %778 = vst.msk [vmem:[#allocation2 + $0x60] sm:$0xff] %vm764, 0.0
      %779 = vst.msk [vmem:[#allocation2 + $0x68] sm:$0xff] %vm764, 0.0
      %780 = vst.msk [vmem:[#allocation2 + $0x70] sm:$0x3] %vm767, 0.0
      %781 = vst.msk [vmem:[#allocation2 + $0x78] sm:$0xff] %vm764, 0.0
      %782 = vst.msk [vmem:[#allocation2 + $0x80] sm:$0xff] %vm764, 0.0
      %783 = vst.msk [vmem:[#allocation2 + $0x88] sm:$0x3] %vm767, 0.0
      %784 = vst.msk [vmem:[#allocation2 + $0x90] sm:$0xff] %vm764, 0.0
      %785 = vst.msk [vmem:[#allocation2 + $0x98] sm:$0xff] %vm764, 0.0
      %786 = vst.msk [vmem:[#allocation2 + $0xa0] sm:$0x3] %vm767, 0.0
      %787 = vst.msk [vmem:[#allocation2 + $0xa8] sm:$0xff] %vm764, 0.0
      %788 = vst.msk [vmem:[#allocation2 + $0xb0] sm:$0xff] %vm764, 0.0
      %789 = vst.msk [vmem:[#allocation2 + $0xb8] sm:$0x3] %vm767, 0.0
      %790 = vst.msk [vmem:[#allocation2 + $0xc0] sm:$0xff] %vm764, 0.0
      %791 = vst.msk [vmem:[#allocation2 + $0xc8] sm:$0xff] %vm764, 0.0
      %792 = vst.msk [vmem:[#allocation2 + $0xd0] sm:$0x3] %vm767, 0.0
      %793 = vst.msk [vmem:[#allocation2 + $0xd8] sm:$0xff] %vm764, 0.0
      %794 = vst.msk [vmem:[#allocation2 + $0xe0] sm:$0xff] %vm764, 0.0
      %795 = vst.msk [vmem:[#allocation2 + $0xe8] sm:$0x3] %vm767, 0.0
      %796 = vst.msk [vmem:[#allocation2 + $0xf0] sm:$0xff] %vm764, 0.0
      %797 = vst.msk [vmem:[#allocation2 + $0xf8] sm:$0xff] %vm764, 0.0
      %798 = vst.msk [vmem:[#allocation2 + $0x100] sm:$0x3] %vm767, 0.0
      %799 = vst.msk [vmem:[#allocation2 + $0x108] sm:$0xff] %vm764, 0.0
      %800 = vst.msk [vmem:[#allocation2 + $0x110] sm:$0xff] %vm764, 0.0
      %801 = vst.msk [vmem:[#allocation2 + $0x118] sm:$0x3] %vm767, 0.0
      %802 = vst.msk [vmem:[#allocation2 + $0x120] sm:$0xff] %vm764, 0.0
      %803 = vst.msk [vmem:[#allocation2 + $0x128] sm:$0xff] %vm764, 0.0
      %804 = vst.msk [vmem:[#allocation2 + $0x130] sm:$0x3] %vm767, 0.0
      %805 = vst.msk [vmem:[#allocation2 + $0x138] sm:$0xff] %vm764, 0.0
      %806 = vst.msk [vmem:[#allocation2 + $0x140] sm:$0xff] %vm764, 0.0
      %807 = vst.msk [vmem:[#allocation2 + $0x148] sm:$0x3] %vm767, 0.0
      %808 = vst.msk [vmem:[#allocation2 + $0x150] sm:$0xff] %vm764, 0.0
      %809 = vst.msk [vmem:[#allocation2 + $0x158] sm:$0xff] %vm764, 0.0
      %810 = vst.msk [vmem:[#allocation2 + $0x160] sm:$0x3] %vm767, 0.0
      %811 = vst.msk [vmem:[#allocation2 + $0x168] sm:$0xff] %vm764, 0.0
      %812 = vst.msk [vmem:[#allocation2 + $0x170] sm:$0xff] %vm764, 0.0
      %813 = vst.msk [vmem:[#allocation2 + $0x178] sm:$0x3] %vm767, 0.0
      %814 = vst.msk [vmem:[#allocation2 + $0x180] sm:$0xff] %vm764, 0.0
      %815 = vst.msk [vmem:[#allocation2 + $0x188] sm:$0xff] %vm764, 0.0
      %816 = vst.msk [vmem:[#allocation2 + $0x190] sm:$0x3] %vm767, 0.0
      %817 = vst.msk [vmem:[#allocation2 + $0x198] sm:$0xff] %vm764, 0.0
      %818 = vst.msk [vmem:[#allocation2 + $0x1a0] sm:$0xff] %vm764, 0.0
      %819 = vst.msk [vmem:[#allocation2 + $0x1a8] sm:$0x3] %vm767, 0.0
      %s820 = scalar_lea.vmem [#allocation2], 24
      %821 = vst.msk [vmem:[%s820 + $0x1] sm:$0xff] %vm764, %v732
      %822 = vst.msk [vmem:[%s820 + $0x9] sm:$0xff] %vm764, %v733
      %823 = vst.msk [vmem:[%s820 + $0x19] sm:$0xff] %vm764, %v734
      %824 = vst.msk [vmem:[%s820 + $0x21] sm:$0xff] %vm764, %v735
      %825 = vst.msk [vmem:[%s820 + $0x31] sm:$0xff] %vm764, %v736
      %826 = vst.msk [vmem:[%s820 + $0x39] sm:$0xff] %vm764, %v737
      %827 = vst.msk [vmem:[%s820 + $0x49] sm:$0xff] %vm764, %v738
      %828 = vst.msk [vmem:[%s820 + $0x51] sm:$0xff] %vm764, %v739
      %829 = vst.msk [vmem:[%s820 + $0x61] sm:$0xff] %vm764, %v740
      %830 = vst.msk [vmem:[%s820 + $0x69] sm:$0xff] %vm764, %v741
      %831 = vst.msk [vmem:[%s820 + $0x79] sm:$0xff] %vm764, %v742
      %832 = vst.msk [vmem:[%s820 + $0x81] sm:$0xff] %vm764, %v743
      %833 = vst.msk [vmem:[%s820 + $0x91] sm:$0xff] %vm764, %v744
      %834 = vst.msk [vmem:[%s820 + $0x99] sm:$0xff] %vm764, %v745
      %835 = vst.msk [vmem:[%s820 + $0xa9] sm:$0xff] %vm764, %v746
      %836 = vst.msk [vmem:[%s820 + $0xb1] sm:$0xff] %vm764, %v747
      %837 = vst.msk [vmem:[%s820 + $0xc1] sm:$0xff] %vm764, %v748
      %838 = vst.msk [vmem:[%s820 + $0xc9] sm:$0xff] %vm764, %v749
      %839 = vst.msk [vmem:[%s820 + $0xd9] sm:$0xff] %vm764, %v750
      %840 = vst.msk [vmem:[%s820 + $0xe1] sm:$0xff] %vm764, %v751
      %841 = vst.msk [vmem:[%s820 + $0xf1] sm:$0xff] %vm764, %v752
      %842 = vst.msk [vmem:[%s820 + $0xf9] sm:$0xff] %vm764, %v753
      %843 = vst.msk [vmem:[%s820 + $0x109] sm:$0xff] %vm764, %v754
      %844 = vst.msk [vmem:[%s820 + $0x111] sm:$0xff] %vm764, %v755
      %845 = vst.msk [vmem:[%s820 + $0x121] sm:$0xff] %vm764, %v756
      %846 = vst.msk [vmem:[%s820 + $0x129] sm:$0xff] %vm764, %v757
      %847 = vst.msk [vmem:[%s820 + $0x139] sm:$0xff] %vm764, %v758
      %848 = vst.msk [vmem:[%s820 + $0x141] sm:$0xff] %vm764, %v759
      %849 = vst.msk [vmem:[%s820 + $0x151] sm:$0xff] %vm764, %v760
      %850 = vst.msk [vmem:[%s820 + $0x159] sm:$0xff] %vm764, %v761
      %851 = vst.msk [vmem:[%s820 + $0x169] sm:$0xff] %vm764, %v762
      %852 = vst.msk [vmem:[%s820 + $0x171] sm:$0xff] %vm764, %v763
      %v853 = vld [vmem:[#allocation2] sm:$0xff]
      %v854 = vld [vmem:[#allocation2 + $0x8] sm:$0xff]
      %v855 = vld [vmem:[#allocation2 + $0x10] sm:$0x3]
      %v856 = vld [vmem:[#allocation2 + $0x18] sm:$0xff]
      %v857 = vld [vmem:[#allocation2 + $0x20] sm:$0xff]
      %v858 = vld [vmem:[#allocation2 + $0x28] sm:$0x3]
      %v859 = vld [vmem:[#allocation2 + $0x30] sm:$0xff]
      %v860 = vld [vmem:[#allocation2 + $0x38] sm:$0xff]
      %v861 = vld [vmem:[#allocation2 + $0x40] sm:$0x3]
      %v862 = vld [vmem:[#allocation2 + $0x48] sm:$0xff]
      %v863 = vld [vmem:[#allocation2 + $0x50] sm:$0xff]
      %v864 = vld [vmem:[#allocation2 + $0x58] sm:$0x3]
      %v865 = vld [vmem:[#allocation2 + $0x60] sm:$0xff]
      %v866 = vld [vmem:[#allocation2 + $0x68] sm:$0xff]
      %v867 = vld [vmem:[#allocation2 + $0x70] sm:$0x3]
      %v868 = vld [vmem:[#allocation2 + $0x78] sm:$0xff]
      %v869 = vld [vmem:[#allocation2 + $0x80] sm:$0xff]
      %v870 = vld [vmem:[#allocation2 + $0x88] sm:$0x3]
      %v871 = vld [vmem:[#allocation2 + $0x90] sm:$0xff]
      %v872 = vld [vmem:[#allocation2 + $0x98] sm:$0xff]
      %v873 = vld [vmem:[#allocation2 + $0xa0] sm:$0x3]
      %v874 = vld [vmem:[#allocation2 + $0xa8] sm:$0xff]
      %v875 = vld [vmem:[#allocation2 + $0xb0] sm:$0xff]
      %v876 = vld [vmem:[#allocation2 + $0xb8] sm:$0x3]
      %v877 = vld [vmem:[#allocation2 + $0xc0] sm:$0xff]
      %v878 = vld [vmem:[#allocation2 + $0xc8] sm:$0xff]
      %v879 = vld [vmem:[#allocation2 + $0xd0] sm:$0x3]
      %v880 = vld [vmem:[#allocation2 + $0xd8] sm:$0xff]
      %v881 = vld [vmem:[#allocation2 + $0xe0] sm:$0xff]
      %v882 = vld [vmem:[#allocation2 + $0xe8] sm:$0x3]
      %v883 = vld [vmem:[#allocation2 + $0xf0] sm:$0xff]
      %v884 = vld [vmem:[#allocation2 + $0xf8] sm:$0xff]
      %v885 = vld [vmem:[#allocation2 + $0x100] sm:$0x3]
      %v886 = vld [vmem:[#allocation2 + $0x108] sm:$0xff]
      %v887 = vld [vmem:[#allocation2 + $0x110] sm:$0xff]
      %v888 = vld [vmem:[#allocation2 + $0x118] sm:$0x3]
      %v889 = vld [vmem:[#allocation2 + $0x120] sm:$0xff]
      %v890 = vld [vmem:[#allocation2 + $0x128] sm:$0xff]
      %v891 = vld [vmem:[#allocation2 + $0x130] sm:$0x3]
      %v892 = vld [vmem:[#allocation2 + $0x138] sm:$0xff]
      %v893 = vld [vmem:[#allocation2 + $0x140] sm:$0xff]
      %v894 = vld [vmem:[#allocation2 + $0x148] sm:$0x3]
      %v895 = vld [vmem:[#allocation2 + $0x150] sm:$0xff]
      %v896 = vld [vmem:[#allocation2 + $0x158] sm:$0xff]
      %v897 = vld [vmem:[#allocation2 + $0x160] sm:$0x3]
      %v898 = vld [vmem:[#allocation2 + $0x168] sm:$0xff]
      %v899 = vld [vmem:[#allocation2 + $0x170] sm:$0xff]
      %v900 = vld [vmem:[#allocation2 + $0x178] sm:$0x3]
      %v901 = vld [vmem:[#allocation2 + $0x180] sm:$0xff]
      %v902 = vld [vmem:[#allocation2 + $0x188] sm:$0xff]
      %v903 = vld [vmem:[#allocation2 + $0x190] sm:$0x3]
      %v904 = vld [vmem:[#allocation2 + $0x198] sm:$0xff]
      %v905 = vld [vmem:[#allocation2 + $0x1a0] sm:$0xff]
      %v906 = vld [vmem:[#allocation2 + $0x1a8] sm:$0x3]
      %v907 = vld [vmem:[%s3] sm:$0x7]
      %v908 = vld [vmem:[%s3 + $0x4] sm:$0x7]
      %v909 = vld [vmem:[%s3 + $0x8] sm:$0x7]
      %v910 = vlaneseq
      %v911 = vshrl.u32 %v910, 7
      %v912 = vsub.s32 0, %v911
      %v913 = vrot.slane %v907, %v912
      %v914 = vmul.f32 %v853, %v913
      %v915 = vmul.f32 %v854, %v913
      %v916 = vmul.f32 %v856, %v913
      %v917 = vmul.f32 %v857, %v913
      %v918 = vmul.f32 %v859, %v913
      %v919 = vmul.f32 %v860, %v913
      %v920 = vmul.f32 %v862, %v913
      %v921 = vmul.f32 %v863, %v913
      %v922 = vmul.f32 %v865, %v913
      %v923 = vmul.f32 %v866, %v913
      %v924 = vmul.f32 %v868, %v913
      %v925 = vmul.f32 %v869, %v913
      %v926 = vmul.f32 %v871, %v913
      %v927 = vmul.f32 %v872, %v913
      %v928 = vmul.f32 %v874, %v913
      %v929 = vmul.f32 %v875, %v913
      %v930 = vmul.f32 %v877, %v913
      %v931 = vmul.f32 %v878, %v913
      %v932 = vmul.f32 %v880, %v913
      %v933 = vmul.f32 %v881, %v913
      %v934 = vmul.f32 %v883, %v913
      %v935 = vmul.f32 %v884, %v913
      %v936 = vmul.f32 %v886, %v913
      %v937 = vmul.f32 %v887, %v913
      %v938 = vmul.f32 %v889, %v913
      %v939 = vmul.f32 %v890, %v913
      %v940 = vmul.f32 %v892, %v913
      %v941 = vmul.f32 %v893, %v913
      %v942 = vmul.f32 %v895, %v913
      %v943 = vmul.f32 %v896, %v913
      %v944 = vmul.f32 %v898, %v913
      %v945 = vmul.f32 %v899, %v913
      %v946 = vadd.f32 %v914, 0.0
      %v947 = vadd.f32 %v915, 0.0
      %v948 = vadd.f32 %v916, 0.0
      %v949 = vadd.f32 %v917, 0.0
      %v950 = vadd.f32 %v918, 0.0
      %v951 = vadd.f32 %v919, 0.0
      %v952 = vadd.f32 %v920, 0.0
      %v953 = vadd.f32 %v921, 0.0
      %v954 = vadd.f32 %v922, 0.0
      %v955 = vadd.f32 %v923, 0.0
      %v956 = vadd.f32 %v924, 0.0
      %v957 = vadd.f32 %v925, 0.0
      %v958 = vadd.f32 %v926, 0.0
      %v959 = vadd.f32 %v927, 0.0
      %v960 = vadd.f32 %v928, 0.0
      %v961 = vadd.f32 %v929, 0.0
      %v962 = vadd.f32 %v930, 0.0
      %v963 = vadd.f32 %v931, 0.0
      %v964 = vadd.f32 %v932, 0.0
      %v965 = vadd.f32 %v933, 0.0
      %v966 = vadd.f32 %v934, 0.0
      %v967 = vadd.f32 %v935, 0.0
      %v968 = vadd.f32 %v936, 0.0
      %v969 = vadd.f32 %v937, 0.0
      %v970 = vadd.f32 %v938, 0.0
      %v971 = vadd.f32 %v939, 0.0
      %v972 = vadd.f32 %v940, 0.0
      %v973 = vadd.f32 %v941, 0.0
      %v974 = vadd.f32 %v942, 0.0
      %v975 = vadd.f32 %v943, 0.0
      %v976 = vadd.f32 %v944, 0.0
      %v977 = vadd.f32 %v945, 0.0
      %v978 = vlaneseq
      %v979 = vshrl.u32 %v978, 7
      %v980 = vsub.s32 1, %v979
      %v981 = vrot.slane %v907, %v980
      %v982 = vmul.f32 %v853, %v981
      %v983 = vmul.f32 %v854, %v981
      %v984 = vmul.f32 %v855, %v981
      %v985 = vmul.f32 %v856, %v981
      %v986 = vmul.f32 %v857, %v981
      %v987 = vmul.f32 %v858, %v981
      %v988 = vmul.f32 %v859, %v981
      %v989 = vmul.f32 %v860, %v981
      %v990 = vmul.f32 %v861, %v981
      %v991 = vmul.f32 %v862, %v981
      %v992 = vmul.f32 %v863, %v981
      %v993 = vmul.f32 %v864, %v981
      %v994 = vmul.f32 %v865, %v981
      %v995 = vmul.f32 %v866, %v981
      %v996 = vmul.f32 %v867, %v981
      %v997 = vmul.f32 %v868, %v981
      %v998 = vmul.f32 %v869, %v981
      %v999 = vmul.f32 %v870, %v981
      %v1000 = vmul.f32 %v871, %v981
      %v1001 = vmul.f32 %v872, %v981
      %v1002 = vmul.f32 %v873, %v981
      %v1003 = vmul.f32 %v874, %v981
      %v1004 = vmul.f32 %v875, %v981
      %v1005 = vmul.f32 %v876, %v981
      %v1006 = vmul.f32 %v877, %v981
      %v1007 = vmul.f32 %v878, %v981
      %v1008 = vmul.f32 %v879, %v981
      %v1009 = vmul.f32 %v880, %v981
      %v1010 = vmul.f32 %v881, %v981
      %v1011 = vmul.f32 %v882, %v981
      %v1012 = vmul.f32 %v883, %v981
      %v1013 = vmul.f32 %v884, %v981
      %v1014 = vmul.f32 %v885, %v981
      %v1015 = vmul.f32 %v886, %v981
      %v1016 = vmul.f32 %v887, %v981
      %v1017 = vmul.f32 %v888, %v981
      %v1018 = vmul.f32 %v889, %v981
      %v1019 = vmul.f32 %v890, %v981
      %v1020 = vmul.f32 %v891, %v981
      %v1021 = vmul.f32 %v892, %v981
      %v1022 = vmul.f32 %v893, %v981
      %v1023 = vmul.f32 %v894, %v981
      %v1024 = vmul.f32 %v895, %v981
      %v1025 = vmul.f32 %v896, %v981
      %v1026 = vmul.f32 %v897, %v981
      %v1027 = vmul.f32 %v898, %v981
      %v1028 = vmul.f32 %v899, %v981
      %v1029 = vmul.f32 %v900, %v981
      %vm1078 = vcmask 1046528
      %v1079 = vrot.slane %v982, 1
      %v1080 = vrot.slane %v983, 1
      %v1081 = vsel %vm1078, %v1079, %v1080
      %v1082 = vrot.slane %v984, 1
      %v1083 = vsel %vm1078, %v1080, %v1082
      %v1084 = vrot.slane %v985, 1
      %v1085 = vrot.slane %v986, 1
      %v1086 = vsel %vm1078, %v1084, %v1085
      %v1087 = vrot.slane %v987, 1
      %v1088 = vsel %vm1078, %v1085, %v1087
      %v1089 = vrot.slane %v988, 1
      %v1090 = vrot.slane %v989, 1
      %v1091 = vsel %vm1078, %v1089, %v1090
      %v1092 = vrot.slane %v990, 1
      %v1093 = vsel %vm1078, %v1090, %v1092
      %v1094 = vrot.slane %v991, 1
      %v1095 = vrot.slane %v992, 1
      %v1096 = vsel %vm1078, %v1094, %v1095
      %v1097 = vrot.slane %v993, 1
      %v1098 = vsel %vm1078, %v1095, %v1097
      %v1099 = vrot.slane %v994, 1
      %v1100 = vrot.slane %v995, 1
      %v1101 = vsel %vm1078, %v1099, %v1100
      %v1102 = vrot.slane %v996, 1
      %v1103 = vsel %vm1078, %v1100, %v1102
      %v1104 = vrot.slane %v997, 1
      %v1105 = vrot.slane %v998, 1
      %v1106 = vsel %vm1078, %v1104, %v1105
      %v1107 = vrot.slane %v999, 1
      %v1108 = vsel %vm1078, %v1105, %v1107
      %v1109 = vrot.slane %v1000, 1
      %v1110 = vrot.slane %v1001, 1
      %v1111 = vsel %vm1078, %v1109, %v1110
      %v1112 = vrot.slane %v1002, 1
      %v1113 = vsel %vm1078, %v1110, %v1112
      %v1114 = vrot.slane %v1003, 1
      %v1115 = vrot.slane %v1004, 1
      %v1116 = vsel %vm1078, %v1114, %v1115
      %v1117 = vrot.slane %v1005, 1
      %v1118 = vsel %vm1078, %v1115, %v1117
      %v1119 = vrot.slane %v1006, 1
      %v1120 = vrot.slane %v1007, 1
      %v1121 = vsel %vm1078, %v1119, %v1120
      %v1122 = vrot.slane %v1008, 1
      %v1123 = vsel %vm1078, %v1120, %v1122
      %v1124 = vrot.slane %v1009, 1
      %v1125 = vrot.slane %v1010, 1
      %v1126 = vsel %vm1078, %v1124, %v1125
      %v1127 = vrot.slane %v1011, 1
      %v1128 = vsel %vm1078, %v1125, %v1127
      %v1129 = vrot.slane %v1012, 1
      %v1130 = vrot.slane %v1013, 1
      %v1131 = vsel %vm1078, %v1129, %v1130
      %v1132 = vrot.slane %v1014, 1
      %v1133 = vsel %vm1078, %v1130, %v1132
      %v1134 = vrot.slane %v1015, 1
      %v1135 = vrot.slane %v1016, 1
      %v1136 = vsel %vm1078, %v1134, %v1135
      %v1137 = vrot.slane %v1017, 1
      %v1138 = vsel %vm1078, %v1135, %v1137
      %v1139 = vrot.slane %v1018, 1
      %v1140 = vrot.slane %v1019, 1
      %v1141 = vsel %vm1078, %v1139, %v1140
      %v1142 = vrot.slane %v1020, 1
      %v1143 = vsel %vm1078, %v1140, %v1142
      %v1144 = vrot.slane %v1021, 1
      %v1145 = vrot.slane %v1022, 1
      %v1146 = vsel %vm1078, %v1144, %v1145
      %v1147 = vrot.slane %v1023, 1
      %v1148 = vsel %vm1078, %v1145, %v1147
      %v1149 = vrot.slane %v1024, 1
      %v1150 = vrot.slane %v1025, 1
      %v1151 = vsel %vm1078, %v1149, %v1150
      %v1152 = vrot.slane %v1026, 1
      %v1153 = vsel %vm1078, %v1150, %v1152
      %v1154 = vrot.slane %v1027, 1
      %v1155 = vrot.slane %v1028, 1
      %v1156 = vsel %vm1078, %v1154, %v1155
      %v1157 = vrot.slane %v1029, 1
      %v1158 = vsel %vm1078, %v1155, %v1157
      %v1191 = vadd.f32 %v946, %v1081
      %v1192 = vadd.f32 %v947, %v1083
      %v1193 = vadd.f32 %v948, %v1086
      %v1194 = vadd.f32 %v949, %v1088
      %v1195 = vadd.f32 %v950, %v1091
      %v1196 = vadd.f32 %v951, %v1093
      %v1197 = vadd.f32 %v952, %v1096
      %v1198 = vadd.f32 %v953, %v1098
      %v1199 = vadd.f32 %v954, %v1101
      %v1200 = vadd.f32 %v955, %v1103
      %v1201 = vadd.f32 %v956, %v1106
      %v1202 = vadd.f32 %v957, %v1108
      %v1203 = vadd.f32 %v958, %v1111
      %v1204 = vadd.f32 %v959, %v1113
      %v1205 = vadd.f32 %v960, %v1116
      %v1206 = vadd.f32 %v961, %v1118
      %v1207 = vadd.f32 %v962, %v1121
      %v1208 = vadd.f32 %v963, %v1123
      %v1209 = vadd.f32 %v964, %v1126
      %v1210 = vadd.f32 %v965, %v1128
      %v1211 = vadd.f32 %v966, %v1131
      %v1212 = vadd.f32 %v967, %v1133
      %v1213 = vadd.f32 %v968, %v1136
      %v1214 = vadd.f32 %v969, %v1138
      %v1215 = vadd.f32 %v970, %v1141
      %v1216 = vadd.f32 %v971, %v1143
      %v1217 = vadd.f32 %v972, %v1146
      %v1218 = vadd.f32 %v973, %v1148
      %v1219 = vadd.f32 %v974, %v1151
      %v1220 = vadd.f32 %v975, %v1153
      %v1221 = vadd.f32 %v976, %v1156
      %v1222 = vadd.f32 %v977, %v1158
      %v1223 = vlaneseq
      %v1224 = vshrl.u32 %v1223, 7
      %v1225 = vsub.s32 2, %v1224
      %v1226 = vrot.slane %v907, %v1225
      %v1227 = vmul.f32 %v853, %v1226
      %v1228 = vmul.f32 %v854, %v1226
      %v1229 = vmul.f32 %v855, %v1226
      %v1230 = vmul.f32 %v856, %v1226
      %v1231 = vmul.f32 %v857, %v1226
      %v1232 = vmul.f32 %v858, %v1226
      %v1233 = vmul.f32 %v859, %v1226
      %v1234 = vmul.f32 %v860, %v1226
      %v1235 = vmul.f32 %v861, %v1226
      %v1236 = vmul.f32 %v862, %v1226
      %v1237 = vmul.f32 %v863, %v1226
      %v1238 = vmul.f32 %v864, %v1226
      %v1239 = vmul.f32 %v865, %v1226
      %v1240 = vmul.f32 %v866, %v1226
      %v1241 = vmul.f32 %v867, %v1226
      %v1242 = vmul.f32 %v868, %v1226
      %v1243 = vmul.f32 %v869, %v1226
      %v1244 = vmul.f32 %v870, %v1226
      %v1245 = vmul.f32 %v871, %v1226
      %v1246 = vmul.f32 %v872, %v1226
      %v1247 = vmul.f32 %v873, %v1226
      %v1248 = vmul.f32 %v874, %v1226
      %v1249 = vmul.f32 %v875, %v1226
      %v1250 = vmul.f32 %v876, %v1226
      %v1251 = vmul.f32 %v877, %v1226
      %v1252 = vmul.f32 %v878, %v1226
      %v1253 = vmul.f32 %v879, %v1226
      %v1254 = vmul.f32 %v880, %v1226
      %v1255 = vmul.f32 %v881, %v1226
      %v1256 = vmul.f32 %v882, %v1226
      %v1257 = vmul.f32 %v883, %v1226
      %v1258 = vmul.f32 %v884, %v1226
      %v1259 = vmul.f32 %v885, %v1226
      %v1260 = vmul.f32 %v886, %v1226
      %v1261 = vmul.f32 %v887, %v1226
      %v1262 = vmul.f32 %v888, %v1226
      %v1263 = vmul.f32 %v889, %v1226
      %v1264 = vmul.f32 %v890, %v1226
      %v1265 = vmul.f32 %v891, %v1226
      %v1266 = vmul.f32 %v892, %v1226
      %v1267 = vmul.f32 %v893, %v1226
      %v1268 = vmul.f32 %v894, %v1226
      %v1269 = vmul.f32 %v895, %v1226
      %v1270 = vmul.f32 %v896, %v1226
      %v1271 = vmul.f32 %v897, %v1226
      %v1272 = vmul.f32 %v898, %v1226
      %v1273 = vmul.f32 %v899, %v1226
      %v1274 = vmul.f32 %v900, %v1226
      %vm1323 = vcmask 1045504
      %v1324 = vrot.slane %v1227, 2
      %v1325 = vrot.slane %v1228, 2
      %v1326 = vsel %vm1323, %v1324, %v1325
      %v1327 = vrot.slane %v1229, 2
      %v1328 = vsel %vm1323, %v1325, %v1327
      %v1329 = vrot.slane %v1230, 2
      %v1330 = vrot.slane %v1231, 2
      %v1331 = vsel %vm1323, %v1329, %v1330
      %v1332 = vrot.slane %v1232, 2
      %v1333 = vsel %vm1323, %v1330, %v1332
      %v1334 = vrot.slane %v1233, 2
      %v1335 = vrot.slane %v1234, 2
      %v1336 = vsel %vm1323, %v1334, %v1335
      %v1337 = vrot.slane %v1235, 2
      %v1338 = vsel %vm1323, %v1335, %v1337
      %v1339 = vrot.slane %v1236, 2
      %v1340 = vrot.slane %v1237, 2
      %v1341 = vsel %vm1323, %v1339, %v1340
      %v1342 = vrot.slane %v1238, 2
      %v1343 = vsel %vm1323, %v1340, %v1342
      %v1344 = vrot.slane %v1239, 2
      %v1345 = vrot.slane %v1240, 2
      %v1346 = vsel %vm1323, %v1344, %v1345
      %v1347 = vrot.slane %v1241, 2
      %v1348 = vsel %vm1323, %v1345, %v1347
      %v1349 = vrot.slane %v1242, 2
      %v1350 = vrot.slane %v1243, 2
      %v1351 = vsel %vm1323, %v1349, %v1350
      %v1352 = vrot.slane %v1244, 2
      %v1353 = vsel %vm1323, %v1350, %v1352
      %v1354 = vrot.slane %v1245, 2
      %v1355 = vrot.slane %v1246, 2
      %v1356 = vsel %vm1323, %v1354, %v1355
      %v1357 = vrot.slane %v1247, 2
      %v1358 = vsel %vm1323, %v1355, %v1357
      %v1359 = vrot.slane %v1248, 2
      %v1360 = vrot.slane %v1249, 2
      %v1361 = vsel %vm1323, %v1359, %v1360
      %v1362 = vrot.slane %v1250, 2
      %v1363 = vsel %vm1323, %v1360, %v1362
      %v1364 = vrot.slane %v1251, 2
      %v1365 = vrot.slane %v1252, 2
      %v1366 = vsel %vm1323, %v1364, %v1365
      %v1367 = vrot.slane %v1253, 2
      %v1368 = vsel %vm1323, %v1365, %v1367
      %v1369 = vrot.slane %v1254, 2
      %v1370 = vrot.slane %v1255, 2
      %v1371 = vsel %vm1323, %v1369, %v1370
      %v1372 = vrot.slane %v1256, 2
      %v1373 = vsel %vm1323, %v1370, %v1372
      %v1374 = vrot.slane %v1257, 2
      %v1375 = vrot.slane %v1258, 2
      %v1376 = vsel %vm1323, %v1374, %v1375
      %v1377 = vrot.slane %v1259, 2
      %v1378 = vsel %vm1323, %v1375, %v1377
      %v1379 = vrot.slane %v1260, 2
      %v1380 = vrot.slane %v1261, 2
      %v1381 = vsel %vm1323, %v1379, %v1380
      %v1382 = vrot.slane %v1262, 2
      %v1383 = vsel %vm1323, %v1380, %v1382
      %v1384 = vrot.slane %v1263, 2
      %v1385 = vrot.slane %v1264, 2
      %v1386 = vsel %vm1323, %v1384, %v1385
      %v1387 = vrot.slane %v1265, 2
      %v1388 = vsel %vm1323, %v1385, %v1387
      %v1389 = vrot.slane %v1266, 2
      %v1390 = vrot.slane %v1267, 2
      %v1391 = vsel %vm1323, %v1389, %v1390
      %v1392 = vrot.slane %v1268, 2
      %v1393 = vsel %vm1323, %v1390, %v1392
      %v1394 = vrot.slane %v1269, 2
      %v1395 = vrot.slane %v1270, 2
      %v1396 = vsel %vm1323, %v1394, %v1395
      %v1397 = vrot.slane %v1271, 2
      %v1398 = vsel %vm1323, %v1395, %v1397
      %v1399 = vrot.slane %v1272, 2
      %v1400 = vrot.slane %v1273, 2
      %v1401 = vsel %vm1323, %v1399, %v1400
      %v1402 = vrot.slane %v1274, 2
      %v1403 = vsel %vm1323, %v1400, %v1402
      %v1436 = vadd.f32 %v1191, %v1326
      %v1437 = vadd.f32 %v1192, %v1328
      %v1438 = vadd.f32 %v1193, %v1331
      %v1439 = vadd.f32 %v1194, %v1333
      %v1440 = vadd.f32 %v1195, %v1336
      %v1441 = vadd.f32 %v1196, %v1338
      %v1442 = vadd.f32 %v1197, %v1341
      %v1443 = vadd.f32 %v1198, %v1343
      %v1444 = vadd.f32 %v1199, %v1346
      %v1445 = vadd.f32 %v1200, %v1348
      %v1446 = vadd.f32 %v1201, %v1351
      %v1447 = vadd.f32 %v1202, %v1353
      %v1448 = vadd.f32 %v1203, %v1356
      %v1449 = vadd.f32 %v1204, %v1358
      %v1450 = vadd.f32 %v1205, %v1361
      %v1451 = vadd.f32 %v1206, %v1363
      %v1452 = vadd.f32 %v1207, %v1366
      %v1453 = vadd.f32 %v1208, %v1368
      %v1454 = vadd.f32 %v1209, %v1371
      %v1455 = vadd.f32 %v1210, %v1373
      %v1456 = vadd.f32 %v1211, %v1376
      %v1457 = vadd.f32 %v1212, %v1378
      %v1458 = vadd.f32 %v1213, %v1381
      %v1459 = vadd.f32 %v1214, %v1383
      %v1460 = vadd.f32 %v1215, %v1386
      %v1461 = vadd.f32 %v1216, %v1388
      %v1462 = vadd.f32 %v1217, %v1391
      %v1463 = vadd.f32 %v1218, %v1393
      %v1464 = vadd.f32 %v1219, %v1396
      %v1465 = vadd.f32 %v1220, %v1398
      %v1466 = vadd.f32 %v1221, %v1401
      %v1467 = vadd.f32 %v1222, %v1403
      %v1468 = vlaneseq
      %v1469 = vshrl.u32 %v1468, 7
      %v1470 = vsub.s32 0, %v1469
      %v1471 = vrot.slane %v908, %v1470
      %v1472 = vmul.f32 %v856, %v1471
      %v1473 = vmul.f32 %v857, %v1471
      %v1474 = vmul.f32 %v859, %v1471
      %v1475 = vmul.f32 %v860, %v1471
      %v1476 = vmul.f32 %v862, %v1471
      %v1477 = vmul.f32 %v863, %v1471
      %v1478 = vmul.f32 %v865, %v1471
      %v1479 = vmul.f32 %v866, %v1471
      %v1480 = vmul.f32 %v868, %v1471
      %v1481 = vmul.f32 %v869, %v1471
      %v1482 = vmul.f32 %v871, %v1471
      %v1483 = vmul.f32 %v872, %v1471
      %v1484 = vmul.f32 %v874, %v1471
      %v1485 = vmul.f32 %v875, %v1471
      %v1486 = vmul.f32 %v877, %v1471
      %v1487 = vmul.f32 %v878, %v1471
      %v1488 = vmul.f32 %v880, %v1471
      %v1489 = vmul.f32 %v881, %v1471
      %v1490 = vmul.f32 %v883, %v1471
      %v1491 = vmul.f32 %v884, %v1471
      %v1492 = vmul.f32 %v886, %v1471
      %v1493 = vmul.f32 %v887, %v1471
      %v1494 = vmul.f32 %v889, %v1471
      %v1495 = vmul.f32 %v890, %v1471
      %v1496 = vmul.f32 %v892, %v1471
      %v1497 = vmul.f32 %v893, %v1471
      %v1498 = vmul.f32 %v895, %v1471
      %v1499 = vmul.f32 %v896, %v1471
      %v1500 = vmul.f32 %v898, %v1471
      %v1501 = vmul.f32 %v899, %v1471
      %v1502 = vmul.f32 %v901, %v1471
      %v1503 = vmul.f32 %v902, %v1471
      %v1504 = vadd.f32 %v1436, %v1472
      %v1505 = vadd.f32 %v1437, %v1473
      %v1506 = vadd.f32 %v1438, %v1474
      %v1507 = vadd.f32 %v1439, %v1475
      %v1508 = vadd.f32 %v1440, %v1476
      %v1509 = vadd.f32 %v1441, %v1477
      %v1510 = vadd.f32 %v1442, %v1478
      %v1511 = vadd.f32 %v1443, %v1479
      %v1512 = vadd.f32 %v1444, %v1480
      %v1513 = vadd.f32 %v1445, %v1481
      %v1514 = vadd.f32 %v1446, %v1482
      %v1515 = vadd.f32 %v1447, %v1483
      %v1516 = vadd.f32 %v1448, %v1484
      %v1517 = vadd.f32 %v1449, %v1485
      %v1518 = vadd.f32 %v1450, %v1486
      %v1519 = vadd.f32 %v1451, %v1487
      %v1520 = vadd.f32 %v1452, %v1488
      %v1521 = vadd.f32 %v1453, %v1489
      %v1522 = vadd.f32 %v1454, %v1490
      %v1523 = vadd.f32 %v1455, %v1491
      %v1524 = vadd.f32 %v1456, %v1492
      %v1525 = vadd.f32 %v1457, %v1493
      %v1526 = vadd.f32 %v1458, %v1494
      %v1527 = vadd.f32 %v1459, %v1495
      %v1528 = vadd.f32 %v1460, %v1496
      %v1529 = vadd.f32 %v1461, %v1497
      %v1530 = vadd.f32 %v1462, %v1498
      %v1531 = vadd.f32 %v1463, %v1499
      %v1532 = vadd.f32 %v1464, %v1500
      %v1533 = vadd.f32 %v1465, %v1501
      %v1534 = vadd.f32 %v1466, %v1502
      %v1535 = vadd.f32 %v1467, %v1503
      %v1536 = vlaneseq
      %v1537 = vshrl.u32 %v1536, 7
      %v1538 = vsub.s32 1, %v1537
      %v1539 = vrot.slane %v908, %v1538
      %v1540 = vmul.f32 %v856, %v1539
      %v1541 = vmul.f32 %v857, %v1539
      %v1542 = vmul.f32 %v858, %v1539
      %v1543 = vmul.f32 %v859, %v1539
      %v1544 = vmul.f32 %v860, %v1539
      %v1545 = vmul.f32 %v861, %v1539
      %v1546 = vmul.f32 %v862, %v1539
      %v1547 = vmul.f32 %v863, %v1539
      %v1548 = vmul.f32 %v864, %v1539
      %v1549 = vmul.f32 %v865, %v1539
      %v1550 = vmul.f32 %v866, %v1539
      %v1551 = vmul.f32 %v867, %v1539
      %v1552 = vmul.f32 %v868, %v1539
      %v1553 = vmul.f32 %v869, %v1539
      %v1554 = vmul.f32 %v870, %v1539
      %v1555 = vmul.f32 %v871, %v1539
      %v1556 = vmul.f32 %v872, %v1539
      %v1557 = vmul.f32 %v873, %v1539
      %v1558 = vmul.f32 %v874, %v1539
      %v1559 = vmul.f32 %v875, %v1539
      %v1560 = vmul.f32 %v876, %v1539
      %v1561 = vmul.f32 %v877, %v1539
      %v1562 = vmul.f32 %v878, %v1539
      %v1563 = vmul.f32 %v879, %v1539
      %v1564 = vmul.f32 %v880, %v1539
      %v1565 = vmul.f32 %v881, %v1539
      %v1566 = vmul.f32 %v882, %v1539
      %v1567 = vmul.f32 %v883, %v1539
      %v1568 = vmul.f32 %v884, %v1539
      %v1569 = vmul.f32 %v885, %v1539
      %v1570 = vmul.f32 %v886, %v1539
      %v1571 = vmul.f32 %v887, %v1539
      %v1572 = vmul.f32 %v888, %v1539
      %v1573 = vmul.f32 %v889, %v1539
      %v1574 = vmul.f32 %v890, %v1539
      %v1575 = vmul.f32 %v891, %v1539
      %v1576 = vmul.f32 %v892, %v1539
      %v1577 = vmul.f32 %v893, %v1539
      %v1578 = vmul.f32 %v894, %v1539
      %v1579 = vmul.f32 %v895, %v1539
      %v1580 = vmul.f32 %v896, %v1539
      %v1581 = vmul.f32 %v897, %v1539
      %v1582 = vmul.f32 %v898, %v1539
      %v1583 = vmul.f32 %v899, %v1539
      %v1584 = vmul.f32 %v900, %v1539
      %v1585 = vmul.f32 %v901, %v1539
      %v1586 = vmul.f32 %v902, %v1539
      %v1587 = vmul.f32 %v903, %v1539
      %v1636 = vrot.slane %v1540, 1
      %v1637 = vrot.slane %v1541, 1
      %v1638 = vsel %vm1078, %v1636, %v1637
      %v1639 = vrot.slane %v1542, 1
      %v1640 = vsel %vm1078, %v1637, %v1639
      %v1641 = vrot.slane %v1543, 1
      %v1642 = vrot.slane %v1544, 1
      %v1643 = vsel %vm1078, %v1641, %v1642
      %v1644 = vrot.slane %v1545, 1
      %v1645 = vsel %vm1078, %v1642, %v1644
      %v1646 = vrot.slane %v1546, 1
      %v1647 = vrot.slane %v1547, 1
      %v1648 = vsel %vm1078, %v1646, %v1647
      %v1649 = vrot.slane %v1548, 1
      %v1650 = vsel %vm1078, %v1647, %v1649
      %v1651 = vrot.slane %v1549, 1
      %v1652 = vrot.slane %v1550, 1
      %v1653 = vsel %vm1078, %v1651, %v1652
      %v1654 = vrot.slane %v1551, 1
      %v1655 = vsel %vm1078, %v1652, %v1654
      %v1656 = vrot.slane %v1552, 1
      %v1657 = vrot.slane %v1553, 1
      %v1658 = vsel %vm1078, %v1656, %v1657
      %v1659 = vrot.slane %v1554, 1
      %v1660 = vsel %vm1078, %v1657, %v1659
      %v1661 = vrot.slane %v1555, 1
      %v1662 = vrot.slane %v1556, 1
      %v1663 = vsel %vm1078, %v1661, %v1662
      %v1664 = vrot.slane %v1557, 1
      %v1665 = vsel %vm1078, %v1662, %v1664
      %v1666 = vrot.slane %v1558, 1
      %v1667 = vrot.slane %v1559, 1
      %v1668 = vsel %vm1078, %v1666, %v1667
      %v1669 = vrot.slane %v1560, 1
      %v1670 = vsel %vm1078, %v1667, %v1669
      %v1671 = vrot.slane %v1561, 1
      %v1672 = vrot.slane %v1562, 1
      %v1673 = vsel %vm1078, %v1671, %v1672
      %v1674 = vrot.slane %v1563, 1
      %v1675 = vsel %vm1078, %v1672, %v1674
      %v1676 = vrot.slane %v1564, 1
      %v1677 = vrot.slane %v1565, 1
      %v1678 = vsel %vm1078, %v1676, %v1677
      %v1679 = vrot.slane %v1566, 1
      %v1680 = vsel %vm1078, %v1677, %v1679
      %v1681 = vrot.slane %v1567, 1
      %v1682 = vrot.slane %v1568, 1
      %v1683 = vsel %vm1078, %v1681, %v1682
      %v1684 = vrot.slane %v1569, 1
      %v1685 = vsel %vm1078, %v1682, %v1684
      %v1686 = vrot.slane %v1570, 1
      %v1687 = vrot.slane %v1571, 1
      %v1688 = vsel %vm1078, %v1686, %v1687
      %v1689 = vrot.slane %v1572, 1
      %v1690 = vsel %vm1078, %v1687, %v1689
      %v1691 = vrot.slane %v1573, 1
      %v1692 = vrot.slane %v1574, 1
      %v1693 = vsel %vm1078, %v1691, %v1692
      %v1694 = vrot.slane %v1575, 1
      %v1695 = vsel %vm1078, %v1692, %v1694
      %v1696 = vrot.slane %v1576, 1
      %v1697 = vrot.slane %v1577, 1
      %v1698 = vsel %vm1078, %v1696, %v1697
      %v1699 = vrot.slane %v1578, 1
      %v1700 = vsel %vm1078, %v1697, %v1699
      %v1701 = vrot.slane %v1579, 1
      %v1702 = vrot.slane %v1580, 1
      %v1703 = vsel %vm1078, %v1701, %v1702
      %v1704 = vrot.slane %v1581, 1
      %v1705 = vsel %vm1078, %v1702, %v1704
      %v1706 = vrot.slane %v1582, 1
      %v1707 = vrot.slane %v1583, 1
      %v1708 = vsel %vm1078, %v1706, %v1707
      %v1709 = vrot.slane %v1584, 1
      %v1710 = vsel %vm1078, %v1707, %v1709
      %v1711 = vrot.slane %v1585, 1
      %v1712 = vrot.slane %v1586, 1
      %v1713 = vsel %vm1078, %v1711, %v1712
      %v1714 = vrot.slane %v1587, 1
      %v1715 = vsel %vm1078, %v1712, %v1714
      %v1748 = vadd.f32 %v1504, %v1638
      %v1749 = vadd.f32 %v1505, %v1640
      %v1750 = vadd.f32 %v1506, %v1643
      %v1751 = vadd.f32 %v1507, %v1645
      %v1752 = vadd.f32 %v1508, %v1648
      %v1753 = vadd.f32 %v1509, %v1650
      %v1754 = vadd.f32 %v1510, %v1653
      %v1755 = vadd.f32 %v1511, %v1655
      %v1756 = vadd.f32 %v1512, %v1658
      %v1757 = vadd.f32 %v1513, %v1660
      %v1758 = vadd.f32 %v1514, %v1663
      %v1759 = vadd.f32 %v1515, %v1665
      %v1760 = vadd.f32 %v1516, %v1668
      %v1761 = vadd.f32 %v1517, %v1670
      %v1762 = vadd.f32 %v1518, %v1673
      %v1763 = vadd.f32 %v1519, %v1675
      %v1764 = vadd.f32 %v1520, %v1678
      %v1765 = vadd.f32 %v1521, %v1680
      %v1766 = vadd.f32 %v1522, %v1683
      %v1767 = vadd.f32 %v1523, %v1685
      %v1768 = vadd.f32 %v1524, %v1688
      %v1769 = vadd.f32 %v1525, %v1690
      %v1770 = vadd.f32 %v1526, %v1693
      %v1771 = vadd.f32 %v1527, %v1695
      %v1772 = vadd.f32 %v1528, %v1698
      %v1773 = vadd.f32 %v1529, %v1700
      %v1774 = vadd.f32 %v1530, %v1703
      %v1775 = vadd.f32 %v1531, %v1705
      %v1776 = vadd.f32 %v1532, %v1708
      %v1777 = vadd.f32 %v1533, %v1710
      %v1778 = vadd.f32 %v1534, %v1713
      %v1779 = vadd.f32 %v1535, %v1715
      %v1780 = vlaneseq
      %v1781 = vshrl.u32 %v1780, 7
      %v1782 = vsub.s32 2, %v1781
      %v1783 = vrot.slane %v908, %v1782
      %v1784 = vmul.f32 %v856, %v1783
      %v1785 = vmul.f32 %v857, %v1783
      %v1786 = vmul.f32 %v858, %v1783
      %v1787 = vmul.f32 %v859, %v1783
      %v1788 = vmul.f32 %v860, %v1783
      %v1789 = vmul.f32 %v861, %v1783
      %v1790 = vmul.f32 %v862, %v1783
      %v1791 = vmul.f32 %v863, %v1783
      %v1792 = vmul.f32 %v864, %v1783
      %v1793 = vmul.f32 %v865, %v1783
      %v1794 = vmul.f32 %v866, %v1783
      %v1795 = vmul.f32 %v867, %v1783
      %v1796 = vmul.f32 %v868, %v1783
      %v1797 = vmul.f32 %v869, %v1783
      %v1798 = vmul.f32 %v870, %v1783
      %v1799 = vmul.f32 %v871, %v1783
      %v1800 = vmul.f32 %v872, %v1783
      %v1801 = vmul.f32 %v873, %v1783
      %v1802 = vmul.f32 %v874, %v1783
      %v1803 = vmul.f32 %v875, %v1783
      %v1804 = vmul.f32 %v876, %v1783
      %v1805 = vmul.f32 %v877, %v1783
      %v1806 = vmul.f32 %v878, %v1783
      %v1807 = vmul.f32 %v879, %v1783
      %v1808 = vmul.f32 %v880, %v1783
      %v1809 = vmul.f32 %v881, %v1783
      %v1810 = vmul.f32 %v882, %v1783
      %v1811 = vmul.f32 %v883, %v1783
      %v1812 = vmul.f32 %v884, %v1783
      %v1813 = vmul.f32 %v885, %v1783
      %v1814 = vmul.f32 %v886, %v1783
      %v1815 = vmul.f32 %v887, %v1783
      %v1816 = vmul.f32 %v888, %v1783
      %v1817 = vmul.f32 %v889, %v1783
      %v1818 = vmul.f32 %v890, %v1783
      %v1819 = vmul.f32 %v891, %v1783
      %v1820 = vmul.f32 %v892, %v1783
      %v1821 = vmul.f32 %v893, %v1783
      %v1822 = vmul.f32 %v894, %v1783
      %v1823 = vmul.f32 %v895, %v1783
      %v1824 = vmul.f32 %v896, %v1783
      %v1825 = vmul.f32 %v897, %v1783
      %v1826 = vmul.f32 %v898, %v1783
      %v1827 = vmul.f32 %v899, %v1783
      %v1828 = vmul.f32 %v900, %v1783
      %v1829 = vmul.f32 %v901, %v1783
      %v1830 = vmul.f32 %v902, %v1783
      %v1831 = vmul.f32 %v903, %v1783
      %v1880 = vrot.slane %v1784, 2
      %v1881 = vrot.slane %v1785, 2
      %v1882 = vsel %vm1323, %v1880, %v1881
      %v1883 = vrot.slane %v1786, 2
      %v1884 = vsel %vm1323, %v1881, %v1883
      %v1885 = vrot.slane %v1787, 2
      %v1886 = vrot.slane %v1788, 2
      %v1887 = vsel %vm1323, %v1885, %v1886
      %v1888 = vrot.slane %v1789, 2
      %v1889 = vsel %vm1323, %v1886, %v1888
      %v1890 = vrot.slane %v1790, 2
      %v1891 = vrot.slane %v1791, 2
      %v1892 = vsel %vm1323, %v1890, %v1891
      %v1893 = vrot.slane %v1792, 2
      %v1894 = vsel %vm1323, %v1891, %v1893
      %v1895 = vrot.slane %v1793, 2
      %v1896 = vrot.slane %v1794, 2
      %v1897 = vsel %vm1323, %v1895, %v1896
      %v1898 = vrot.slane %v1795, 2
      %v1899 = vsel %vm1323, %v1896, %v1898
      %v1900 = vrot.slane %v1796, 2
      %v1901 = vrot.slane %v1797, 2
      %v1902 = vsel %vm1323, %v1900, %v1901
      %v1903 = vrot.slane %v1798, 2
      %v1904 = vsel %vm1323, %v1901, %v1903
      %v1905 = vrot.slane %v1799, 2
      %v1906 = vrot.slane %v1800, 2
      %v1907 = vsel %vm1323, %v1905, %v1906
      %v1908 = vrot.slane %v1801, 2
      %v1909 = vsel %vm1323, %v1906, %v1908
      %v1910 = vrot.slane %v1802, 2
      %v1911 = vrot.slane %v1803, 2
      %v1912 = vsel %vm1323, %v1910, %v1911
      %v1913 = vrot.slane %v1804, 2
      %v1914 = vsel %vm1323, %v1911, %v1913
      %v1915 = vrot.slane %v1805, 2
      %v1916 = vrot.slane %v1806, 2
      %v1917 = vsel %vm1323, %v1915, %v1916
      %v1918 = vrot.slane %v1807, 2
      %v1919 = vsel %vm1323, %v1916, %v1918
      %v1920 = vrot.slane %v1808, 2
      %v1921 = vrot.slane %v1809, 2
      %v1922 = vsel %vm1323, %v1920, %v1921
      %v1923 = vrot.slane %v1810, 2
      %v1924 = vsel %vm1323, %v1921, %v1923
      %v1925 = vrot.slane %v1811, 2
      %v1926 = vrot.slane %v1812, 2
      %v1927 = vsel %vm1323, %v1925, %v1926
      %v1928 = vrot.slane %v1813, 2
      %v1929 = vsel %vm1323, %v1926, %v1928
      %v1930 = vrot.slane %v1814, 2
      %v1931 = vrot.slane %v1815, 2
      %v1932 = vsel %vm1323, %v1930, %v1931
      %v1933 = vrot.slane %v1816, 2
      %v1934 = vsel %vm1323, %v1931, %v1933
      %v1935 = vrot.slane %v1817, 2
      %v1936 = vrot.slane %v1818, 2
      %v1937 = vsel %vm1323, %v1935, %v1936
      %v1938 = vrot.slane %v1819, 2
      %v1939 = vsel %vm1323, %v1936, %v1938
      %v1940 = vrot.slane %v1820, 2
      %v1941 = vrot.slane %v1821, 2
      %v1942 = vsel %vm1323, %v1940, %v1941
      %v1943 = vrot.slane %v1822, 2
      %v1944 = vsel %vm1323, %v1941, %v1943
      %v1945 = vrot.slane %v1823, 2
      %v1946 = vrot.slane %v1824, 2
      %v1947 = vsel %vm1323, %v1945, %v1946
      %v1948 = vrot.slane %v1825, 2
      %v1949 = vsel %vm1323, %v1946, %v1948
      %v1950 = vrot.slane %v1826, 2
      %v1951 = vrot.slane %v1827, 2
      %v1952 = vsel %vm1323, %v1950, %v1951
      %v1953 = vrot.slane %v1828, 2
      %v1954 = vsel %vm1323, %v1951, %v1953
      %v1955 = vrot.slane %v1829, 2
      %v1956 = vrot.slane %v1830, 2
      %v1957 = vsel %vm1323, %v1955, %v1956
      %v1958 = vrot.slane %v1831, 2
      %v1959 = vsel %vm1323, %v1956, %v1958
      %v1992 = vadd.f32 %v1748, %v1882
      %v1993 = vadd.f32 %v1749, %v1884
      %v1994 = vadd.f32 %v1750, %v1887
      %v1995 = vadd.f32 %v1751, %v1889
      %v1996 = vadd.f32 %v1752, %v1892
      %v1997 = vadd.f32 %v1753, %v1894
      %v1998 = vadd.f32 %v1754, %v1897
      %v1999 = vadd.f32 %v1755, %v1899
      %v2000 = vadd.f32 %v1756, %v1902
      %v2001 = vadd.f32 %v1757, %v1904
      %v2002 = vadd.f32 %v1758, %v1907
      %v2003 = vadd.f32 %v1759, %v1909
      %v2004 = vadd.f32 %v1760, %v1912
      %v2005 = vadd.f32 %v1761, %v1914
      %v2006 = vadd.f32 %v1762, %v1917
      %v2007 = vadd.f32 %v1763, %v1919
      %v2008 = vadd.f32 %v1764, %v1922
      %v2009 = vadd.f32 %v1765, %v1924
      %v2010 = vadd.f32 %v1766, %v1927
      %v2011 = vadd.f32 %v1767, %v1929
      %v2012 = vadd.f32 %v1768, %v1932
      %v2013 = vadd.f32 %v1769, %v1934
      %v2014 = vadd.f32 %v1770, %v1937
      %v2015 = vadd.f32 %v1771, %v1939
      %v2016 = vadd.f32 %v1772, %v1942
      %v2017 = vadd.f32 %v1773, %v1944
      %v2018 = vadd.f32 %v1774, %v1947
      %v2019 = vadd.f32 %v1775, %v1949
      %v2020 = vadd.f32 %v1776, %v1952
      %v2021 = vadd.f32 %v1777, %v1954
      %v2022 = vadd.f32 %v1778, %v1957
      %v2023 = vadd.f32 %v1779, %v1959
      %v2024 = vlaneseq
      %v2025 = vshrl.u32 %v2024, 7
      %v2026 = vsub.s32 0, %v2025
      %v2027 = vrot.slane %v909, %v2026
      %v2028 = vmul.f32 %v859, %v2027
      %v2029 = vmul.f32 %v860, %v2027
      %v2030 = vmul.f32 %v862, %v2027
      %v2031 = vmul.f32 %v863, %v2027
      %v2032 = vmul.f32 %v865, %v2027
      %v2033 = vmul.f32 %v866, %v2027
      %v2034 = vmul.f32 %v868, %v2027
      %v2035 = vmul.f32 %v869, %v2027
      %v2036 = vmul.f32 %v871, %v2027
      %v2037 = vmul.f32 %v872, %v2027
      %v2038 = vmul.f32 %v874, %v2027
      %v2039 = vmul.f32 %v875, %v2027
      %v2040 = vmul.f32 %v877, %v2027
      %v2041 = vmul.f32 %v878, %v2027
      %v2042 = vmul.f32 %v880, %v2027
      %v2043 = vmul.f32 %v881, %v2027
      %v2044 = vmul.f32 %v883, %v2027
      %v2045 = vmul.f32 %v884, %v2027
      %v2046 = vmul.f32 %v886, %v2027
      %v2047 = vmul.f32 %v887, %v2027
      %v2048 = vmul.f32 %v889, %v2027
      %v2049 = vmul.f32 %v890, %v2027
      %v2050 = vmul.f32 %v892, %v2027
      %v2051 = vmul.f32 %v893, %v2027
      %v2052 = vmul.f32 %v895, %v2027
      %v2053 = vmul.f32 %v896, %v2027
      %v2054 = vmul.f32 %v898, %v2027
      %v2055 = vmul.f32 %v899, %v2027
      %v2056 = vmul.f32 %v901, %v2027
      %v2057 = vmul.f32 %v902, %v2027
      %v2058 = vmul.f32 %v904, %v2027
      %v2059 = vmul.f32 %v905, %v2027
      %v2060 = vadd.f32 %v1992, %v2028
      %v2061 = vadd.f32 %v1993, %v2029
      %v2062 = vadd.f32 %v1994, %v2030
      %v2063 = vadd.f32 %v1995, %v2031
      %v2064 = vadd.f32 %v1996, %v2032
      %v2065 = vadd.f32 %v1997, %v2033
      %v2066 = vadd.f32 %v1998, %v2034
      %v2067 = vadd.f32 %v1999, %v2035
      %v2068 = vadd.f32 %v2000, %v2036
      %v2069 = vadd.f32 %v2001, %v2037
      %v2070 = vadd.f32 %v2002, %v2038
      %v2071 = vadd.f32 %v2003, %v2039
      %v2072 = vadd.f32 %v2004, %v2040
      %v2073 = vadd.f32 %v2005, %v2041
      %v2074 = vadd.f32 %v2006, %v2042
      %v2075 = vadd.f32 %v2007, %v2043
      %v2076 = vadd.f32 %v2008, %v2044
      %v2077 = vadd.f32 %v2009, %v2045
      %v2078 = vadd.f32 %v2010, %v2046
      %v2079 = vadd.f32 %v2011, %v2047
      %v2080 = vadd.f32 %v2012, %v2048
      %v2081 = vadd.f32 %v2013, %v2049
      %v2082 = vadd.f32 %v2014, %v2050
      %v2083 = vadd.f32 %v2015, %v2051
      %v2084 = vadd.f32 %v2016, %v2052
      %v2085 = vadd.f32 %v2017, %v2053
      %v2086 = vadd.f32 %v2018, %v2054
      %v2087 = vadd.f32 %v2019, %v2055
      %v2088 = vadd.f32 %v2020, %v2056
      %v2089 = vadd.f32 %v2021, %v2057
      %v2090 = vadd.f32 %v2022, %v2058
      %v2091 = vadd.f32 %v2023, %v2059
      %v2092 = vlaneseq
      %v2093 = vshrl.u32 %v2092, 7
      %v2094 = vsub.s32 1, %v2093
      %v2095 = vrot.slane %v909, %v2094
      %v2096 = vmul.f32 %v859, %v2095
      %v2097 = vmul.f32 %v860, %v2095
      %v2098 = vmul.f32 %v861, %v2095
      %v2099 = vmul.f32 %v862, %v2095
      %v2100 = vmul.f32 %v863, %v2095
      %v2101 = vmul.f32 %v864, %v2095
      %v2102 = vmul.f32 %v865, %v2095
      %v2103 = vmul.f32 %v866, %v2095
      %v2104 = vmul.f32 %v867, %v2095
      %v2105 = vmul.f32 %v868, %v2095
      %v2106 = vmul.f32 %v869, %v2095
      %v2107 = vmul.f32 %v870, %v2095
      %v2108 = vmul.f32 %v871, %v2095
      %v2109 = vmul.f32 %v872, %v2095
      %v2110 = vmul.f32 %v873, %v2095
      %v2111 = vmul.f32 %v874, %v2095
      %v2112 = vmul.f32 %v875, %v2095
      %v2113 = vmul.f32 %v876, %v2095
      %v2114 = vmul.f32 %v877, %v2095
      %v2115 = vmul.f32 %v878, %v2095
      %v2116 = vmul.f32 %v879, %v2095
      %v2117 = vmul.f32 %v880, %v2095
      %v2118 = vmul.f32 %v881, %v2095
      %v2119 = vmul.f32 %v882, %v2095
      %v2120 = vmul.f32 %v883, %v2095
      %v2121 = vmul.f32 %v884, %v2095
      %v2122 = vmul.f32 %v885, %v2095
      %v2123 = vmul.f32 %v886, %v2095
      %v2124 = vmul.f32 %v887, %v2095
      %v2125 = vmul.f32 %v888, %v2095
      %v2126 = vmul.f32 %v889, %v2095
      %v2127 = vmul.f32 %v890, %v2095
      %v2128 = vmul.f32 %v891, %v2095
      %v2129 = vmul.f32 %v892, %v2095
      %v2130 = vmul.f32 %v893, %v2095
      %v2131 = vmul.f32 %v894, %v2095
      %v2132 = vmul.f32 %v895, %v2095
      %v2133 = vmul.f32 %v896, %v2095
      %v2134 = vmul.f32 %v897, %v2095
      %v2135 = vmul.f32 %v898, %v2095
      %v2136 = vmul.f32 %v899, %v2095
      %v2137 = vmul.f32 %v900, %v2095
      %v2138 = vmul.f32 %v901, %v2095
      %v2139 = vmul.f32 %v902, %v2095
      %v2140 = vmul.f32 %v903, %v2095
      %v2141 = vmul.f32 %v904, %v2095
      %v2142 = vmul.f32 %v905, %v2095
      %v2143 = vmul.f32 %v906, %v2095
      %v2192 = vrot.slane %v2096, 1
      %v2193 = vrot.slane %v2097, 1
      %v2194 = vsel %vm1078, %v2192, %v2193
      %v2195 = vrot.slane %v2098, 1
      %v2196 = vsel %vm1078, %v2193, %v2195
      %v2197 = vrot.slane %v2099, 1
      %v2198 = vrot.slane %v2100, 1
      %v2199 = vsel %vm1078, %v2197, %v2198
      %v2200 = vrot.slane %v2101, 1
      %v2201 = vsel %vm1078, %v2198, %v2200
      %v2202 = vrot.slane %v2102, 1
      %v2203 = vrot.slane %v2103, 1
      %v2204 = vsel %vm1078, %v2202, %v2203
      %v2205 = vrot.slane %v2104, 1
      %v2206 = vsel %vm1078, %v2203, %v2205
      %v2207 = vrot.slane %v2105, 1
      %v2208 = vrot.slane %v2106, 1
      %v2209 = vsel %vm1078, %v2207, %v2208
      %v2210 = vrot.slane %v2107, 1
      %v2211 = vsel %vm1078, %v2208, %v2210
      %v2212 = vrot.slane %v2108, 1
      %v2213 = vrot.slane %v2109, 1
      %v2214 = vsel %vm1078, %v2212, %v2213
      %v2215 = vrot.slane %v2110, 1
      %v2216 = vsel %vm1078, %v2213, %v2215
      %v2217 = vrot.slane %v2111, 1
      %v2218 = vrot.slane %v2112, 1
      %v2219 = vsel %vm1078, %v2217, %v2218
      %v2220 = vrot.slane %v2113, 1
      %v2221 = vsel %vm1078, %v2218, %v2220
      %v2222 = vrot.slane %v2114, 1
      %v2223 = vrot.slane %v2115, 1
      %v2224 = vsel %vm1078, %v2222, %v2223
      %v2225 = vrot.slane %v2116, 1
      %v2226 = vsel %vm1078, %v2223, %v2225
      %v2227 = vrot.slane %v2117, 1
      %v2228 = vrot.slane %v2118, 1
      %v2229 = vsel %vm1078, %v2227, %v2228
      %v2230 = vrot.slane %v2119, 1
      %v2231 = vsel %vm1078, %v2228, %v2230
      %v2232 = vrot.slane %v2120, 1
      %v2233 = vrot.slane %v2121, 1
      %v2234 = vsel %vm1078, %v2232, %v2233
      %v2235 = vrot.slane %v2122, 1
      %v2236 = vsel %vm1078, %v2233, %v2235
      %v2237 = vrot.slane %v2123, 1
      %v2238 = vrot.slane %v2124, 1
      %v2239 = vsel %vm1078, %v2237, %v2238
      %v2240 = vrot.slane %v2125, 1
      %v2241 = vsel %vm1078, %v2238, %v2240
      %v2242 = vrot.slane %v2126, 1
      %v2243 = vrot.slane %v2127, 1
      %v2244 = vsel %vm1078, %v2242, %v2243
      %v2245 = vrot.slane %v2128, 1
      %v2246 = vsel %vm1078, %v2243, %v2245
      %v2247 = vrot.slane %v2129, 1
      %v2248 = vrot.slane %v2130, 1
      %v2249 = vsel %vm1078, %v2247, %v2248
      %v2250 = vrot.slane %v2131, 1
      %v2251 = vsel %vm1078, %v2248, %v2250
      %v2252 = vrot.slane %v2132, 1
      %v2253 = vrot.slane %v2133, 1
      %v2254 = vsel %vm1078, %v2252, %v2253
      %v2255 = vrot.slane %v2134, 1
      %v2256 = vsel %vm1078, %v2253, %v2255
      %v2257 = vrot.slane %v2135, 1
      %v2258 = vrot.slane %v2136, 1
      %v2259 = vsel %vm1078, %v2257, %v2258
      %v2260 = vrot.slane %v2137, 1
      %v2261 = vsel %vm1078, %v2258, %v2260
      %v2262 = vrot.slane %v2138, 1
      %v2263 = vrot.slane %v2139, 1
      %v2264 = vsel %vm1078, %v2262, %v2263
      %v2265 = vrot.slane %v2140, 1
      %v2266 = vsel %vm1078, %v2263, %v2265
      %v2267 = vrot.slane %v2141, 1
      %v2268 = vrot.slane %v2142, 1
      %v2269 = vsel %vm1078, %v2267, %v2268
      %v2270 = vrot.slane %v2143, 1
      %v2271 = vsel %vm1078, %v2268, %v2270
      %v2304 = vadd.f32 %v2060, %v2194
      %v2305 = vadd.f32 %v2061, %v2196
      %v2306 = vadd.f32 %v2062, %v2199
      %v2307 = vadd.f32 %v2063, %v2201
      %v2308 = vadd.f32 %v2064, %v2204
      %v2309 = vadd.f32 %v2065, %v2206
      %v2310 = vadd.f32 %v2066, %v2209
      %v2311 = vadd.f32 %v2067, %v2211
      %v2312 = vadd.f32 %v2068, %v2214
      %v2313 = vadd.f32 %v2069, %v2216
      %v2314 = vadd.f32 %v2070, %v2219
      %v2315 = vadd.f32 %v2071, %v2221
      %v2316 = vadd.f32 %v2072, %v2224
      %v2317 = vadd.f32 %v2073, %v2226
      %v2318 = vadd.f32 %v2074, %v2229
      %v2319 = vadd.f32 %v2075, %v2231
      %v2320 = vadd.f32 %v2076, %v2234
      %v2321 = vadd.f32 %v2077, %v2236
      %v2322 = vadd.f32 %v2078, %v2239
      %v2323 = vadd.f32 %v2079, %v2241
      %v2324 = vadd.f32 %v2080, %v2244
      %v2325 = vadd.f32 %v2081, %v2246
      %v2326 = vadd.f32 %v2082, %v2249
      %v2327 = vadd.f32 %v2083, %v2251
      %v2328 = vadd.f32 %v2084, %v2254
      %v2329 = vadd.f32 %v2085, %v2256
      %v2330 = vadd.f32 %v2086, %v2259
      %v2331 = vadd.f32 %v2087, %v2261
      %v2332 = vadd.f32 %v2088, %v2264
      %v2333 = vadd.f32 %v2089, %v2266
      %v2334 = vadd.f32 %v2090, %v2269
      %v2335 = vadd.f32 %v2091, %v2271
      %v2336 = vlaneseq
      %v2337 = vshrl.u32 %v2336, 7
      %v2338 = vsub.s32 2, %v2337
      %v2339 = vrot.slane %v909, %v2338
      %v2340 = vmul.f32 %v859, %v2339
      %v2341 = vmul.f32 %v860, %v2339
      %v2342 = vmul.f32 %v861, %v2339
      %v2343 = vmul.f32 %v862, %v2339
      %v2344 = vmul.f32 %v863, %v2339
      %v2345 = vmul.f32 %v864, %v2339
      %v2346 = vmul.f32 %v865, %v2339
      %v2347 = vmul.f32 %v866, %v2339
      %v2348 = vmul.f32 %v867, %v2339
      %v2349 = vmul.f32 %v868, %v2339
      %v2350 = vmul.f32 %v869, %v2339
      %v2351 = vmul.f32 %v870, %v2339
      %v2352 = vmul.f32 %v871, %v2339
      %v2353 = vmul.f32 %v872, %v2339
      %v2354 = vmul.f32 %v873, %v2339
      %v2355 = vmul.f32 %v874, %v2339
      %v2356 = vmul.f32 %v875, %v2339
      %v2357 = vmul.f32 %v876, %v2339
      %v2358 = vmul.f32 %v877, %v2339
      %v2359 = vmul.f32 %v878, %v2339
      %v2360 = vmul.f32 %v879, %v2339
      %v2361 = vmul.f32 %v880, %v2339
      %v2362 = vmul.f32 %v881, %v2339
      %v2363 = vmul.f32 %v882, %v2339
      %v2364 = vmul.f32 %v883, %v2339
      %v2365 = vmul.f32 %v884, %v2339
      %v2366 = vmul.f32 %v885, %v2339
      %v2367 = vmul.f32 %v886, %v2339
      %v2368 = vmul.f32 %v887, %v2339
      %v2369 = vmul.f32 %v888, %v2339
      %v2370 = vmul.f32 %v889, %v2339
      %v2371 = vmul.f32 %v890, %v2339
      %v2372 = vmul.f32 %v891, %v2339
      %v2373 = vmul.f32 %v892, %v2339
      %v2374 = vmul.f32 %v893, %v2339
      %v2375 = vmul.f32 %v894, %v2339
      %v2376 = vmul.f32 %v895, %v2339
      %v2377 = vmul.f32 %v896, %v2339
      %v2378 = vmul.f32 %v897, %v2339
      %v2379 = vmul.f32 %v898, %v2339
      %v2380 = vmul.f32 %v899, %v2339
      %v2381 = vmul.f32 %v900, %v2339
      %v2382 = vmul.f32 %v901, %v2339
      %v2383 = vmul.f32 %v902, %v2339
      %v2384 = vmul.f32 %v903, %v2339
      %v2385 = vmul.f32 %v904, %v2339
      %v2386 = vmul.f32 %v905, %v2339
      %v2387 = vmul.f32 %v906, %v2339
      %v2436 = vrot.slane %v2340, 2
      %v2437 = vrot.slane %v2341, 2
      %v2438 = vsel %vm1323, %v2436, %v2437
      %v2439 = vrot.slane %v2342, 2
      %v2440 = vsel %vm1323, %v2437, %v2439
      %v2441 = vrot.slane %v2343, 2
      %v2442 = vrot.slane %v2344, 2
      %v2443 = vsel %vm1323, %v2441, %v2442
      %v2444 = vrot.slane %v2345, 2
      %v2445 = vsel %vm1323, %v2442, %v2444
      %v2446 = vrot.slane %v2346, 2
      %v2447 = vrot.slane %v2347, 2
      %v2448 = vsel %vm1323, %v2446, %v2447
      %v2449 = vrot.slane %v2348, 2
      %v2450 = vsel %vm1323, %v2447, %v2449
      %v2451 = vrot.slane %v2349, 2
      %v2452 = vrot.slane %v2350, 2
      %v2453 = vsel %vm1323, %v2451, %v2452
      %v2454 = vrot.slane %v2351, 2
      %v2455 = vsel %vm1323, %v2452, %v2454
      %v2456 = vrot.slane %v2352, 2
      %v2457 = vrot.slane %v2353, 2
      %v2458 = vsel %vm1323, %v2456, %v2457
      %v2459 = vrot.slane %v2354, 2
      %v2460 = vsel %vm1323, %v2457, %v2459
      %v2461 = vrot.slane %v2355, 2
      %v2462 = vrot.slane %v2356, 2
      %v2463 = vsel %vm1323, %v2461, %v2462
      %v2464 = vrot.slane %v2357, 2
      %v2465 = vsel %vm1323, %v2462, %v2464
      %v2466 = vrot.slane %v2358, 2
      %v2467 = vrot.slane %v2359, 2
      %v2468 = vsel %vm1323, %v2466, %v2467
      %v2469 = vrot.slane %v2360, 2
      %v2470 = vsel %vm1323, %v2467, %v2469
      %v2471 = vrot.slane %v2361, 2
      %v2472 = vrot.slane %v2362, 2
      %v2473 = vsel %vm1323, %v2471, %v2472
      %v2474 = vrot.slane %v2363, 2
      %v2475 = vsel %vm1323, %v2472, %v2474
      %v2476 = vrot.slane %v2364, 2
      %v2477 = vrot.slane %v2365, 2
      %v2478 = vsel %vm1323, %v2476, %v2477
      %v2479 = vrot.slane %v2366, 2
      %v2480 = vsel %vm1323, %v2477, %v2479
      %v2481 = vrot.slane %v2367, 2
      %v2482 = vrot.slane %v2368, 2
      %v2483 = vsel %vm1323, %v2481, %v2482
      %v2484 = vrot.slane %v2369, 2
      %v2485 = vsel %vm1323, %v2482, %v2484
      %v2486 = vrot.slane %v2370, 2
      %v2487 = vrot.slane %v2371, 2
      %v2488 = vsel %vm1323, %v2486, %v2487
      %v2489 = vrot.slane %v2372, 2
      %v2490 = vsel %vm1323, %v2487, %v2489
      %v2491 = vrot.slane %v2373, 2
      %v2492 = vrot.slane %v2374, 2
      %v2493 = vsel %vm1323, %v2491, %v2492
      %v2494 = vrot.slane %v2375, 2
      %v2495 = vsel %vm1323, %v2492, %v2494
      %v2496 = vrot.slane %v2376, 2
      %v2497 = vrot.slane %v2377, 2
      %v2498 = vsel %vm1323, %v2496, %v2497
      %v2499 = vrot.slane %v2378, 2
      %v2500 = vsel %vm1323, %v2497, %v2499
      %v2501 = vrot.slane %v2379, 2
      %v2502 = vrot.slane %v2380, 2
      %v2503 = vsel %vm1323, %v2501, %v2502
      %v2504 = vrot.slane %v2381, 2
      %v2505 = vsel %vm1323, %v2502, %v2504
      %v2506 = vrot.slane %v2382, 2
      %v2507 = vrot.slane %v2383, 2
      %v2508 = vsel %vm1323, %v2506, %v2507
      %v2509 = vrot.slane %v2384, 2
      %v2510 = vsel %vm1323, %v2507, %v2509
      %v2511 = vrot.slane %v2385, 2
      %v2512 = vrot.slane %v2386, 2
      %v2513 = vsel %vm1323, %v2511, %v2512
      %v2514 = vrot.slane %v2387, 2
      %v2515 = vsel %vm1323, %v2512, %v2514
      %v2548 = vadd.f32 %v2304, %v2438
      %v2549 = vadd.f32 %v2305, %v2440
      %v2550 = vadd.f32 %v2306, %v2443
      %v2551 = vadd.f32 %v2307, %v2445
      %v2552 = vadd.f32 %v2308, %v2448
      %v2553 = vadd.f32 %v2309, %v2450
      %v2554 = vadd.f32 %v2310, %v2453
      %v2555 = vadd.f32 %v2311, %v2455
      %v2556 = vadd.f32 %v2312, %v2458
      %v2557 = vadd.f32 %v2313, %v2460
      %v2558 = vadd.f32 %v2314, %v2463
      %v2559 = vadd.f32 %v2315, %v2465
      %v2560 = vadd.f32 %v2316, %v2468
      %v2561 = vadd.f32 %v2317, %v2470
      %v2562 = vadd.f32 %v2318, %v2473
      %v2563 = vadd.f32 %v2319, %v2475
      %v2564 = vadd.f32 %v2320, %v2478
      %v2565 = vadd.f32 %v2321, %v2480
      %v2566 = vadd.f32 %v2322, %v2483
      %v2567 = vadd.f32 %v2323, %v2485
      %v2568 = vadd.f32 %v2324, %v2488
      %v2569 = vadd.f32 %v2325, %v2490
      %v2570 = vadd.f32 %v2326, %v2493
      %v2571 = vadd.f32 %v2327, %v2495
      %v2572 = vadd.f32 %v2328, %v2498
      %v2573 = vadd.f32 %v2329, %v2500
      %v2574 = vadd.f32 %v2330, %v2503
      %v2575 = vadd.f32 %v2331, %v2505
      %v2576 = vadd.f32 %v2332, %v2508
      %v2577 = vadd.f32 %v2333, %v2510
      %v2578 = vadd.f32 %v2334, %v2513
      %v2579 = vadd.f32 %v2335, %v2515
      %v2580 = vld [vmem:[%s4] sm:$0x1]
      %v2582 = vlaneseq
      %v2583 = vshrl.u32 %v2582, 7
      %v2584 = vsub.s32 0, %v2583
      %v2585 = vrot.slane %v2580, %v2584
      %v2587 = vadd.f32 %v2548, %v2585
      %v2588 = vadd.f32 %v2549, %v2585
      %v2589 = vadd.f32 %v2550, %v2585
      %v2590 = vadd.f32 %v2551, %v2585
      %v2591 = vadd.f32 %v2552, %v2585
      %v2592 = vadd.f32 %v2553, %v2585
      %v2593 = vadd.f32 %v2554, %v2585
      %v2594 = vadd.f32 %v2555, %v2585
      %v2595 = vadd.f32 %v2556, %v2585
      %v2596 = vadd.f32 %v2557, %v2585
      %v2597 = vadd.f32 %v2558, %v2585
      %v2598 = vadd.f32 %v2559, %v2585
      %v2599 = vadd.f32 %v2560, %v2585
      %v2600 = vadd.f32 %v2561, %v2585
      %v2601 = vadd.f32 %v2562, %v2585
      %v2602 = vadd.f32 %v2563, %v2585
      %v2603 = vadd.f32 %v2564, %v2585
      %v2604 = vadd.f32 %v2565, %v2585
      %v2605 = vadd.f32 %v2566, %v2585
      %v2606 = vadd.f32 %v2567, %v2585
      %v2607 = vadd.f32 %v2568, %v2585
      %v2608 = vadd.f32 %v2569, %v2585
      %v2609 = vadd.f32 %v2570, %v2585
      %v2610 = vadd.f32 %v2571, %v2585
      %v2611 = vadd.f32 %v2572, %v2585
      %v2612 = vadd.f32 %v2573, %v2585
      %v2613 = vadd.f32 %v2574, %v2585
      %v2614 = vadd.f32 %v2575, %v2585
      %v2615 = vadd.f32 %v2576, %v2585
      %v2616 = vadd.f32 %v2577, %v2585
      %v2617 = vadd.f32 %v2578, %v2585
      %v2618 = vadd.f32 %v2579, %v2585
      %v2619 = vlaneseq
      %v2620 = vand.u32 %v2619, 127
      %vm2621 = vcmp.ge.s32.totalorder %v2620, 4
      %vm2622 = vcmp.lt.s32.totalorder %v2620, 28
      %vm2623 = vmand %vm2621, %vm2622
      %v2624 = vmax.f32 %v2587, 0.0
      %v2625 = vmax.f32 %v2588, 0.0
      %v2626 = vmax.f32 %v2589, 0.0
      %v2627 = vmax.f32 %v2590, 0.0
      %v2628 = vmax.f32 %v2591, 0.0
      %v2629 = vmax.f32 %v2592, 0.0
      %v2630 = vmax.f32 %v2593, 0.0
      %v2631 = vmax.f32 %v2594, 0.0
      %v2632 = vmax.f32 %v2595, 0.0
      %v2633 = vmax.f32 %v2596, 0.0
      %v2634 = vmax.f32 %v2597, 0.0
      %v2635 = vmax.f32 %v2598, 0.0
      %v2636 = vmax.f32 %v2599, 0.0
      %v2637 = vmax.f32 %v2600, 0.0
      %v2638 = vmax.f32 %v2601, 0.0
      %v2639 = vmax.f32 %v2602, 0.0
      %v2640 = vmax.f32 %v2603, 0.0
      %v2641 = vmax.f32 %v2604, 0.0
      %v2642 = vmax.f32 %v2605, 0.0
      %v2643 = vmax.f32 %v2606, 0.0
      %v2644 = vmax.f32 %v2607, 0.0
      %v2645 = vmax.f32 %v2608, 0.0
      %v2646 = vmax.f32 %v2609, 0.0
      %v2647 = vmax.f32 %v2610, 0.0
      %v2648 = vmax.f32 %v2611, 0.0
      %v2649 = vmax.f32 %v2612, 0.0
      %v2650 = vmax.f32 %v2613, 0.0
      %v2651 = vmax.f32 %v2614, 0.0
      %v2652 = vmax.f32 %v2615, 0.0
      %v2653 = vmax.f32 %v2616, 0.0
      %v2654 = vmax.f32 %v2617, 0.0
      %v2655 = vmax.f32 %v2618, 0.0
      %v2656 = vmin.f32 %v2624, 6.0
      %v2657 = vmin.f32 %v2625, 6.0
      %v2658 = vmin.f32 %v2626, 6.0
      %v2659 = vmin.f32 %v2627, 6.0
      %v2660 = vmin.f32 %v2628, 6.0
      %v2661 = vmin.f32 %v2629, 6.0
      %v2662 = vmin.f32 %v2630, 6.0
      %v2663 = vmin.f32 %v2631, 6.0
      %v2664 = vmin.f32 %v2632, 6.0
      %v2665 = vmin.f32 %v2633, 6.0
      %v2666 = vmin.f32 %v2634, 6.0
      %v2667 = vmin.f32 %v2635, 6.0
      %v2668 = vmin.f32 %v2636, 6.0
      %v2669 = vmin.f32 %v2637, 6.0
      %v2670 = vmin.f32 %v2638, 6.0
      %v2671 = vmin.f32 %v2639, 6.0
      %v2672 = vmin.f32 %v2640, 6.0
      %v2673 = vmin.f32 %v2641, 6.0
      %v2674 = vmin.f32 %v2642, 6.0
      %v2675 = vmin.f32 %v2643, 6.0
      %v2676 = vmin.f32 %v2644, 6.0
      %v2677 = vmin.f32 %v2645, 6.0
      %v2678 = vmin.f32 %v2646, 6.0
      %v2679 = vmin.f32 %v2647, 6.0
      %v2680 = vmin.f32 %v2648, 6.0
      %v2681 = vmin.f32 %v2649, 6.0
      %v2682 = vmin.f32 %v2650, 6.0
      %v2683 = vmin.f32 %v2651, 6.0
      %v2684 = vmin.f32 %v2652, 6.0
      %v2685 = vmin.f32 %v2653, 6.0
      %v2686 = vmin.f32 %v2654, 6.0
      %v2687 = vmin.f32 %v2655, 6.0
      %v2688 = vsel %vm2623, 1, 0
      %vm2689 = vcmp.eq.s32.totalorder %v2688, 1
      %v2690 = vsel %vm2689, %v2656, %v2587
      %v2691 = vsel %vm2689, %v2657, %v2588
      %v2692 = vsel %vm2689, %v2658, %v2589
      %v2693 = vsel %vm2689, %v2659, %v2590
      %v2694 = vsel %vm2689, %v2660, %v2591
      %v2695 = vsel %vm2689, %v2661, %v2592
      %v2696 = vsel %vm2689, %v2662, %v2593
      %v2697 = vsel %vm2689, %v2663, %v2594
      %v2698 = vsel %vm2689, %v2664, %v2595
      %v2699 = vsel %vm2689, %v2665, %v2596
      %v2700 = vsel %vm2689, %v2666, %v2597
      %v2701 = vsel %vm2689, %v2667, %v2598
      %v2702 = vsel %vm2689, %v2668, %v2599
      %v2703 = vsel %vm2689, %v2669, %v2600
      %v2704 = vsel %vm2689, %v2670, %v2601
      %v2705 = vsel %vm2689, %v2671, %v2602
      %v2706 = vsel %vm2689, %v2672, %v2603
      %v2707 = vsel %vm2689, %v2673, %v2604
      %v2708 = vsel %vm2689, %v2674, %v2605
      %v2709 = vsel %vm2689, %v2675, %v2606
      %v2710 = vsel %vm2689, %v2676, %v2607
      %v2711 = vsel %vm2689, %v2677, %v2608
      %v2712 = vsel %vm2689, %v2678, %v2609
      %v2713 = vsel %vm2689, %v2679, %v2610
      %v2714 = vsel %vm2689, %v2680, %v2611
      %v2715 = vsel %vm2689, %v2681, %v2612
      %v2716 = vsel %vm2689, %v2682, %v2613
      %v2717 = vsel %vm2689, %v2683, %v2614
      %v2718 = vsel %vm2689, %v2684, %v2615
      %v2719 = vsel %vm2689, %v2685, %v2616
      %v2720 = vsel %vm2689, %v2686, %v2617
      %v2721 = vsel %vm2689, %v2687, %v2618
      %2722 = vst.msk [vmem:[%s820 + $0x1] sm:$0xff] %vm764, %v2690
      %2723 = vst.msk [vmem:[%s820 + $0x9] sm:$0xff] %vm764, %v2691
      %2724 = vst.msk [vmem:[%s820 + $0x19] sm:$0xff] %vm764, %v2692
      %2725 = vst.msk [vmem:[%s820 + $0x21] sm:$0xff] %vm764, %v2693
      %2726 = vst.msk [vmem:[%s820 + $0x31] sm:$0xff] %vm764, %v2694
      %2727 = vst.msk [vmem:[%s820 + $0x39] sm:$0xff] %vm764, %v2695
      %2728 = vst.msk [vmem:[%s820 + $0x49] sm:$0xff] %vm764, %v2696
      %2729 = vst.msk [vmem:[%s820 + $0x51] sm:$0xff] %vm764, %v2697
      %2730 = vst.msk [vmem:[%s820 + $0x61] sm:$0xff] %vm764, %v2698
      %2731 = vst.msk [vmem:[%s820 + $0x69] sm:$0xff] %vm764, %v2699
      %2732 = vst.msk [vmem:[%s820 + $0x79] sm:$0xff] %vm764, %v2700
      %2733 = vst.msk [vmem:[%s820 + $0x81] sm:$0xff] %vm764, %v2701
      %2734 = vst.msk [vmem:[%s820 + $0x91] sm:$0xff] %vm764, %v2702
      %2735 = vst.msk [vmem:[%s820 + $0x99] sm:$0xff] %vm764, %v2703
      %2736 = vst.msk [vmem:[%s820 + $0xa9] sm:$0xff] %vm764, %v2704
      %2737 = vst.msk [vmem:[%s820 + $0xb1] sm:$0xff] %vm764, %v2705
      %2738 = vst.msk [vmem:[%s820 + $0xc1] sm:$0xff] %vm764, %v2706
      %2739 = vst.msk [vmem:[%s820 + $0xc9] sm:$0xff] %vm764, %v2707
      %2740 = vst.msk [vmem:[%s820 + $0xd9] sm:$0xff] %vm764, %v2708
      %2741 = vst.msk [vmem:[%s820 + $0xe1] sm:$0xff] %vm764, %v2709
      %2742 = vst.msk [vmem:[%s820 + $0xf1] sm:$0xff] %vm764, %v2710
      %2743 = vst.msk [vmem:[%s820 + $0xf9] sm:$0xff] %vm764, %v2711
      %2744 = vst.msk [vmem:[%s820 + $0x109] sm:$0xff] %vm764, %v2712
      %2745 = vst.msk [vmem:[%s820 + $0x111] sm:$0xff] %vm764, %v2713
      %2746 = vst.msk [vmem:[%s820 + $0x121] sm:$0xff] %vm764, %v2714
      %2747 = vst.msk [vmem:[%s820 + $0x129] sm:$0xff] %vm764, %v2715
      %2748 = vst.msk [vmem:[%s820 + $0x139] sm:$0xff] %vm764, %v2716
      %2749 = vst.msk [vmem:[%s820 + $0x141] sm:$0xff] %vm764, %v2717
      %2750 = vst.msk [vmem:[%s820 + $0x151] sm:$0xff] %vm764, %v2718
      %2751 = vst.msk [vmem:[%s820 + $0x159] sm:$0xff] %vm764, %v2719
      %2752 = vst.msk [vmem:[%s820 + $0x169] sm:$0xff] %vm764, %v2720
      %2753 = vst.msk [vmem:[%s820 + $0x171] sm:$0xff] %vm764, %v2721
      %v2754 = vld [vmem:[#allocation2] sm:$0xff]
      %v2755 = vld [vmem:[#allocation2 + $0x8] sm:$0xff]
      %v2756 = vld [vmem:[#allocation2 + $0x10] sm:$0x3]
      %v2757 = vld [vmem:[#allocation2 + $0x18] sm:$0xff]
      %v2758 = vld [vmem:[#allocation2 + $0x20] sm:$0xff]
      %v2759 = vld [vmem:[#allocation2 + $0x28] sm:$0x3]
      %v2760 = vld [vmem:[#allocation2 + $0x30] sm:$0xff]
      %v2761 = vld [vmem:[#allocation2 + $0x38] sm:$0xff]
      %v2762 = vld [vmem:[#allocation2 + $0x40] sm:$0x3]
      %v2763 = vld [vmem:[#allocation2 + $0x48] sm:$0xff]
      %v2764 = vld [vmem:[#allocation2 + $0x50] sm:$0xff]
      %v2765 = vld [vmem:[#allocation2 + $0x58] sm:$0x3]
      %v2766 = vld [vmem:[#allocation2 + $0x60] sm:$0xff]
      %v2767 = vld [vmem:[#allocation2 + $0x68] sm:$0xff]
      %v2768 = vld [vmem:[#allocation2 + $0x70] sm:$0x3]
      %v2769 = vld [vmem:[#allocation2 + $0x78] sm:$0xff]
      %v2770 = vld [vmem:[#allocation2 + $0x80] sm:$0xff]
      %v2771 = vld [vmem:[#allocation2 + $0x88] sm:$0x3]
      %v2772 = vld [vmem:[#allocation2 + $0x90] sm:$0xff]
      %v2773 = vld [vmem:[#allocation2 + $0x98] sm:$0xff]
      %v2774 = vld [vmem:[#allocation2 + $0xa0] sm:$0x3]
      %v2775 = vld [vmem:[#allocation2 + $0xa8] sm:$0xff]
      %v2776 = vld [vmem:[#allocation2 + $0xb0] sm:$0xff]
      %v2777 = vld [vmem:[#allocation2 + $0xb8] sm:$0x3]
      %v2778 = vld [vmem:[#allocation2 + $0xc0] sm:$0xff]
      %v2779 = vld [vmem:[#allocation2 + $0xc8] sm:$0xff]
      %v2780 = vld [vmem:[#allocation2 + $0xd0] sm:$0x3]
      %v2781 = vld [vmem:[#allocation2 + $0xd8] sm:$0xff]
      %v2782 = vld [vmem:[#allocation2 + $0xe0] sm:$0xff]
      %v2783 = vld [vmem:[#allocation2 + $0xe8] sm:$0x3]
      %v2784 = vld [vmem:[#allocation2 + $0xf0] sm:$0xff]
      %v2785 = vld [vmem:[#allocation2 + $0xf8] sm:$0xff]
      %v2786 = vld [vmem:[#allocation2 + $0x100] sm:$0x3]
      %v2787 = vld [vmem:[#allocation2 + $0x108] sm:$0xff]
      %v2788 = vld [vmem:[#allocation2 + $0x110] sm:$0xff]
      %v2789 = vld [vmem:[#allocation2 + $0x118] sm:$0x3]
      %v2790 = vld [vmem:[#allocation2 + $0x120] sm:$0xff]
      %v2791 = vld [vmem:[#allocation2 + $0x128] sm:$0xff]
      %v2792 = vld [vmem:[#allocation2 + $0x130] sm:$0x3]
      %v2793 = vld [vmem:[#allocation2 + $0x138] sm:$0xff]
      %v2794 = vld [vmem:[#allocation2 + $0x140] sm:$0xff]
      %v2795 = vld [vmem:[#allocation2 + $0x148] sm:$0x3]
      %v2796 = vld [vmem:[#allocation2 + $0x150] sm:$0xff]
      %v2797 = vld [vmem:[#allocation2 + $0x158] sm:$0xff]
      %v2798 = vld [vmem:[#allocation2 + $0x160] sm:$0x3]
      %v2799 = vld [vmem:[#allocation2 + $0x168] sm:$0xff]
      %v2800 = vld [vmem:[#allocation2 + $0x170] sm:$0xff]
      %v2801 = vld [vmem:[#allocation2 + $0x178] sm:$0x3]
      %v2802 = vld [vmem:[#allocation2 + $0x180] sm:$0xff]
      %v2803 = vld [vmem:[#allocation2 + $0x188] sm:$0xff]
      %v2804 = vld [vmem:[#allocation2 + $0x190] sm:$0x3]
      %v2805 = vld [vmem:[#allocation2 + $0x198] sm:$0xff]
      %v2806 = vld [vmem:[#allocation2 + $0x1a0] sm:$0xff]
      %v2807 = vld [vmem:[#allocation2 + $0x1a8] sm:$0x3]
      %v2808 = vld [vmem:[%s5] sm:$0x7]
      %v2809 = vld [vmem:[%s5 + $0x4] sm:$0x7]
      %v2810 = vld [vmem:[%s5 + $0x8] sm:$0x7]
      %v2811 = vlaneseq
      %v2812 = vshrl.u32 %v2811, 7
      %v2813 = vsub.s32 0, %v2812
      %v2814 = vrot.slane %v2808, %v2813
      %v2815 = vmul.f32 %v2754, %v2814
      %v2816 = vmul.f32 %v2755, %v2814
      %v2817 = vmul.f32 %v2757, %v2814
      %v2818 = vmul.f32 %v2758, %v2814
      %v2819 = vmul.f32 %v2760, %v2814
      %v2820 = vmul.f32 %v2761, %v2814
      %v2821 = vmul.f32 %v2763, %v2814
      %v2822 = vmul.f32 %v2764, %v2814
      %v2823 = vmul.f32 %v2766, %v2814
      %v2824 = vmul.f32 %v2767, %v2814
      %v2825 = vmul.f32 %v2769, %v2814
      %v2826 = vmul.f32 %v2770, %v2814
      %v2827 = vmul.f32 %v2772, %v2814
      %v2828 = vmul.f32 %v2773, %v2814
      %v2829 = vmul.f32 %v2775, %v2814
      %v2830 = vmul.f32 %v2776, %v2814
      %v2831 = vmul.f32 %v2778, %v2814
      %v2832 = vmul.f32 %v2779, %v2814
      %v2833 = vmul.f32 %v2781, %v2814
      %v2834 = vmul.f32 %v2782, %v2814
      %v2835 = vmul.f32 %v2784, %v2814
      %v2836 = vmul.f32 %v2785, %v2814
      %v2837 = vmul.f32 %v2787, %v2814
      %v2838 = vmul.f32 %v2788, %v2814
      %v2839 = vmul.f32 %v2790, %v2814
      %v2840 = vmul.f32 %v2791, %v2814
      %v2841 = vmul.f32 %v2793, %v2814
      %v2842 = vmul.f32 %v2794, %v2814
      %v2843 = vmul.f32 %v2796, %v2814
      %v2844 = vmul.f32 %v2797, %v2814
      %v2845 = vmul.f32 %v2799, %v2814
      %v2846 = vmul.f32 %v2800, %v2814
      %v2847 = vadd.f32 %v2815, 0.0
      %v2848 = vadd.f32 %v2816, 0.0
      %v2849 = vadd.f32 %v2817, 0.0
      %v2850 = vadd.f32 %v2818, 0.0
      %v2851 = vadd.f32 %v2819, 0.0
      %v2852 = vadd.f32 %v2820, 0.0
      %v2853 = vadd.f32 %v2821, 0.0
      %v2854 = vadd.f32 %v2822, 0.0
      %v2855 = vadd.f32 %v2823, 0.0
      %v2856 = vadd.f32 %v2824, 0.0
      %v2857 = vadd.f32 %v2825, 0.0
      %v2858 = vadd.f32 %v2826, 0.0
      %v2859 = vadd.f32 %v2827, 0.0
      %v2860 = vadd.f32 %v2828, 0.0
      %v2861 = vadd.f32 %v2829, 0.0
      %v2862 = vadd.f32 %v2830, 0.0
      %v2863 = vadd.f32 %v2831, 0.0
      %v2864 = vadd.f32 %v2832, 0.0
      %v2865 = vadd.f32 %v2833, 0.0
      %v2866 = vadd.f32 %v2834, 0.0
      %v2867 = vadd.f32 %v2835, 0.0
      %v2868 = vadd.f32 %v2836, 0.0
      %v2869 = vadd.f32 %v2837, 0.0
      %v2870 = vadd.f32 %v2838, 0.0
      %v2871 = vadd.f32 %v2839, 0.0
      %v2872 = vadd.f32 %v2840, 0.0
      %v2873 = vadd.f32 %v2841, 0.0
      %v2874 = vadd.f32 %v2842, 0.0
      %v2875 = vadd.f32 %v2843, 0.0
      %v2876 = vadd.f32 %v2844, 0.0
      %v2877 = vadd.f32 %v2845, 0.0
      %v2878 = vadd.f32 %v2846, 0.0
      %v2879 = vlaneseq
      %v2880 = vshrl.u32 %v2879, 7
      %v2881 = vsub.s32 1, %v2880
      %v2882 = vrot.slane %v2808, %v2881
      %v2883 = vmul.f32 %v2754, %v2882
      %v2884 = vmul.f32 %v2755, %v2882
      %v2885 = vmul.f32 %v2756, %v2882
      %v2886 = vmul.f32 %v2757, %v2882
      %v2887 = vmul.f32 %v2758, %v2882
      %v2888 = vmul.f32 %v2759, %v2882
      %v2889 = vmul.f32 %v2760, %v2882
      %v2890 = vmul.f32 %v2761, %v2882
      %v2891 = vmul.f32 %v2762, %v2882
      %v2892 = vmul.f32 %v2763, %v2882
      %v2893 = vmul.f32 %v2764, %v2882
      %v2894 = vmul.f32 %v2765, %v2882
      %v2895 = vmul.f32 %v2766, %v2882
      %v2896 = vmul.f32 %v2767, %v2882
      %v2897 = vmul.f32 %v2768, %v2882
      %v2898 = vmul.f32 %v2769, %v2882
      %v2899 = vmul.f32 %v2770, %v2882
      %v2900 = vmul.f32 %v2771, %v2882
      %v2901 = vmul.f32 %v2772, %v2882
      %v2902 = vmul.f32 %v2773, %v2882
      %v2903 = vmul.f32 %v2774, %v2882
      %v2904 = vmul.f32 %v2775, %v2882
      %v2905 = vmul.f32 %v2776, %v2882
      %v2906 = vmul.f32 %v2777, %v2882
      %v2907 = vmul.f32 %v2778, %v2882
      %v2908 = vmul.f32 %v2779, %v2882
      %v2909 = vmul.f32 %v2780, %v2882
      %v2910 = vmul.f32 %v2781, %v2882
      %v2911 = vmul.f32 %v2782, %v2882
      %v2912 = vmul.f32 %v2783, %v2882
      %v2913 = vmul.f32 %v2784, %v2882
      %v2914 = vmul.f32 %v2785, %v2882
      %v2915 = vmul.f32 %v2786, %v2882
      %v2916 = vmul.f32 %v2787, %v2882
      %v2917 = vmul.f32 %v2788, %v2882
      %v2918 = vmul.f32 %v2789, %v2882
      %v2919 = vmul.f32 %v2790, %v2882
      %v2920 = vmul.f32 %v2791, %v2882
      %v2921 = vmul.f32 %v2792, %v2882
      %v2922 = vmul.f32 %v2793, %v2882
      %v2923 = vmul.f32 %v2794, %v2882
      %v2924 = vmul.f32 %v2795, %v2882
      %v2925 = vmul.f32 %v2796, %v2882
      %v2926 = vmul.f32 %v2797, %v2882
      %v2927 = vmul.f32 %v2798, %v2882
      %v2928 = vmul.f32 %v2799, %v2882
      %v2929 = vmul.f32 %v2800, %v2882
      %v2930 = vmul.f32 %v2801, %v2882
      %v2979 = vrot.slane %v2883, 1
      %v2980 = vrot.slane %v2884, 1
      %v2981 = vsel %vm1078, %v2979, %v2980
      %v2982 = vrot.slane %v2885, 1
      %v2983 = vsel %vm1078, %v2980, %v2982
      %v2984 = vrot.slane %v2886, 1
      %v2985 = vrot.slane %v2887, 1
      %v2986 = vsel %vm1078, %v2984, %v2985
      %v2987 = vrot.slane %v2888, 1
      %v2988 = vsel %vm1078, %v2985, %v2987
      %v2989 = vrot.slane %v2889, 1
      %v2990 = vrot.slane %v2890, 1
      %v2991 = vsel %vm1078, %v2989, %v2990
      %v2992 = vrot.slane %v2891, 1
      %v2993 = vsel %vm1078, %v2990, %v2992
      %v2994 = vrot.slane %v2892, 1
      %v2995 = vrot.slane %v2893, 1
      %v2996 = vsel %vm1078, %v2994, %v2995
      %v2997 = vrot.slane %v2894, 1
      %v2998 = vsel %vm1078, %v2995, %v2997
      %v2999 = vrot.slane %v2895, 1
      %v3000 = vrot.slane %v2896, 1
      %v3001 = vsel %vm1078, %v2999, %v3000
      %v3002 = vrot.slane %v2897, 1
      %v3003 = vsel %vm1078, %v3000, %v3002
      %v3004 = vrot.slane %v2898, 1
      %v3005 = vrot.slane %v2899, 1
      %v3006 = vsel %vm1078, %v3004, %v3005
      %v3007 = vrot.slane %v2900, 1
      %v3008 = vsel %vm1078, %v3005, %v3007
      %v3009 = vrot.slane %v2901, 1
      %v3010 = vrot.slane %v2902, 1
      %v3011 = vsel %vm1078, %v3009, %v3010
      %v3012 = vrot.slane %v2903, 1
      %v3013 = vsel %vm1078, %v3010, %v3012
      %v3014 = vrot.slane %v2904, 1
      %v3015 = vrot.slane %v2905, 1
      %v3016 = vsel %vm1078, %v3014, %v3015
      %v3017 = vrot.slane %v2906, 1
      %v3018 = vsel %vm1078, %v3015, %v3017
      %v3019 = vrot.slane %v2907, 1
      %v3020 = vrot.slane %v2908, 1
      %v3021 = vsel %vm1078, %v3019, %v3020
      %v3022 = vrot.slane %v2909, 1
      %v3023 = vsel %vm1078, %v3020, %v3022
      %v3024 = vrot.slane %v2910, 1
      %v3025 = vrot.slane %v2911, 1
      %v3026 = vsel %vm1078, %v3024, %v3025
      %v3027 = vrot.slane %v2912, 1
      %v3028 = vsel %vm1078, %v3025, %v3027
      %v3029 = vrot.slane %v2913, 1
      %v3030 = vrot.slane %v2914, 1
      %v3031 = vsel %vm1078, %v3029, %v3030
      %v3032 = vrot.slane %v2915, 1
      %v3033 = vsel %vm1078, %v3030, %v3032
      %v3034 = vrot.slane %v2916, 1
      %v3035 = vrot.slane %v2917, 1
      %v3036 = vsel %vm1078, %v3034, %v3035
      %v3037 = vrot.slane %v2918, 1
      %v3038 = vsel %vm1078, %v3035, %v3037
      %v3039 = vrot.slane %v2919, 1
      %v3040 = vrot.slane %v2920, 1
      %v3041 = vsel %vm1078, %v3039, %v3040
      %v3042 = vrot.slane %v2921, 1
      %v3043 = vsel %vm1078, %v3040, %v3042
      %v3044 = vrot.slane %v2922, 1
      %v3045 = vrot.slane %v2923, 1
      %v3046 = vsel %vm1078, %v3044, %v3045
      %v3047 = vrot.slane %v2924, 1
      %v3048 = vsel %vm1078, %v3045, %v3047
      %v3049 = vrot.slane %v2925, 1
      %v3050 = vrot.slane %v2926, 1
      %v3051 = vsel %vm1078, %v3049, %v3050
      %v3052 = vrot.slane %v2927, 1
      %v3053 = vsel %vm1078, %v3050, %v3052
      %v3054 = vrot.slane %v2928, 1
      %v3055 = vrot.slane %v2929, 1
      %v3056 = vsel %vm1078, %v3054, %v3055
      %v3057 = vrot.slane %v2930, 1
      %v3058 = vsel %vm1078, %v3055, %v3057
      %v3091 = vadd.f32 %v2847, %v2981
      %v3092 = vadd.f32 %v2848, %v2983
      %v3093 = vadd.f32 %v2849, %v2986
      %v3094 = vadd.f32 %v2850, %v2988
      %v3095 = vadd.f32 %v2851, %v2991
      %v3096 = vadd.f32 %v2852, %v2993
      %v3097 = vadd.f32 %v2853, %v2996
      %v3098 = vadd.f32 %v2854, %v2998
      %v3099 = vadd.f32 %v2855, %v3001
      %v3100 = vadd.f32 %v2856, %v3003
      %v3101 = vadd.f32 %v2857, %v3006
      %v3102 = vadd.f32 %v2858, %v3008
      %v3103 = vadd.f32 %v2859, %v3011
      %v3104 = vadd.f32 %v2860, %v3013
      %v3105 = vadd.f32 %v2861, %v3016
      %v3106 = vadd.f32 %v2862, %v3018
      %v3107 = vadd.f32 %v2863, %v3021
      %v3108 = vadd.f32 %v2864, %v3023
      %v3109 = vadd.f32 %v2865, %v3026
      %v3110 = vadd.f32 %v2866, %v3028
      %v3111 = vadd.f32 %v2867, %v3031
      %v3112 = vadd.f32 %v2868, %v3033
      %v3113 = vadd.f32 %v2869, %v3036
      %v3114 = vadd.f32 %v2870, %v3038
      %v3115 = vadd.f32 %v2871, %v3041
      %v3116 = vadd.f32 %v2872, %v3043
      %v3117 = vadd.f32 %v2873, %v3046
      %v3118 = vadd.f32 %v2874, %v3048
      %v3119 = vadd.f32 %v2875, %v3051
      %v3120 = vadd.f32 %v2876, %v3053
      %v3121 = vadd.f32 %v2877, %v3056
      %v3122 = vadd.f32 %v2878, %v3058
      %v3123 = vlaneseq
      %v3124 = vshrl.u32 %v3123, 7
      %v3125 = vsub.s32 2, %v3124
      %v3126 = vrot.slane %v2808, %v3125
      %v3127 = vmul.f32 %v2754, %v3126
      %v3128 = vmul.f32 %v2755, %v3126
      %v3129 = vmul.f32 %v2756, %v3126
      %v3130 = vmul.f32 %v2757, %v3126
      %v3131 = vmul.f32 %v2758, %v3126
      %v3132 = vmul.f32 %v2759, %v3126
      %v3133 = vmul.f32 %v2760, %v3126
      %v3134 = vmul.f32 %v2761, %v3126
      %v3135 = vmul.f32 %v2762, %v3126
      %v3136 = vmul.f32 %v2763, %v3126
      %v3137 = vmul.f32 %v2764, %v3126
      %v3138 = vmul.f32 %v2765, %v3126
      %v3139 = vmul.f32 %v2766, %v3126
      %v3140 = vmul.f32 %v2767, %v3126
      %v3141 = vmul.f32 %v2768, %v3126
      %v3142 = vmul.f32 %v2769, %v3126
      %v3143 = vmul.f32 %v2770, %v3126
      %v3144 = vmul.f32 %v2771, %v3126
      %v3145 = vmul.f32 %v2772, %v3126
      %v3146 = vmul.f32 %v2773, %v3126
      %v3147 = vmul.f32 %v2774, %v3126
      %v3148 = vmul.f32 %v2775, %v3126
      %v3149 = vmul.f32 %v2776, %v3126
      %v3150 = vmul.f32 %v2777, %v3126
      %v3151 = vmul.f32 %v2778, %v3126
      %v3152 = vmul.f32 %v2779, %v3126
      %v3153 = vmul.f32 %v2780, %v3126
      %v3154 = vmul.f32 %v2781, %v3126
      %v3155 = vmul.f32 %v2782, %v3126
      %v3156 = vmul.f32 %v2783, %v3126
      %v3157 = vmul.f32 %v2784, %v3126
      %v3158 = vmul.f32 %v2785, %v3126
      %v3159 = vmul.f32 %v2786, %v3126
      %v3160 = vmul.f32 %v2787, %v3126
      %v3161 = vmul.f32 %v2788, %v3126
      %v3162 = vmul.f32 %v2789, %v3126
      %v3163 = vmul.f32 %v2790, %v3126
      %v3164 = vmul.f32 %v2791, %v3126
      %v3165 = vmul.f32 %v2792, %v3126
      %v3166 = vmul.f32 %v2793, %v3126
      %v3167 = vmul.f32 %v2794, %v3126
      %v3168 = vmul.f32 %v2795, %v3126
      %v3169 = vmul.f32 %v2796, %v3126
      %v3170 = vmul.f32 %v2797, %v3126
      %v3171 = vmul.f32 %v2798, %v3126
      %v3172 = vmul.f32 %v2799, %v3126
      %v3173 = vmul.f32 %v2800, %v3126
      %v3174 = vmul.f32 %v2801, %v3126
      %v3223 = vrot.slane %v3127, 2
      %v3224 = vrot.slane %v3128, 2
      %v3225 = vsel %vm1323, %v3223, %v3224
      %v3226 = vrot.slane %v3129, 2
      %v3227 = vsel %vm1323, %v3224, %v3226
      %v3228 = vrot.slane %v3130, 2
      %v3229 = vrot.slane %v3131, 2
      %v3230 = vsel %vm1323, %v3228, %v3229
      %v3231 = vrot.slane %v3132, 2
      %v3232 = vsel %vm1323, %v3229, %v3231
      %v3233 = vrot.slane %v3133, 2
      %v3234 = vrot.slane %v3134, 2
      %v3235 = vsel %vm1323, %v3233, %v3234
      %v3236 = vrot.slane %v3135, 2
      %v3237 = vsel %vm1323, %v3234, %v3236
      %v3238 = vrot.slane %v3136, 2
      %v3239 = vrot.slane %v3137, 2
      %v3240 = vsel %vm1323, %v3238, %v3239
      %v3241 = vrot.slane %v3138, 2
      %v3242 = vsel %vm1323, %v3239, %v3241
      %v3243 = vrot.slane %v3139, 2
      %v3244 = vrot.slane %v3140, 2
      %v3245 = vsel %vm1323, %v3243, %v3244
      %v3246 = vrot.slane %v3141, 2
      %v3247 = vsel %vm1323, %v3244, %v3246
      %v3248 = vrot.slane %v3142, 2
      %v3249 = vrot.slane %v3143, 2
      %v3250 = vsel %vm1323, %v3248, %v3249
      %v3251 = vrot.slane %v3144, 2
      %v3252 = vsel %vm1323, %v3249, %v3251
      %v3253 = vrot.slane %v3145, 2
      %v3254 = vrot.slane %v3146, 2
      %v3255 = vsel %vm1323, %v3253, %v3254
      %v3256 = vrot.slane %v3147, 2
      %v3257 = vsel %vm1323, %v3254, %v3256
      %v3258 = vrot.slane %v3148, 2
      %v3259 = vrot.slane %v3149, 2
      %v3260 = vsel %vm1323, %v3258, %v3259
      %v3261 = vrot.slane %v3150, 2
      %v3262 = vsel %vm1323, %v3259, %v3261
      %v3263 = vrot.slane %v3151, 2
      %v3264 = vrot.slane %v3152, 2
      %v3265 = vsel %vm1323, %v3263, %v3264
      %v3266 = vrot.slane %v3153, 2
      %v3267 = vsel %vm1323, %v3264, %v3266
      %v3268 = vrot.slane %v3154, 2
      %v3269 = vrot.slane %v3155, 2
      %v3270 = vsel %vm1323, %v3268, %v3269
      %v3271 = vrot.slane %v3156, 2
      %v3272 = vsel %vm1323, %v3269, %v3271
      %v3273 = vrot.slane %v3157, 2
      %v3274 = vrot.slane %v3158, 2
      %v3275 = vsel %vm1323, %v3273, %v3274
      %v3276 = vrot.slane %v3159, 2
      %v3277 = vsel %vm1323, %v3274, %v3276
      %v3278 = vrot.slane %v3160, 2
      %v3279 = vrot.slane %v3161, 2
      %v3280 = vsel %vm1323, %v3278, %v3279
      %v3281 = vrot.slane %v3162, 2
      %v3282 = vsel %vm1323, %v3279, %v3281
      %v3283 = vrot.slane %v3163, 2
      %v3284 = vrot.slane %v3164, 2
      %v3285 = vsel %vm1323, %v3283, %v3284
      %v3286 = vrot.slane %v3165, 2
      %v3287 = vsel %vm1323, %v3284, %v3286
      %v3288 = vrot.slane %v3166, 2
      %v3289 = vrot.slane %v3167, 2
      %v3290 = vsel %vm1323, %v3288, %v3289
      %v3291 = vrot.slane %v3168, 2
      %v3292 = vsel %vm1323, %v3289, %v3291
      %v3293 = vrot.slane %v3169, 2
      %v3294 = vrot.slane %v3170, 2
      %v3295 = vsel %vm1323, %v3293, %v3294
      %v3296 = vrot.slane %v3171, 2
      %v3297 = vsel %vm1323, %v3294, %v3296
      %v3298 = vrot.slane %v3172, 2
      %v3299 = vrot.slane %v3173, 2
      %v3300 = vsel %vm1323, %v3298, %v3299
      %v3301 = vrot.slane %v3174, 2
      %v3302 = vsel %vm1323, %v3299, %v3301
      %v3335 = vadd.f32 %v3091, %v3225
      %v3336 = vadd.f32 %v3092, %v3227
      %v3337 = vadd.f32 %v3093, %v3230
      %v3338 = vadd.f32 %v3094, %v3232
      %v3339 = vadd.f32 %v3095, %v3235
      %v3340 = vadd.f32 %v3096, %v3237
      %v3341 = vadd.f32 %v3097, %v3240
      %v3342 = vadd.f32 %v3098, %v3242
      %v3343 = vadd.f32 %v3099, %v3245
      %v3344 = vadd.f32 %v3100, %v3247
      %v3345 = vadd.f32 %v3101, %v3250
      %v3346 = vadd.f32 %v3102, %v3252
      %v3347 = vadd.f32 %v3103, %v3255
      %v3348 = vadd.f32 %v3104, %v3257
      %v3349 = vadd.f32 %v3105, %v3260
      %v3350 = vadd.f32 %v3106, %v3262
      %v3351 = vadd.f32 %v3107, %v3265
      %v3352 = vadd.f32 %v3108, %v3267
      %v3353 = vadd.f32 %v3109, %v3270
      %v3354 = vadd.f32 %v3110, %v3272
      %v3355 = vadd.f32 %v3111, %v3275
      %v3356 = vadd.f32 %v3112, %v3277
      %v3357 = vadd.f32 %v3113, %v3280
      %v3358 = vadd.f32 %v3114, %v3282
      %v3359 = vadd.f32 %v3115, %v3285
      %v3360 = vadd.f32 %v3116, %v3287
      %v3361 = vadd.f32 %v3117, %v3290
      %v3362 = vadd.f32 %v3118, %v3292
      %v3363 = vadd.f32 %v3119, %v3295
      %v3364 = vadd.f32 %v3120, %v3297
      %v3365 = vadd.f32 %v3121, %v3300
      %v3366 = vadd.f32 %v3122, %v3302
      %v3367 = vlaneseq
      %v3368 = vshrl.u32 %v3367, 7
      %v3369 = vsub.s32 0, %v3368
      %v3370 = vrot.slane %v2809, %v3369
      %v3371 = vmul.f32 %v2757, %v3370
      %v3372 = vmul.f32 %v2758, %v3370
      %v3373 = vmul.f32 %v2760, %v3370
      %v3374 = vmul.f32 %v2761, %v3370
      %v3375 = vmul.f32 %v2763, %v3370
      %v3376 = vmul.f32 %v2764, %v3370
      %v3377 = vmul.f32 %v2766, %v3370
      %v3378 = vmul.f32 %v2767, %v3370
      %v3379 = vmul.f32 %v2769, %v3370
      %v3380 = vmul.f32 %v2770, %v3370
      %v3381 = vmul.f32 %v2772, %v3370
      %v3382 = vmul.f32 %v2773, %v3370
      %v3383 = vmul.f32 %v2775, %v3370
      %v3384 = vmul.f32 %v2776, %v3370
      %v3385 = vmul.f32 %v2778, %v3370
      %v3386 = vmul.f32 %v2779, %v3370
      %v3387 = vmul.f32 %v2781, %v3370
      %v3388 = vmul.f32 %v2782, %v3370
      %v3389 = vmul.f32 %v2784, %v3370
      %v3390 = vmul.f32 %v2785, %v3370
      %v3391 = vmul.f32 %v2787, %v3370
      %v3392 = vmul.f32 %v2788, %v3370
      %v3393 = vmul.f32 %v2790, %v3370
      %v3394 = vmul.f32 %v2791, %v3370
      %v3395 = vmul.f32 %v2793, %v3370
      %v3396 = vmul.f32 %v2794, %v3370
      %v3397 = vmul.f32 %v2796, %v3370
      %v3398 = vmul.f32 %v2797, %v3370
      %v3399 = vmul.f32 %v2799, %v3370
      %v3400 = vmul.f32 %v2800, %v3370
      %v3401 = vmul.f32 %v2802, %v3370
      %v3402 = vmul.f32 %v2803, %v3370
      %v3403 = vadd.f32 %v3335, %v3371
      %v3404 = vadd.f32 %v3336, %v3372
      %v3405 = vadd.f32 %v3337, %v3373
      %v3406 = vadd.f32 %v3338, %v3374
      %v3407 = vadd.f32 %v3339, %v3375
      %v3408 = vadd.f32 %v3340, %v3376
      %v3409 = vadd.f32 %v3341, %v3377
      %v3410 = vadd.f32 %v3342, %v3378
      %v3411 = vadd.f32 %v3343, %v3379
      %v3412 = vadd.f32 %v3344, %v3380
      %v3413 = vadd.f32 %v3345, %v3381
      %v3414 = vadd.f32 %v3346, %v3382
      %v3415 = vadd.f32 %v3347, %v3383
      %v3416 = vadd.f32 %v3348, %v3384
      %v3417 = vadd.f32 %v3349, %v3385
      %v3418 = vadd.f32 %v3350, %v3386
      %v3419 = vadd.f32 %v3351, %v3387
      %v3420 = vadd.f32 %v3352, %v3388
      %v3421 = vadd.f32 %v3353, %v3389
      %v3422 = vadd.f32 %v3354, %v3390
      %v3423 = vadd.f32 %v3355, %v3391
      %v3424 = vadd.f32 %v3356, %v3392
      %v3425 = vadd.f32 %v3357, %v3393
      %v3426 = vadd.f32 %v3358, %v3394
      %v3427 = vadd.f32 %v3359, %v3395
      %v3428 = vadd.f32 %v3360, %v3396
      %v3429 = vadd.f32 %v3361, %v3397
      %v3430 = vadd.f32 %v3362, %v3398
      %v3431 = vadd.f32 %v3363, %v3399
      %v3432 = vadd.f32 %v3364, %v3400
      %v3433 = vadd.f32 %v3365, %v3401
      %v3434 = vadd.f32 %v3366, %v3402
      %v3435 = vlaneseq
      %v3436 = vshrl.u32 %v3435, 7
      %v3437 = vsub.s32 1, %v3436
      %v3438 = vrot.slane %v2809, %v3437
      %v3439 = vmul.f32 %v2757, %v3438
      %v3440 = vmul.f32 %v2758, %v3438
      %v3441 = vmul.f32 %v2759, %v3438
      %v3442 = vmul.f32 %v2760, %v3438
      %v3443 = vmul.f32 %v2761, %v3438
      %v3444 = vmul.f32 %v2762, %v3438
      %v3445 = vmul.f32 %v2763, %v3438
      %v3446 = vmul.f32 %v2764, %v3438
      %v3447 = vmul.f32 %v2765, %v3438
      %v3448 = vmul.f32 %v2766, %v3438
      %v3449 = vmul.f32 %v2767, %v3438
      %v3450 = vmul.f32 %v2768, %v3438
      %v3451 = vmul.f32 %v2769, %v3438
      %v3452 = vmul.f32 %v2770, %v3438
      %v3453 = vmul.f32 %v2771, %v3438
      %v3454 = vmul.f32 %v2772, %v3438
      %v3455 = vmul.f32 %v2773, %v3438
      %v3456 = vmul.f32 %v2774, %v3438
      %v3457 = vmul.f32 %v2775, %v3438
      %v3458 = vmul.f32 %v2776, %v3438
      %v3459 = vmul.f32 %v2777, %v3438
      %v3460 = vmul.f32 %v2778, %v3438
      %v3461 = vmul.f32 %v2779, %v3438
      %v3462 = vmul.f32 %v2780, %v3438
      %v3463 = vmul.f32 %v2781, %v3438
      %v3464 = vmul.f32 %v2782, %v3438
      %v3465 = vmul.f32 %v2783, %v3438
      %v3466 = vmul.f32 %v2784, %v3438
      %v3467 = vmul.f32 %v2785, %v3438
      %v3468 = vmul.f32 %v2786, %v3438
      %v3469 = vmul.f32 %v2787, %v3438
      %v3470 = vmul.f32 %v2788, %v3438
      %v3471 = vmul.f32 %v2789, %v3438
      %v3472 = vmul.f32 %v2790, %v3438
      %v3473 = vmul.f32 %v2791, %v3438
      %v3474 = vmul.f32 %v2792, %v3438
      %v3475 = vmul.f32 %v2793, %v3438
      %v3476 = vmul.f32 %v2794, %v3438
      %v3477 = vmul.f32 %v2795, %v3438
      %v3478 = vmul.f32 %v2796, %v3438
      %v3479 = vmul.f32 %v2797, %v3438
      %v3480 = vmul.f32 %v2798, %v3438
      %v3481 = vmul.f32 %v2799, %v3438
      %v3482 = vmul.f32 %v2800, %v3438
      %v3483 = vmul.f32 %v2801, %v3438
      %v3484 = vmul.f32 %v2802, %v3438
      %v3485 = vmul.f32 %v2803, %v3438
      %v3486 = vmul.f32 %v2804, %v3438
      %v3535 = vrot.slane %v3439, 1
      %v3536 = vrot.slane %v3440, 1
      %v3537 = vsel %vm1078, %v3535, %v3536
      %v3538 = vrot.slane %v3441, 1
      %v3539 = vsel %vm1078, %v3536, %v3538
      %v3540 = vrot.slane %v3442, 1
      %v3541 = vrot.slane %v3443, 1
      %v3542 = vsel %vm1078, %v3540, %v3541
      %v3543 = vrot.slane %v3444, 1
      %v3544 = vsel %vm1078, %v3541, %v3543
      %v3545 = vrot.slane %v3445, 1
      %v3546 = vrot.slane %v3446, 1
      %v3547 = vsel %vm1078, %v3545, %v3546
      %v3548 = vrot.slane %v3447, 1
      %v3549 = vsel %vm1078, %v3546, %v3548
      %v3550 = vrot.slane %v3448, 1
      %v3551 = vrot.slane %v3449, 1
      %v3552 = vsel %vm1078, %v3550, %v3551
      %v3553 = vrot.slane %v3450, 1
      %v3554 = vsel %vm1078, %v3551, %v3553
      %v3555 = vrot.slane %v3451, 1
      %v3556 = vrot.slane %v3452, 1
      %v3557 = vsel %vm1078, %v3555, %v3556
      %v3558 = vrot.slane %v3453, 1
      %v3559 = vsel %vm1078, %v3556, %v3558
      %v3560 = vrot.slane %v3454, 1
      %v3561 = vrot.slane %v3455, 1
      %v3562 = vsel %vm1078, %v3560, %v3561
      %v3563 = vrot.slane %v3456, 1
      %v3564 = vsel %vm1078, %v3561, %v3563
      %v3565 = vrot.slane %v3457, 1
      %v3566 = vrot.slane %v3458, 1
      %v3567 = vsel %vm1078, %v3565, %v3566
      %v3568 = vrot.slane %v3459, 1
      %v3569 = vsel %vm1078, %v3566, %v3568
      %v3570 = vrot.slane %v3460, 1
      %v3571 = vrot.slane %v3461, 1
      %v3572 = vsel %vm1078, %v3570, %v3571
      %v3573 = vrot.slane %v3462, 1
      %v3574 = vsel %vm1078, %v3571, %v3573
      %v3575 = vrot.slane %v3463, 1
      %v3576 = vrot.slane %v3464, 1
      %v3577 = vsel %vm1078, %v3575, %v3576
      %v3578 = vrot.slane %v3465, 1
      %v3579 = vsel %vm1078, %v3576, %v3578
      %v3580 = vrot.slane %v3466, 1
      %v3581 = vrot.slane %v3467, 1
      %v3582 = vsel %vm1078, %v3580, %v3581
      %v3583 = vrot.slane %v3468, 1
      %v3584 = vsel %vm1078, %v3581, %v3583
      %v3585 = vrot.slane %v3469, 1
      %v3586 = vrot.slane %v3470, 1
      %v3587 = vsel %vm1078, %v3585, %v3586
      %v3588 = vrot.slane %v3471, 1
      %v3589 = vsel %vm1078, %v3586, %v3588
      %v3590 = vrot.slane %v3472, 1
      %v3591 = vrot.slane %v3473, 1
      %v3592 = vsel %vm1078, %v3590, %v3591
      %v3593 = vrot.slane %v3474, 1
      %v3594 = vsel %vm1078, %v3591, %v3593
      %v3595 = vrot.slane %v3475, 1
      %v3596 = vrot.slane %v3476, 1
      %v3597 = vsel %vm1078, %v3595, %v3596
      %v3598 = vrot.slane %v3477, 1
      %v3599 = vsel %vm1078, %v3596, %v3598
      %v3600 = vrot.slane %v3478, 1
      %v3601 = vrot.slane %v3479, 1
      %v3602 = vsel %vm1078, %v3600, %v3601
      %v3603 = vrot.slane %v3480, 1
      %v3604 = vsel %vm1078, %v3601, %v3603
      %v3605 = vrot.slane %v3481, 1
      %v3606 = vrot.slane %v3482, 1
      %v3607 = vsel %vm1078, %v3605, %v3606
      %v3608 = vrot.slane %v3483, 1
      %v3609 = vsel %vm1078, %v3606, %v3608
      %v3610 = vrot.slane %v3484, 1
      %v3611 = vrot.slane %v3485, 1
      %v3612 = vsel %vm1078, %v3610, %v3611
      %v3613 = vrot.slane %v3486, 1
      %v3614 = vsel %vm1078, %v3611, %v3613
      %v3647 = vadd.f32 %v3403, %v3537
      %v3648 = vadd.f32 %v3404, %v3539
      %v3649 = vadd.f32 %v3405, %v3542
      %v3650 = vadd.f32 %v3406, %v3544
      %v3651 = vadd.f32 %v3407, %v3547
      %v3652 = vadd.f32 %v3408, %v3549
      %v3653 = vadd.f32 %v3409, %v3552
      %v3654 = vadd.f32 %v3410, %v3554
      %v3655 = vadd.f32 %v3411, %v3557
      %v3656 = vadd.f32 %v3412, %v3559
      %v3657 = vadd.f32 %v3413, %v3562
      %v3658 = vadd.f32 %v3414, %v3564
      %v3659 = vadd.f32 %v3415, %v3567
      %v3660 = vadd.f32 %v3416, %v3569
      %v3661 = vadd.f32 %v3417, %v3572
      %v3662 = vadd.f32 %v3418, %v3574
      %v3663 = vadd.f32 %v3419, %v3577
      %v3664 = vadd.f32 %v3420, %v3579
      %v3665 = vadd.f32 %v3421, %v3582
      %v3666 = vadd.f32 %v3422, %v3584
      %v3667 = vadd.f32 %v3423, %v3587
      %v3668 = vadd.f32 %v3424, %v3589
      %v3669 = vadd.f32 %v3425, %v3592
      %v3670 = vadd.f32 %v3426, %v3594
      %v3671 = vadd.f32 %v3427, %v3597
      %v3672 = vadd.f32 %v3428, %v3599
      %v3673 = vadd.f32 %v3429, %v3602
      %v3674 = vadd.f32 %v3430, %v3604
      %v3675 = vadd.f32 %v3431, %v3607
      %v3676 = vadd.f32 %v3432, %v3609
      %v3677 = vadd.f32 %v3433, %v3612
      %v3678 = vadd.f32 %v3434, %v3614
      %v3679 = vlaneseq
      %v3680 = vshrl.u32 %v3679, 7
      %v3681 = vsub.s32 2, %v3680
      %v3682 = vrot.slane %v2809, %v3681
      %v3683 = vmul.f32 %v2757, %v3682
      %v3684 = vmul.f32 %v2758, %v3682
      %v3685 = vmul.f32 %v2759, %v3682
      %v3686 = vmul.f32 %v2760, %v3682
      %v3687 = vmul.f32 %v2761, %v3682
      %v3688 = vmul.f32 %v2762, %v3682
      %v3689 = vmul.f32 %v2763, %v3682
      %v3690 = vmul.f32 %v2764, %v3682
      %v3691 = vmul.f32 %v2765, %v3682
      %v3692 = vmul.f32 %v2766, %v3682
      %v3693 = vmul.f32 %v2767, %v3682
      %v3694 = vmul.f32 %v2768, %v3682
      %v3695 = vmul.f32 %v2769, %v3682
      %v3696 = vmul.f32 %v2770, %v3682
      %v3697 = vmul.f32 %v2771, %v3682
      %v3698 = vmul.f32 %v2772, %v3682
      %v3699 = vmul.f32 %v2773, %v3682
      %v3700 = vmul.f32 %v2774, %v3682
      %v3701 = vmul.f32 %v2775, %v3682
      %v3702 = vmul.f32 %v2776, %v3682
      %v3703 = vmul.f32 %v2777, %v3682
      %v3704 = vmul.f32 %v2778, %v3682
      %v3705 = vmul.f32 %v2779, %v3682
      %v3706 = vmul.f32 %v2780, %v3682
      %v3707 = vmul.f32 %v2781, %v3682
      %v3708 = vmul.f32 %v2782, %v3682
      %v3709 = vmul.f32 %v2783, %v3682
      %v3710 = vmul.f32 %v2784, %v3682
      %v3711 = vmul.f32 %v2785, %v3682
      %v3712 = vmul.f32 %v2786, %v3682
      %v3713 = vmul.f32 %v2787, %v3682
      %v3714 = vmul.f32 %v2788, %v3682
      %v3715 = vmul.f32 %v2789, %v3682
      %v3716 = vmul.f32 %v2790, %v3682
      %v3717 = vmul.f32 %v2791, %v3682
      %v3718 = vmul.f32 %v2792, %v3682
      %v3719 = vmul.f32 %v2793, %v3682
      %v3720 = vmul.f32 %v2794, %v3682
      %v3721 = vmul.f32 %v2795, %v3682
      %v3722 = vmul.f32 %v2796, %v3682
      %v3723 = vmul.f32 %v2797, %v3682
      %v3724 = vmul.f32 %v2798, %v3682
      %v3725 = vmul.f32 %v2799, %v3682
      %v3726 = vmul.f32 %v2800, %v3682
      %v3727 = vmul.f32 %v2801, %v3682
      %v3728 = vmul.f32 %v2802, %v3682
      %v3729 = vmul.f32 %v2803, %v3682
      %v3730 = vmul.f32 %v2804, %v3682
      %v3779 = vrot.slane %v3683, 2
      %v3780 = vrot.slane %v3684, 2
      %v3781 = vsel %vm1323, %v3779, %v3780
      %v3782 = vrot.slane %v3685, 2
      %v3783 = vsel %vm1323, %v3780, %v3782
      %v3784 = vrot.slane %v3686, 2
      %v3785 = vrot.slane %v3687, 2
      %v3786 = vsel %vm1323, %v3784, %v3785
      %v3787 = vrot.slane %v3688, 2
      %v3788 = vsel %vm1323, %v3785, %v3787
      %v3789 = vrot.slane %v3689, 2
      %v3790 = vrot.slane %v3690, 2
      %v3791 = vsel %vm1323, %v3789, %v3790
      %v3792 = vrot.slane %v3691, 2
      %v3793 = vsel %vm1323, %v3790, %v3792
      %v3794 = vrot.slane %v3692, 2
      %v3795 = vrot.slane %v3693, 2
      %v3796 = vsel %vm1323, %v3794, %v3795
      %v3797 = vrot.slane %v3694, 2
      %v3798 = vsel %vm1323, %v3795, %v3797
      %v3799 = vrot.slane %v3695, 2
      %v3800 = vrot.slane %v3696, 2
      %v3801 = vsel %vm1323, %v3799, %v3800
      %v3802 = vrot.slane %v3697, 2
      %v3803 = vsel %vm1323, %v3800, %v3802
      %v3804 = vrot.slane %v3698, 2
      %v3805 = vrot.slane %v3699, 2
      %v3806 = vsel %vm1323, %v3804, %v3805
      %v3807 = vrot.slane %v3700, 2
      %v3808 = vsel %vm1323, %v3805, %v3807
      %v3809 = vrot.slane %v3701, 2
      %v3810 = vrot.slane %v3702, 2
      %v3811 = vsel %vm1323, %v3809, %v3810
      %v3812 = vrot.slane %v3703, 2
      %v3813 = vsel %vm1323, %v3810, %v3812
      %v3814 = vrot.slane %v3704, 2
      %v3815 = vrot.slane %v3705, 2
      %v3816 = vsel %vm1323, %v3814, %v3815
      %v3817 = vrot.slane %v3706, 2
      %v3818 = vsel %vm1323, %v3815, %v3817
      %v3819 = vrot.slane %v3707, 2
      %v3820 = vrot.slane %v3708, 2
      %v3821 = vsel %vm1323, %v3819, %v3820
      %v3822 = vrot.slane %v3709, 2
      %v3823 = vsel %vm1323, %v3820, %v3822
      %v3824 = vrot.slane %v3710, 2
      %v3825 = vrot.slane %v3711, 2
      %v3826 = vsel %vm1323, %v3824, %v3825
      %v3827 = vrot.slane %v3712, 2
      %v3828 = vsel %vm1323, %v3825, %v3827
      %v3829 = vrot.slane %v3713, 2
      %v3830 = vrot.slane %v3714, 2
      %v3831 = vsel %vm1323, %v3829, %v3830
      %v3832 = vrot.slane %v3715, 2
      %v3833 = vsel %vm1323, %v3830, %v3832
      %v3834 = vrot.slane %v3716, 2
      %v3835 = vrot.slane %v3717, 2
      %v3836 = vsel %vm1323, %v3834, %v3835
      %v3837 = vrot.slane %v3718, 2
      %v3838 = vsel %vm1323, %v3835, %v3837
      %v3839 = vrot.slane %v3719, 2
      %v3840 = vrot.slane %v3720, 2
      %v3841 = vsel %vm1323, %v3839, %v3840
      %v3842 = vrot.slane %v3721, 2
      %v3843 = vsel %vm1323, %v3840, %v3842
      %v3844 = vrot.slane %v3722, 2
      %v3845 = vrot.slane %v3723, 2
      %v3846 = vsel %vm1323, %v3844, %v3845
      %v3847 = vrot.slane %v3724, 2
      %v3848 = vsel %vm1323, %v3845, %v3847
      %v3849 = vrot.slane %v3725, 2
      %v3850 = vrot.slane %v3726, 2
      %v3851 = vsel %vm1323, %v3849, %v3850
      %v3852 = vrot.slane %v3727, 2
      %v3853 = vsel %vm1323, %v3850, %v3852
      %v3854 = vrot.slane %v3728, 2
      %v3855 = vrot.slane %v3729, 2
      %v3856 = vsel %vm1323, %v3854, %v3855
      %v3857 = vrot.slane %v3730, 2
      %v3858 = vsel %vm1323, %v3855, %v3857
      %v3891 = vadd.f32 %v3647, %v3781
      %v3892 = vadd.f32 %v3648, %v3783
      %v3893 = vadd.f32 %v3649, %v3786
      %v3894 = vadd.f32 %v3650, %v3788
      %v3895 = vadd.f32 %v3651, %v3791
      %v3896 = vadd.f32 %v3652, %v3793
      %v3897 = vadd.f32 %v3653, %v3796
      %v3898 = vadd.f32 %v3654, %v3798
      %v3899 = vadd.f32 %v3655, %v3801
      %v3900 = vadd.f32 %v3656, %v3803
      %v3901 = vadd.f32 %v3657, %v3806
      %v3902 = vadd.f32 %v3658, %v3808
      %v3903 = vadd.f32 %v3659, %v3811
      %v3904 = vadd.f32 %v3660, %v3813
      %v3905 = vadd.f32 %v3661, %v3816
      %v3906 = vadd.f32 %v3662, %v3818
      %v3907 = vadd.f32 %v3663, %v3821
      %v3908 = vadd.f32 %v3664, %v3823
      %v3909 = vadd.f32 %v3665, %v3826
      %v3910 = vadd.f32 %v3666, %v3828
      %v3911 = vadd.f32 %v3667, %v3831
      %v3912 = vadd.f32 %v3668, %v3833
      %v3913 = vadd.f32 %v3669, %v3836
      %v3914 = vadd.f32 %v3670, %v3838
      %v3915 = vadd.f32 %v3671, %v3841
      %v3916 = vadd.f32 %v3672, %v3843
      %v3917 = vadd.f32 %v3673, %v3846
      %v3918 = vadd.f32 %v3674, %v3848
      %v3919 = vadd.f32 %v3675, %v3851
      %v3920 = vadd.f32 %v3676, %v3853
      %v3921 = vadd.f32 %v3677, %v3856
      %v3922 = vadd.f32 %v3678, %v3858
      %v3923 = vlaneseq
      %v3924 = vshrl.u32 %v3923, 7
      %v3925 = vsub.s32 0, %v3924
      %v3926 = vrot.slane %v2810, %v3925
      %v3927 = vmul.f32 %v2760, %v3926
      %v3928 = vmul.f32 %v2761, %v3926
      %v3929 = vmul.f32 %v2763, %v3926
      %v3930 = vmul.f32 %v2764, %v3926
      %v3931 = vmul.f32 %v2766, %v3926
      %v3932 = vmul.f32 %v2767, %v3926
      %v3933 = vmul.f32 %v2769, %v3926
      %v3934 = vmul.f32 %v2770, %v3926
      %v3935 = vmul.f32 %v2772, %v3926
      %v3936 = vmul.f32 %v2773, %v3926
      %v3937 = vmul.f32 %v2775, %v3926
      %v3938 = vmul.f32 %v2776, %v3926
      %v3939 = vmul.f32 %v2778, %v3926
      %v3940 = vmul.f32 %v2779, %v3926
      %v3941 = vmul.f32 %v2781, %v3926
      %v3942 = vmul.f32 %v2782, %v3926
      %v3943 = vmul.f32 %v2784, %v3926
      %v3944 = vmul.f32 %v2785, %v3926
      %v3945 = vmul.f32 %v2787, %v3926
      %v3946 = vmul.f32 %v2788, %v3926
      %v3947 = vmul.f32 %v2790, %v3926
      %v3948 = vmul.f32 %v2791, %v3926
      %v3949 = vmul.f32 %v2793, %v3926
      %v3950 = vmul.f32 %v2794, %v3926
      %v3951 = vmul.f32 %v2796, %v3926
      %v3952 = vmul.f32 %v2797, %v3926
      %v3953 = vmul.f32 %v2799, %v3926
      %v3954 = vmul.f32 %v2800, %v3926
      %v3955 = vmul.f32 %v2802, %v3926
      %v3956 = vmul.f32 %v2803, %v3926
      %v3957 = vmul.f32 %v2805, %v3926
      %v3958 = vmul.f32 %v2806, %v3926
      %v3959 = vadd.f32 %v3891, %v3927
      %v3960 = vadd.f32 %v3892, %v3928
      %v3961 = vadd.f32 %v3893, %v3929
      %v3962 = vadd.f32 %v3894, %v3930
      %v3963 = vadd.f32 %v3895, %v3931
      %v3964 = vadd.f32 %v3896, %v3932
      %v3965 = vadd.f32 %v3897, %v3933
      %v3966 = vadd.f32 %v3898, %v3934
      %v3967 = vadd.f32 %v3899, %v3935
      %v3968 = vadd.f32 %v3900, %v3936
      %v3969 = vadd.f32 %v3901, %v3937
      %v3970 = vadd.f32 %v3902, %v3938
      %v3971 = vadd.f32 %v3903, %v3939
      %v3972 = vadd.f32 %v3904, %v3940
      %v3973 = vadd.f32 %v3905, %v3941
      %v3974 = vadd.f32 %v3906, %v3942
      %v3975 = vadd.f32 %v3907, %v3943
      %v3976 = vadd.f32 %v3908, %v3944
      %v3977 = vadd.f32 %v3909, %v3945
      %v3978 = vadd.f32 %v3910, %v3946
      %v3979 = vadd.f32 %v3911, %v3947
      %v3980 = vadd.f32 %v3912, %v3948
      %v3981 = vadd.f32 %v3913, %v3949
      %v3982 = vadd.f32 %v3914, %v3950
      %v3983 = vadd.f32 %v3915, %v3951
      %v3984 = vadd.f32 %v3916, %v3952
      %v3985 = vadd.f32 %v3917, %v3953
      %v3986 = vadd.f32 %v3918, %v3954
      %v3987 = vadd.f32 %v3919, %v3955
      %v3988 = vadd.f32 %v3920, %v3956
      %v3989 = vadd.f32 %v3921, %v3957
      %v3990 = vadd.f32 %v3922, %v3958
      %v3991 = vlaneseq
      %v3992 = vshrl.u32 %v3991, 7
      %v3993 = vsub.s32 1, %v3992
      %v3994 = vrot.slane %v2810, %v3993
      %v3995 = vmul.f32 %v2760, %v3994
      %v3996 = vmul.f32 %v2761, %v3994
      %v3997 = vmul.f32 %v2762, %v3994
      %v3998 = vmul.f32 %v2763, %v3994
      %v3999 = vmul.f32 %v2764, %v3994
      %v4000 = vmul.f32 %v2765, %v3994
      %v4001 = vmul.f32 %v2766, %v3994
      %v4002 = vmul.f32 %v2767, %v3994
      %v4003 = vmul.f32 %v2768, %v3994
      %v4004 = vmul.f32 %v2769, %v3994
      %v4005 = vmul.f32 %v2770, %v3994
      %v4006 = vmul.f32 %v2771, %v3994
      %v4007 = vmul.f32 %v2772, %v3994
      %v4008 = vmul.f32 %v2773, %v3994
      %v4009 = vmul.f32 %v2774, %v3994
      %v4010 = vmul.f32 %v2775, %v3994
      %v4011 = vmul.f32 %v2776, %v3994
      %v4012 = vmul.f32 %v2777, %v3994
      %v4013 = vmul.f32 %v2778, %v3994
      %v4014 = vmul.f32 %v2779, %v3994
      %v4015 = vmul.f32 %v2780, %v3994
      %v4016 = vmul.f32 %v2781, %v3994
      %v4017 = vmul.f32 %v2782, %v3994
      %v4018 = vmul.f32 %v2783, %v3994
      %v4019 = vmul.f32 %v2784, %v3994
      %v4020 = vmul.f32 %v2785, %v3994
      %v4021 = vmul.f32 %v2786, %v3994
      %v4022 = vmul.f32 %v2787, %v3994
      %v4023 = vmul.f32 %v2788, %v3994
      %v4024 = vmul.f32 %v2789, %v3994
      %v4025 = vmul.f32 %v2790, %v3994
      %v4026 = vmul.f32 %v2791, %v3994
      %v4027 = vmul.f32 %v2792, %v3994
      %v4028 = vmul.f32 %v2793, %v3994
      %v4029 = vmul.f32 %v2794, %v3994
      %v4030 = vmul.f32 %v2795, %v3994
      %v4031 = vmul.f32 %v2796, %v3994
      %v4032 = vmul.f32 %v2797, %v3994
      %v4033 = vmul.f32 %v2798, %v3994
      %v4034 = vmul.f32 %v2799, %v3994
      %v4035 = vmul.f32 %v2800, %v3994
      %v4036 = vmul.f32 %v2801, %v3994
      %v4037 = vmul.f32 %v2802, %v3994
      %v4038 = vmul.f32 %v2803, %v3994
      %v4039 = vmul.f32 %v2804, %v3994
      %v4040 = vmul.f32 %v2805, %v3994
      %v4041 = vmul.f32 %v2806, %v3994
      %v4042 = vmul.f32 %v2807, %v3994
      %v4091 = vrot.slane %v3995, 1
      %v4092 = vrot.slane %v3996, 1
      %v4093 = vsel %vm1078, %v4091, %v4092
      %v4094 = vrot.slane %v3997, 1
      %v4095 = vsel %vm1078, %v4092, %v4094
      %v4096 = vrot.slane %v3998, 1
      %v4097 = vrot.slane %v3999, 1
      %v4098 = vsel %vm1078, %v4096, %v4097
      %v4099 = vrot.slane %v4000, 1
      %v4100 = vsel %vm1078, %v4097, %v4099
      %v4101 = vrot.slane %v4001, 1
      %v4102 = vrot.slane %v4002, 1
      %v4103 = vsel %vm1078, %v4101, %v4102
      %v4104 = vrot.slane %v4003, 1
      %v4105 = vsel %vm1078, %v4102, %v4104
      %v4106 = vrot.slane %v4004, 1
      %v4107 = vrot.slane %v4005, 1
      %v4108 = vsel %vm1078, %v4106, %v4107
      %v4109 = vrot.slane %v4006, 1
      %v4110 = vsel %vm1078, %v4107, %v4109
      %v4111 = vrot.slane %v4007, 1
      %v4112 = vrot.slane %v4008, 1
      %v4113 = vsel %vm1078, %v4111, %v4112
      %v4114 = vrot.slane %v4009, 1
      %v4115 = vsel %vm1078, %v4112, %v4114
      %v4116 = vrot.slane %v4010, 1
      %v4117 = vrot.slane %v4011, 1
      %v4118 = vsel %vm1078, %v4116, %v4117
      %v4119 = vrot.slane %v4012, 1
      %v4120 = vsel %vm1078, %v4117, %v4119
      %v4121 = vrot.slane %v4013, 1
      %v4122 = vrot.slane %v4014, 1
      %v4123 = vsel %vm1078, %v4121, %v4122
      %v4124 = vrot.slane %v4015, 1
      %v4125 = vsel %vm1078, %v4122, %v4124
      %v4126 = vrot.slane %v4016, 1
      %v4127 = vrot.slane %v4017, 1
      %v4128 = vsel %vm1078, %v4126, %v4127
      %v4129 = vrot.slane %v4018, 1
      %v4130 = vsel %vm1078, %v4127, %v4129
      %v4131 = vrot.slane %v4019, 1
      %v4132 = vrot.slane %v4020, 1
      %v4133 = vsel %vm1078, %v4131, %v4132
      %v4134 = vrot.slane %v4021, 1
      %v4135 = vsel %vm1078, %v4132, %v4134
      %v4136 = vrot.slane %v4022, 1
      %v4137 = vrot.slane %v4023, 1
      %v4138 = vsel %vm1078, %v4136, %v4137
      %v4139 = vrot.slane %v4024, 1
      %v4140 = vsel %vm1078, %v4137, %v4139
      %v4141 = vrot.slane %v4025, 1
      %v4142 = vrot.slane %v4026, 1
      %v4143 = vsel %vm1078, %v4141, %v4142
      %v4144 = vrot.slane %v4027, 1
      %v4145 = vsel %vm1078, %v4142, %v4144
      %v4146 = vrot.slane %v4028, 1
      %v4147 = vrot.slane %v4029, 1
      %v4148 = vsel %vm1078, %v4146, %v4147
      %v4149 = vrot.slane %v4030, 1
      %v4150 = vsel %vm1078, %v4147, %v4149
      %v4151 = vrot.slane %v4031, 1
      %v4152 = vrot.slane %v4032, 1
      %v4153 = vsel %vm1078, %v4151, %v4152
      %v4154 = vrot.slane %v4033, 1
      %v4155 = vsel %vm1078, %v4152, %v4154
      %v4156 = vrot.slane %v4034, 1
      %v4157 = vrot.slane %v4035, 1
      %v4158 = vsel %vm1078, %v4156, %v4157
      %v4159 = vrot.slane %v4036, 1
      %v4160 = vsel %vm1078, %v4157, %v4159
      %v4161 = vrot.slane %v4037, 1
      %v4162 = vrot.slane %v4038, 1
      %v4163 = vsel %vm1078, %v4161, %v4162
      %v4164 = vrot.slane %v4039, 1
      %v4165 = vsel %vm1078, %v4162, %v4164
      %v4166 = vrot.slane %v4040, 1
      %v4167 = vrot.slane %v4041, 1
      %v4168 = vsel %vm1078, %v4166, %v4167
      %v4169 = vrot.slane %v4042, 1
      %v4170 = vsel %vm1078, %v4167, %v4169
      %v4203 = vadd.f32 %v3959, %v4093
      %v4204 = vadd.f32 %v3960, %v4095
      %v4205 = vadd.f32 %v3961, %v4098
      %v4206 = vadd.f32 %v3962, %v4100
      %v4207 = vadd.f32 %v3963, %v4103
      %v4208 = vadd.f32 %v3964, %v4105
      %v4209 = vadd.f32 %v3965, %v4108
      %v4210 = vadd.f32 %v3966, %v4110
      %v4211 = vadd.f32 %v3967, %v4113
      %v4212 = vadd.f32 %v3968, %v4115
      %v4213 = vadd.f32 %v3969, %v4118
      %v4214 = vadd.f32 %v3970, %v4120
      %v4215 = vadd.f32 %v3971, %v4123
      %v4216 = vadd.f32 %v3972, %v4125
      %v4217 = vadd.f32 %v3973, %v4128
      %v4218 = vadd.f32 %v3974, %v4130
      %v4219 = vadd.f32 %v3975, %v4133
      %v4220 = vadd.f32 %v3976, %v4135
      %v4221 = vadd.f32 %v3977, %v4138
      %v4222 = vadd.f32 %v3978, %v4140
      %v4223 = vadd.f32 %v3979, %v4143
      %v4224 = vadd.f32 %v3980, %v4145
      %v4225 = vadd.f32 %v3981, %v4148
      %v4226 = vadd.f32 %v3982, %v4150
      %v4227 = vadd.f32 %v3983, %v4153
      %v4228 = vadd.f32 %v3984, %v4155
      %v4229 = vadd.f32 %v3985, %v4158
      %v4230 = vadd.f32 %v3986, %v4160
      %v4231 = vadd.f32 %v3987, %v4163
      %v4232 = vadd.f32 %v3988, %v4165
      %v4233 = vadd.f32 %v3989, %v4168
      %v4234 = vadd.f32 %v3990, %v4170
      %v4235 = vlaneseq
      %v4236 = vshrl.u32 %v4235, 7
      %v4237 = vsub.s32 2, %v4236
      %v4238 = vrot.slane %v2810, %v4237
      %v4239 = vmul.f32 %v2760, %v4238
      %v4240 = vmul.f32 %v2761, %v4238
      %v4241 = vmul.f32 %v2762, %v4238
      %v4242 = vmul.f32 %v2763, %v4238
      %v4243 = vmul.f32 %v2764, %v4238
      %v4244 = vmul.f32 %v2765, %v4238
      %v4245 = vmul.f32 %v2766, %v4238
      %v4246 = vmul.f32 %v2767, %v4238
      %v4247 = vmul.f32 %v2768, %v4238
      %v4248 = vmul.f32 %v2769, %v4238
      %v4249 = vmul.f32 %v2770, %v4238
      %v4250 = vmul.f32 %v2771, %v4238
      %v4251 = vmul.f32 %v2772, %v4238
      %v4252 = vmul.f32 %v2773, %v4238
      %v4253 = vmul.f32 %v2774, %v4238
      %v4254 = vmul.f32 %v2775, %v4238
      %v4255 = vmul.f32 %v2776, %v4238
      %v4256 = vmul.f32 %v2777, %v4238
      %v4257 = vmul.f32 %v2778, %v4238
      %v4258 = vmul.f32 %v2779, %v4238
      %v4259 = vmul.f32 %v2780, %v4238
      %v4260 = vmul.f32 %v2781, %v4238
      %v4261 = vmul.f32 %v2782, %v4238
      %v4262 = vmul.f32 %v2783, %v4238
      %v4263 = vmul.f32 %v2784, %v4238
      %v4264 = vmul.f32 %v2785, %v4238
      %v4265 = vmul.f32 %v2786, %v4238
      %v4266 = vmul.f32 %v2787, %v4238
      %v4267 = vmul.f32 %v2788, %v4238
      %v4268 = vmul.f32 %v2789, %v4238
      %v4269 = vmul.f32 %v2790, %v4238
      %v4270 = vmul.f32 %v2791, %v4238
      %v4271 = vmul.f32 %v2792, %v4238
      %v4272 = vmul.f32 %v2793, %v4238
      %v4273 = vmul.f32 %v2794, %v4238
      %v4274 = vmul.f32 %v2795, %v4238
      %v4275 = vmul.f32 %v2796, %v4238
      %v4276 = vmul.f32 %v2797, %v4238
      %v4277 = vmul.f32 %v2798, %v4238
      %v4278 = vmul.f32 %v2799, %v4238
      %v4279 = vmul.f32 %v2800, %v4238
      %v4280 = vmul.f32 %v2801, %v4238
      %v4281 = vmul.f32 %v2802, %v4238
      %v4282 = vmul.f32 %v2803, %v4238
      %v4283 = vmul.f32 %v2804, %v4238
      %v4284 = vmul.f32 %v2805, %v4238
      %v4285 = vmul.f32 %v2806, %v4238
      %v4286 = vmul.f32 %v2807, %v4238
      %v4335 = vrot.slane %v4239, 2
      %v4336 = vrot.slane %v4240, 2
      %v4337 = vsel %vm1323, %v4335, %v4336
      %v4338 = vrot.slane %v4241, 2
      %v4339 = vsel %vm1323, %v4336, %v4338
      %v4340 = vrot.slane %v4242, 2
      %v4341 = vrot.slane %v4243, 2
      %v4342 = vsel %vm1323, %v4340, %v4341
      %v4343 = vrot.slane %v4244, 2
      %v4344 = vsel %vm1323, %v4341, %v4343
      %v4345 = vrot.slane %v4245, 2
      %v4346 = vrot.slane %v4246, 2
      %v4347 = vsel %vm1323, %v4345, %v4346
      %v4348 = vrot.slane %v4247, 2
      %v4349 = vsel %vm1323, %v4346, %v4348
      %v4350 = vrot.slane %v4248, 2
      %v4351 = vrot.slane %v4249, 2
      %v4352 = vsel %vm1323, %v4350, %v4351
      %v4353 = vrot.slane %v4250, 2
      %v4354 = vsel %vm1323, %v4351, %v4353
      %v4355 = vrot.slane %v4251, 2
      %v4356 = vrot.slane %v4252, 2
      %v4357 = vsel %vm1323, %v4355, %v4356
      %v4358 = vrot.slane %v4253, 2
      %v4359 = vsel %vm1323, %v4356, %v4358
      %v4360 = vrot.slane %v4254, 2
      %v4361 = vrot.slane %v4255, 2
      %v4362 = vsel %vm1323, %v4360, %v4361
      %v4363 = vrot.slane %v4256, 2
      %v4364 = vsel %vm1323, %v4361, %v4363
      %v4365 = vrot.slane %v4257, 2
      %v4366 = vrot.slane %v4258, 2
      %v4367 = vsel %vm1323, %v4365, %v4366
      %v4368 = vrot.slane %v4259, 2
      %v4369 = vsel %vm1323, %v4366, %v4368
      %v4370 = vrot.slane %v4260, 2
      %v4371 = vrot.slane %v4261, 2
      %v4372 = vsel %vm1323, %v4370, %v4371
      %v4373 = vrot.slane %v4262, 2
      %v4374 = vsel %vm1323, %v4371, %v4373
      %v4375 = vrot.slane %v4263, 2
      %v4376 = vrot.slane %v4264, 2
      %v4377 = vsel %vm1323, %v4375, %v4376
      %v4378 = vrot.slane %v4265, 2
      %v4379 = vsel %vm1323, %v4376, %v4378
      %v4380 = vrot.slane %v4266, 2
      %v4381 = vrot.slane %v4267, 2
      %v4382 = vsel %vm1323, %v4380, %v4381
      %v4383 = vrot.slane %v4268, 2
      %v4384 = vsel %vm1323, %v4381, %v4383
      %v4385 = vrot.slane %v4269, 2
      %v4386 = vrot.slane %v4270, 2
      %v4387 = vsel %vm1323, %v4385, %v4386
      %v4388 = vrot.slane %v4271, 2
      %v4389 = vsel %vm1323, %v4386, %v4388
      %v4390 = vrot.slane %v4272, 2
      %v4391 = vrot.slane %v4273, 2
      %v4392 = vsel %vm1323, %v4390, %v4391
      %v4393 = vrot.slane %v4274, 2
      %v4394 = vsel %vm1323, %v4391, %v4393
      %v4395 = vrot.slane %v4275, 2
      %v4396 = vrot.slane %v4276, 2
      %v4397 = vsel %vm1323, %v4395, %v4396
      %v4398 = vrot.slane %v4277, 2
      %v4399 = vsel %vm1323, %v4396, %v4398
      %v4400 = vrot.slane %v4278, 2
      %v4401 = vrot.slane %v4279, 2
      %v4402 = vsel %vm1323, %v4400, %v4401
      %v4403 = vrot.slane %v4280, 2
      %v4404 = vsel %vm1323, %v4401, %v4403
      %v4405 = vrot.slane %v4281, 2
      %v4406 = vrot.slane %v4282, 2
      %v4407 = vsel %vm1323, %v4405, %v4406
      %v4408 = vrot.slane %v4283, 2
      %v4409 = vsel %vm1323, %v4406, %v4408
      %v4410 = vrot.slane %v4284, 2
      %v4411 = vrot.slane %v4285, 2
      %v4412 = vsel %vm1323, %v4410, %v4411
      %v4413 = vrot.slane %v4286, 2
      %v4414 = vsel %vm1323, %v4411, %v4413
      %v4447 = vadd.f32 %v4203, %v4337
      %v4448 = vadd.f32 %v4204, %v4339
      %v4449 = vadd.f32 %v4205, %v4342
      %v4450 = vadd.f32 %v4206, %v4344
      %v4451 = vadd.f32 %v4207, %v4347
      %v4452 = vadd.f32 %v4208, %v4349
      %v4453 = vadd.f32 %v4209, %v4352
      %v4454 = vadd.f32 %v4210, %v4354
      %v4455 = vadd.f32 %v4211, %v4357
      %v4456 = vadd.f32 %v4212, %v4359
      %v4457 = vadd.f32 %v4213, %v4362
      %v4458 = vadd.f32 %v4214, %v4364
      %v4459 = vadd.f32 %v4215, %v4367
      %v4460 = vadd.f32 %v4216, %v4369
      %v4461 = vadd.f32 %v4217, %v4372
      %v4462 = vadd.f32 %v4218, %v4374
      %v4463 = vadd.f32 %v4219, %v4377
      %v4464 = vadd.f32 %v4220, %v4379
      %v4465 = vadd.f32 %v4221, %v4382
      %v4466 = vadd.f32 %v4222, %v4384
      %v4467 = vadd.f32 %v4223, %v4387
      %v4468 = vadd.f32 %v4224, %v4389
      %v4469 = vadd.f32 %v4225, %v4392
      %v4470 = vadd.f32 %v4226, %v4394
      %v4471 = vadd.f32 %v4227, %v4397
      %v4472 = vadd.f32 %v4228, %v4399
      %v4473 = vadd.f32 %v4229, %v4402
      %v4474 = vadd.f32 %v4230, %v4404
      %v4475 = vadd.f32 %v4231, %v4407
      %v4476 = vadd.f32 %v4232, %v4409
      %v4477 = vadd.f32 %v4233, %v4412
      %v4478 = vadd.f32 %v4234, %v4414
      %v4479 = vld [vmem:[%s6] sm:$0x1]
      %v4481 = vlaneseq
      %v4482 = vshrl.u32 %v4481, 7
      %v4483 = vsub.s32 0, %v4482
      %v4484 = vrot.slane %v4479, %v4483
      %v4486 = vadd.f32 %v4447, %v4484
      %v4487 = vadd.f32 %v4448, %v4484
      %v4488 = vadd.f32 %v4449, %v4484
      %v4489 = vadd.f32 %v4450, %v4484
      %v4490 = vadd.f32 %v4451, %v4484
      %v4491 = vadd.f32 %v4452, %v4484
      %v4492 = vadd.f32 %v4453, %v4484
      %v4493 = vadd.f32 %v4454, %v4484
      %v4494 = vadd.f32 %v4455, %v4484
      %v4495 = vadd.f32 %v4456, %v4484
      %v4496 = vadd.f32 %v4457, %v4484
      %v4497 = vadd.f32 %v4458, %v4484
      %v4498 = vadd.f32 %v4459, %v4484
      %v4499 = vadd.f32 %v4460, %v4484
      %v4500 = vadd.f32 %v4461, %v4484
      %v4501 = vadd.f32 %v4462, %v4484
      %v4502 = vadd.f32 %v4463, %v4484
      %v4503 = vadd.f32 %v4464, %v4484
      %v4504 = vadd.f32 %v4465, %v4484
      %v4505 = vadd.f32 %v4466, %v4484
      %v4506 = vadd.f32 %v4467, %v4484
      %v4507 = vadd.f32 %v4468, %v4484
      %v4508 = vadd.f32 %v4469, %v4484
      %v4509 = vadd.f32 %v4470, %v4484
      %v4510 = vadd.f32 %v4471, %v4484
      %v4511 = vadd.f32 %v4472, %v4484
      %v4512 = vadd.f32 %v4473, %v4484
      %v4513 = vadd.f32 %v4474, %v4484
      %v4514 = vadd.f32 %v4475, %v4484
      %v4515 = vadd.f32 %v4476, %v4484
      %v4516 = vadd.f32 %v4477, %v4484
      %v4517 = vadd.f32 %v4478, %v4484
      %v4518 = vld [vmem:[%s7] sm:$0xff]
      %v4519 = vld [vmem:[%s7 + $0x8] sm:$0xff]
      %v4520 = vld [vmem:[%s7 + $0x10] sm:$0xff]
      %v4521 = vld [vmem:[%s7 + $0x18] sm:$0xff]
      %v4522 = vld [vmem:[%s8] sm:$0x1]
      %v4524 = vlaneseq
      %v4525 = vshrl.u32 %v4524, 7
      %v4526 = vsub.s32 0, %v4525
      %v4527 = vrot.slane %v4522, %v4526
      %v4530 = vsel %vm764, %v4486, 0
      %v4533 = vsel %vm764, %v4487, 0
      %v4536 = vsel %vm764, %v4488, 0
      %v4539 = vsel %vm764, %v4489, 0
      %v4542 = vsel %vm764, %v4490, 0
      %v4545 = vsel %vm764, %v4491, 0
      %v4548 = vsel %vm764, %v4492, 0
      %v4551 = vsel %vm764, %v4493, 0
      %v4554 = vsel %vm764, %v4494, 0
      %v4557 = vsel %vm764, %v4495, 0
      %v4560 = vsel %vm764, %v4496, 0
      %v4563 = vsel %vm764, %v4497, 0
      %v4566 = vsel %vm764, %v4498, 0
      %v4569 = vsel %vm764, %v4499, 0
      %v4572 = vsel %vm764, %v4500, 0
      %v4575 = vsel %vm764, %v4501, 0
      %v4578 = vsel %vm764, %v4502, 0
      %v4581 = vsel %vm764, %v4503, 0
      %v4584 = vsel %vm764, %v4504, 0
      %v4587 = vsel %vm764, %v4505, 0
      %v4590 = vsel %vm764, %v4506, 0
      %v4593 = vsel %vm764, %v4507, 0
      %v4596 = vsel %vm764, %v4508, 0
      %v4599 = vsel %vm764, %v4509, 0
      %v4602 = vsel %vm764, %v4510, 0
      %v4605 = vsel %vm764, %v4511, 0
      %v4608 = vsel %vm764, %v4512, 0
      %v4611 = vsel %vm764, %v4513, 0
      %v4614 = vsel %vm764, %v4514, 0
      %v4617 = vsel %vm764, %v4515, 0
      %v4620 = vsel %vm764, %v4516, 0
      %v4623 = vsel %vm764, %v4517, 0
      %4625 = vmatprep.subr.mxu0 0.0
      %4626 = vmatpush1.msra.mxu0 %v4518
      %4627 = vmatprep.subr.mxu0 0.0
      %4628 = vmatpush1.msra.mxu0 %v4519
      %4629 = vmatprep.subr.mxu0 0.0
      %4630 = vmatpush1.msra.mxu0 %v4520
      %4631 = vmatprep.subr.mxu0 0.0
      %4632 = vmatpush1.msra.mxu0 %v4521
      %4633 = vmatprep.subr.mxu0 0.0
      %4634 = vmatpush1.msra.mxu0 0.0
      %4635 = vmatprep.subr.mxu0 0.0
      %4636 = vmatpush1.msra.mxu0 0.0
      %4637 = vmatprep.subr.mxu0 0.0
      %4638 = vmatpush1.msra.mxu0 0.0
      %4639 = vmatprep.subr.mxu0 0.0
      %4640 = vmatpush1.msra.mxu0 0.0
      %4641 = vmatprep.subr.mxu0 0.0
      %4642 = vmatpush1.msra.mxu0 0.0
      %4643 = vmatprep.subr.mxu0 0.0
      %4644 = vmatpush1.msra.mxu0 0.0
      %4645 = vmatprep.subr.mxu0 0.0
      %4646 = vmatpush1.msra.mxu0 0.0
      %4647 = vmatprep.subr.mxu0 0.0
      %4648 = vmatpush1.msra.mxu0 0.0
      %4649 = vmatprep.subr.mxu0 0.0
      %4650 = vmatpush1.msra.mxu0 0.0
      %4651 = vmatprep.subr.mxu0 0.0
      %4652 = vmatpush1.msra.mxu0 0.0
      %4653 = vmatprep.subr.mxu0 0.0
      %4654 = vmatpush1.msra.mxu0 0.0
      %4655 = vmatprep.subr.mxu0 0.0
      %4656 = vmatpush1.msra.mxu0 0.0
      %4657 = vmatprep.subr.mxu0 0.0
      %4658 = vmatpush1.msra.mxu0 0.0
      %4659 = vmatprep.subr.mxu0 0.0
      %4660 = vmatpush1.msra.mxu0 0.0
      %4661 = vmatprep.subr.mxu0 0.0
      %4662 = vmatpush1.msra.mxu0 0.0
      %4663 = vmatprep.subr.mxu0 0.0
      %4664 = vmatpush1.msra.mxu0 0.0
      %4665 = vmatprep.subr.mxu0 0.0
      %4666 = vmatpush1.msra.mxu0 0.0
      %4667 = vmatprep.subr.mxu0 0.0
      %4668 = vmatpush1.msra.mxu0 0.0
      %4669 = vmatprep.subr.mxu0 0.0
      %4670 = vmatpush1.msra.mxu0 0.0
      %4671 = vmatprep.subr.mxu0 0.0
      %4672 = vmatpush1.msra.mxu0 0.0
      %4673 = vmatprep.subr.mxu0 0.0
      %4674 = vmatpush1.msra.mxu0 0.0
      %4675 = vmatprep.subr.mxu0 0.0
      %4676 = vmatpush1.msra.mxu0 0.0
      %4677 = vmatprep.subr.mxu0 0.0
      %4678 = vmatpush1.msra.mxu0 0.0
      %4679 = vmatprep.subr.mxu0 0.0
      %4680 = vmatpush1.msra.mxu0 0.0
      %4681 = vmatprep.subr.mxu0 0.0
      %4682 = vmatpush1.msra.mxu0 0.0
      %4683 = vmatprep.subr.mxu0 0.0
      %4684 = vmatpush1.msra.mxu0 0.0
      %4685 = vmatprep.subr.mxu0 0.0
      %4686 = vmatpush1.msra.mxu0 0.0
      %4687 = vmatprep.subr.mxu0 0.0
      %4688 = vmatpush1.msra.mxu0 0.0
      %4689 = vmatprep.mubr.f32.mxu0 0.0
      %4690 = vmatmul.mubr.f32.gmra.mrb[0].mxu0 %v4530
      %v4691 = vpop.f32.mrb[0].mxu0
      %v4692 = vadd.f32 %v4527, %v4691
      %v4693 = vpop.f32.mrb[0].mxu0
      %4694 = vmatprep.mubr.f32.mxu0 0.0
      %4695 = vmatmul.mubr.f32.gmra.mrb[0].mxu0 %v4533
      %v4696 = vpop.f32.mrb[0].mxu0
      %v4697 = vadd.f32 %v4527, %v4696
      %v4698 = vpop.f32.mrb[0].mxu0
      %4699 = vmatprep.mubr.f32.mxu0 0.0
      %4700 = vmatmul.mubr.f32.gmra.mrb[0].mxu0 %v4536
      %v4701 = vpop.f32.mrb[0].mxu0
      %v4702 = vadd.f32 %v4527, %v4701
      %v4703 = vpop.f32.mrb[0].mxu0
      %4704 = vmatprep.mubr.f32.mxu0 0.0
      %4705 = vmatmul.mubr.f32.gmra.mrb[0].mxu0 %v4539
      %v4706 = vpop.f32.mrb[0].mxu0
      %v4707 = vadd.f32 %v4527, %v4706
      %v4708 = vpop.f32.mrb[0].mxu0
      %4709 = vmatprep.mubr.f32.mxu0 0.0
      %4710 = vmatmul.mubr.f32.gmra.mrb[0].mxu0 %v4542
      %v4711 = vpop.f32.mrb[0].mxu0
      %v4712 = vadd.f32 %v4527, %v4711
      %v4713 = vpop.f32.mrb[0].mxu0
      %4714 = vmatprep.mubr.f32.mxu0 0.0
      %4715 = vmatmul.mubr.f32.gmra.mrb[0].mxu0 %v4545
      %v4716 = vpop.f32.mrb[0].mxu0
      %v4717 = vadd.f32 %v4527, %v4716
      %v4718 = vpop.f32.mrb[0].mxu0
      %4719 = vmatprep.mubr.f32.mxu0 0.0
      %4720 = vmatmul.mubr.f32.gmra.mrb[0].mxu0 %v4548
      %v4721 = vpop.f32.mrb[0].mxu0
      %v4722 = vadd.f32 %v4527, %v4721
      %v4723 = vpop.f32.mrb[0].mxu0
      %4724 = vmatprep.mubr.f32.mxu0 0.0
      %4725 = vmatmul.mubr.f32.gmra.mrb[0].mxu0 %v4551
      %v4726 = vpop.f32.mrb[0].mxu0
      %v4727 = vadd.f32 %v4527, %v4726
      %v4728 = vpop.f32.mrb[0].mxu0
      %4729 = vmatprep.mubr.f32.mxu0 0.0
      %4730 = vmatmul.mubr.f32.gmra.mrb[0].mxu0 %v4554
      %v4731 = vpop.f32.mrb[0].mxu0
      %v4732 = vadd.f32 %v4527, %v4731
      %v4733 = vpop.f32.mrb[0].mxu0
      %4734 = vmatprep.mubr.f32.mxu0 0.0
      %4735 = vmatmul.mubr.f32.gmra.mrb[0].mxu0 %v4557
      %v4736 = vpop.f32.mrb[0].mxu0
      %v4737 = vadd.f32 %v4527, %v4736
      %v4738 = vpop.f32.mrb[0].mxu0
      %4739 = vmatprep.mubr.f32.mxu0 0.0
      %4740 = vmatmul.mubr.f32.gmra.mrb[0].mxu0 %v4560
      %v4741 = vpop.f32.mrb[0].mxu0
      %v4742 = vadd.f32 %v4527, %v4741
      %v4743 = vpop.f32.mrb[0].mxu0
      %4744 = vmatprep.mubr.f32.mxu0 0.0
      %4745 = vmatmul.mubr.f32.gmra.mrb[0].mxu0 %v4563
      %v4746 = vpop.f32.mrb[0].mxu0
      %v4747 = vadd.f32 %v4527, %v4746
      %v4748 = vpop.f32.mrb[0].mxu0
      %4749 = vmatprep.mubr.f32.mxu0 0.0
      %4750 = vmatmul.mubr.f32.gmra.mrb[0].mxu0 %v4566
      %v4751 = vpop.f32.mrb[0].mxu0
      %v4752 = vadd.f32 %v4527, %v4751
      %v4753 = vpop.f32.mrb[0].mxu0
      %4754 = vmatprep.mubr.f32.mxu0 0.0
      %4755 = vmatmul.mubr.f32.gmra.mrb[0].mxu0 %v4569
      %v4756 = vpop.f32.mrb[0].mxu0
      %v4757 = vadd.f32 %v4527, %v4756
      %v4758 = vpop.f32.mrb[0].mxu0
      %4759 = vmatprep.mubr.f32.mxu0 0.0
      %4760 = vmatmul.mubr.f32.gmra.mrb[0].mxu0 %v4572
      %v4761 = vpop.f32.mrb[0].mxu0
      %v4762 = vadd.f32 %v4527, %v4761
      %v4763 = vpop.f32.mrb[0].mxu0
      %4764 = vmatprep.mubr.f32.mxu0 0.0
      %4765 = vmatmul.mubr.f32.gmra.mrb[0].mxu0 %v4575
      %v4766 = vpop.f32.mrb[0].mxu0
      %v4767 = vadd.f32 %v4527, %v4766
      %v4768 = vpop.f32.mrb[0].mxu0
      %4769 = vmatprep.mubr.f32.mxu0 0.0
      %4770 = vmatmul.mubr.f32.gmra.mrb[0].mxu0 %v4578
      %v4771 = vpop.f32.mrb[0].mxu0
      %v4772 = vadd.f32 %v4527, %v4771
      %v4773 = vpop.f32.mrb[0].mxu0
      %4774 = vmatprep.mubr.f32.mxu0 0.0
      %4775 = vmatmul.mubr.f32.gmra.mrb[0].mxu0 %v4581
      %v4776 = vpop.f32.mrb[0].mxu0
      %v4777 = vadd.f32 %v4527, %v4776
      %v4778 = vpop.f32.mrb[0].mxu0
      %4779 = vmatprep.mubr.f32.mxu0 0.0
      %4780 = vmatmul.mubr.f32.gmra.mrb[0].mxu0 %v4584
      %v4781 = vpop.f32.mrb[0].mxu0
      %v4782 = vadd.f32 %v4527, %v4781
      %v4783 = vpop.f32.mrb[0].mxu0
      %4784 = vmatprep.mubr.f32.mxu0 0.0
      %4785 = vmatmul.mubr.f32.gmra.mrb[0].mxu0 %v4587
      %v4786 = vpop.f32.mrb[0].mxu0
      %v4787 = vadd.f32 %v4527, %v4786
      %v4788 = vpop.f32.mrb[0].mxu0
      %4789 = vmatprep.mubr.f32.mxu0 0.0
      %4790 = vmatmul.mubr.f32.gmra.mrb[0].mxu0 %v4590
      %v4791 = vpop.f32.mrb[0].mxu0
      %v4792 = vadd.f32 %v4527, %v4791
      %v4793 = vpop.f32.mrb[0].mxu0
      %4794 = vmatprep.mubr.f32.mxu0 0.0
      %4795 = vmatmul.mubr.f32.gmra.mrb[0].mxu0 %v4593
      %v4796 = vpop.f32.mrb[0].mxu0
      %v4797 = vadd.f32 %v4527, %v4796
      %v4798 = vpop.f32.mrb[0].mxu0
      %4799 = vmatprep.mubr.f32.mxu0 0.0
      %4800 = vmatmul.mubr.f32.gmra.mrb[0].mxu0 %v4596
      %v4801 = vpop.f32.mrb[0].mxu0
      %v4802 = vadd.f32 %v4527, %v4801
      %v4803 = vpop.f32.mrb[0].mxu0
      %4804 = vmatprep.mubr.f32.mxu0 0.0
      %4805 = vmatmul.mubr.f32.gmra.mrb[0].mxu0 %v4599
      %v4806 = vpop.f32.mrb[0].mxu0
      %v4807 = vadd.f32 %v4527, %v4806
      %v4808 = vpop.f32.mrb[0].mxu0
      %4809 = vmatprep.mubr.f32.mxu0 0.0
      %4810 = vmatmul.mubr.f32.gmra.mrb[0].mxu0 %v4602
      %v4811 = vpop.f32.mrb[0].mxu0
      %v4812 = vadd.f32 %v4527, %v4811
      %v4813 = vpop.f32.mrb[0].mxu0
      %4814 = vmatprep.mubr.f32.mxu0 0.0
      %4815 = vmatmul.mubr.f32.gmra.mrb[0].mxu0 %v4605
      %v4816 = vpop.f32.mrb[0].mxu0
      %v4817 = vadd.f32 %v4527, %v4816
      %v4818 = vpop.f32.mrb[0].mxu0
      %4819 = vmatprep.mubr.f32.mxu0 0.0
      %4820 = vmatmul.mubr.f32.gmra.mrb[0].mxu0 %v4608
      %v4821 = vpop.f32.mrb[0].mxu0
      %v4822 = vadd.f32 %v4527, %v4821
      %v4823 = vpop.f32.mrb[0].mxu0
      %4824 = vmatprep.mubr.f32.mxu0 0.0
      %4825 = vmatmul.mubr.f32.gmra.mrb[0].mxu0 %v4611
      %v4826 = vpop.f32.mrb[0].mxu0
      %v4827 = vadd.f32 %v4527, %v4826
      %v4828 = vpop.f32.mrb[0].mxu0
      %4829 = vmatprep.mubr.f32.mxu0 0.0
      %4830 = vmatmul.mubr.f32.gmra.mrb[0].mxu0 %v4614
      %v4831 = vpop.f32.mrb[0].mxu0
      %v4832 = vadd.f32 %v4527, %v4831
      %v4833 = vpop.f32.mrb[0].mxu0
      %4834 = vmatprep.mubr.f32.mxu0 0.0
      %4835 = vmatmul.mubr.f32.gmra.mrb[0].mxu0 %v4617
      %v4836 = vpop.f32.mrb[0].mxu0
      %v4837 = vadd.f32 %v4527, %v4836
      %v4838 = vpop.f32.mrb[0].mxu0
      %4839 = vmatprep.mubr.f32.mxu0 0.0
      %4840 = vmatmul.mubr.f32.gmra.mrb[0].mxu0 %v4620
      %v4841 = vpop.f32.mrb[0].mxu0
      %v4842 = vadd.f32 %v4527, %v4841
      %v4843 = vpop.f32.mrb[0].mxu0
      %4844 = vmatprep.mubr.f32.mxu0 0.0
      %4845 = vmatmul.mubr.f32.gmra.mrb[0].mxu0 %v4623
      %v4846 = vpop.f32.mrb[0].mxu0
      %v4847 = vadd.f32 %v4527, %v4846
      %v4848 = vpop.f32.mrb[0].mxu0
      %4849 = vdwg.mxu0
      %vm4850 = vcmp.lt.s32.totalorder %v2620, 4
      %vm4851 = vcmp.ge.s32.totalorder %v2620, 8
      %vm4852 = vmor %vm4850, %vm4851
      %v4853 = vmax.f32 %v4692, 0.0
      %v4854 = vmax.f32 %v4697, 0.0
      %v4855 = vmax.f32 %v4702, 0.0
      %v4856 = vmax.f32 %v4707, 0.0
      %v4857 = vmax.f32 %v4712, 0.0
      %v4858 = vmax.f32 %v4717, 0.0
      %v4859 = vmax.f32 %v4722, 0.0
      %v4860 = vmax.f32 %v4727, 0.0
      %v4861 = vmax.f32 %v4732, 0.0
      %v4862 = vmax.f32 %v4737, 0.0
      %v4863 = vmax.f32 %v4742, 0.0
      %v4864 = vmax.f32 %v4747, 0.0
      %v4865 = vmax.f32 %v4752, 0.0
      %v4866 = vmax.f32 %v4757, 0.0
      %v4867 = vmax.f32 %v4762, 0.0
      %v4868 = vmax.f32 %v4767, 0.0
      %v4869 = vmax.f32 %v4772, 0.0
      %v4870 = vmax.f32 %v4777, 0.0
      %v4871 = vmax.f32 %v4782, 0.0
      %v4872 = vmax.f32 %v4787, 0.0
      %v4873 = vmax.f32 %v4792, 0.0
      %v4874 = vmax.f32 %v4797, 0.0
      %v4875 = vmax.f32 %v4802, 0.0
      %v4876 = vmax.f32 %v4807, 0.0
      %v4877 = vmax.f32 %v4812, 0.0
      %v4878 = vmax.f32 %v4817, 0.0
      %v4879 = vmax.f32 %v4822, 0.0
      %v4880 = vmax.f32 %v4827, 0.0
      %v4881 = vmax.f32 %v4832, 0.0
      %v4882 = vmax.f32 %v4837, 0.0
      %v4883 = vmax.f32 %v4842, 0.0
      %v4884 = vmax.f32 %v4847, 0.0
      %v4885 = vmin.f32 %v4853, 6.0
      %v4886 = vmin.f32 %v4854, 6.0
      %v4887 = vmin.f32 %v4855, 6.0
      %v4888 = vmin.f32 %v4856, 6.0
      %v4889 = vmin.f32 %v4857, 6.0
      %v4890 = vmin.f32 %v4858, 6.0
      %v4891 = vmin.f32 %v4859, 6.0
      %v4892 = vmin.f32 %v4860, 6.0
      %v4893 = vmin.f32 %v4861, 6.0
      %v4894 = vmin.f32 %v4862, 6.0
      %v4895 = vmin.f32 %v4863, 6.0
      %v4896 = vmin.f32 %v4864, 6.0
      %v4897 = vmin.f32 %v4865, 6.0
      %v4898 = vmin.f32 %v4866, 6.0
      %v4899 = vmin.f32 %v4867, 6.0
      %v4900 = vmin.f32 %v4868, 6.0
      %v4901 = vmin.f32 %v4869, 6.0
      %v4902 = vmin.f32 %v4870, 6.0
      %v4903 = vmin.f32 %v4871, 6.0
      %v4904 = vmin.f32 %v4872, 6.0
      %v4905 = vmin.f32 %v4873, 6.0
      %v4906 = vmin.f32 %v4874, 6.0
      %v4907 = vmin.f32 %v4875, 6.0
      %v4908 = vmin.f32 %v4876, 6.0
      %v4909 = vmin.f32 %v4877, 6.0
      %v4910 = vmin.f32 %v4878, 6.0
      %v4911 = vmin.f32 %v4879, 6.0
      %v4912 = vmin.f32 %v4880, 6.0
      %v4913 = vmin.f32 %v4881, 6.0
      %v4914 = vmin.f32 %v4882, 6.0
      %v4915 = vmin.f32 %v4883, 6.0
      %v4916 = vmin.f32 %v4884, 6.0
      %v4917 = vsel %vm4852, 1, 0
      %vm4918 = vcmp.eq.s32.totalorder %v4917, 1
      %v4919 = vsel %vm4918, %v4885, %v4692
      %v4920 = vsel %vm4918, %v4886, %v4697
      %v4921 = vsel %vm4918, %v4887, %v4702
      %v4922 = vsel %vm4918, %v4888, %v4707
      %v4923 = vsel %vm4918, %v4889, %v4712
      %v4924 = vsel %vm4918, %v4890, %v4717
      %v4925 = vsel %vm4918, %v4891, %v4722
      %v4926 = vsel %vm4918, %v4892, %v4727
      %v4927 = vsel %vm4918, %v4893, %v4732
      %v4928 = vsel %vm4918, %v4894, %v4737
      %v4929 = vsel %vm4918, %v4895, %v4742
      %v4930 = vsel %vm4918, %v4896, %v4747
      %v4931 = vsel %vm4918, %v4897, %v4752
      %v4932 = vsel %vm4918, %v4898, %v4757
      %v4933 = vsel %vm4918, %v4899, %v4762
      %v4934 = vsel %vm4918, %v4900, %v4767
      %v4935 = vsel %vm4918, %v4901, %v4772
      %v4936 = vsel %vm4918, %v4902, %v4777
      %v4937 = vsel %vm4918, %v4903, %v4782
      %v4938 = vsel %vm4918, %v4904, %v4787
      %v4939 = vsel %vm4918, %v4905, %v4792
      %v4940 = vsel %vm4918, %v4906, %v4797
      %v4941 = vsel %vm4918, %v4907, %v4802
      %v4942 = vsel %vm4918, %v4908, %v4807
      %v4943 = vsel %vm4918, %v4909, %v4812
      %v4944 = vsel %vm4918, %v4910, %v4817
      %v4945 = vsel %vm4918, %v4911, %v4822
      %v4946 = vsel %vm4918, %v4912, %v4827
      %v4947 = vsel %vm4918, %v4913, %v4832
      %v4948 = vsel %vm4918, %v4914, %v4837
      %v4949 = vsel %vm4918, %v4915, %v4842
      %v4950 = vsel %vm4918, %v4916, %v4847
      %4951 = vst.msk [vmem:[%s332] sm:$0xff] %vm374, %v4919
      %4952 = vst.msk [vmem:[%s332 + $0x8] sm:$0xff] %vm374, %v4920
      %4953 = vst.msk [vmem:[%s332 + $0x10] sm:$0xff] %vm374, %v4921
      %4954 = vst.msk [vmem:[%s332 + $0x18] sm:$0xff] %vm374, %v4922
      %4955 = vst.msk [vmem:[%s332 + $0x20] sm:$0xff] %vm374, %v4923
      %4956 = vst.msk [vmem:[%s332 + $0x28] sm:$0xff] %vm374, %v4924
      %4957 = vst.msk [vmem:[%s332 + $0x30] sm:$0xff] %vm374, %v4925
      %4958 = vst.msk [vmem:[%s332 + $0x38] sm:$0xff] %vm374, %v4926
      %4959 = vst.msk [vmem:[%s332 + $0x40] sm:$0xff] %vm374, %v4927
      %4960 = vst.msk [vmem:[%s332 + $0x48] sm:$0xff] %vm374, %v4928
      %4961 = vst.msk [vmem:[%s332 + $0x50] sm:$0xff] %vm374, %v4929
      %4962 = vst.msk [vmem:[%s332 + $0x58] sm:$0xff] %vm374, %v4930
      %4963 = vst.msk [vmem:[%s332 + $0x60] sm:$0xff] %vm374, %v4931
      %4964 = vst.msk [vmem:[%s332 + $0x68] sm:$0xff] %vm374, %v4932
      %4965 = vst.msk [vmem:[%s332 + $0x70] sm:$0xff] %vm374, %v4933
      %4966 = vst.msk [vmem:[%s332 + $0x78] sm:$0xff] %vm374, %v4934
      %4967 = vst.msk [vmem:[%s332 + $0x80] sm:$0xff] %vm374, %v4935
      %4968 = vst.msk [vmem:[%s332 + $0x88] sm:$0xff] %vm374, %v4936
      %4969 = vst.msk [vmem:[%s332 + $0x90] sm:$0xff] %vm374, %v4937
      %4970 = vst.msk [vmem:[%s332 + $0x98] sm:$0xff] %vm374, %v4938
      %4971 = vst.msk [vmem:[%s332 + $0xa0] sm:$0xff] %vm374, %v4939
      %4972 = vst.msk [vmem:[%s332 + $0xa8] sm:$0xff] %vm374, %v4940
      %4973 = vst.msk [vmem:[%s332 + $0xb0] sm:$0xff] %vm374, %v4941
      %4974 = vst.msk [vmem:[%s332 + $0xb8] sm:$0xff] %vm374, %v4942
      %4975 = vst.msk [vmem:[%s332 + $0xc0] sm:$0xff] %vm374, %v4943
      %4976 = vst.msk [vmem:[%s332 + $0xc8] sm:$0xff] %vm374, %v4944
      %4977 = vst.msk [vmem:[%s332 + $0xd0] sm:$0xff] %vm374, %v4945
      %4978 = vst.msk [vmem:[%s332 + $0xd8] sm:$0xff] %vm374, %v4946
      %4979 = vst.msk [vmem:[%s332 + $0xe0] sm:$0xff] %vm374, %v4947
      %4980 = vst.msk [vmem:[%s332 + $0xe8] sm:$0xff] %vm374, %v4948
      %4981 = vst.msk [vmem:[%s332 + $0xf0] sm:$0xff] %vm374, %v4949
      %4982 = vst.msk [vmem:[%s332 + $0xf8] sm:$0xff] %vm374, %v4950
      %p4983 = scmp.lt.s32.totalorder %s20, 1
      %s4984 = scalar_select %p4983, %s20, 1
      %s4985 = smul.addr %s4984, 32
      %s4986 = smul.addr %s4985, 8
      %s4987 = scalar_lea.vmem %s9, %s4986
      // Predicated region
      $region57: #{_lambda_.1} parent=55 // pred_check
        %p4988 = pneg %p232
      $region58: #{_lambda_.1} parent=55 // pred_check_branch
        %4990 = sbr.rel (%p4988) target = $region60
      $region59: #{_lambda_.1} parent=55 // pred_region
        _
      $region60: #{_lambda_.1} parent=55 // pred_fallthru
        _
    $region56: #{_lambda_.1} parent=5 // pred_fallthru
      _
    %p4991 = scmp.le.s32.totalorder 2, %s15
    // Predicated region
    $region61: #{_lambda_.1} parent=5 // pred_check
      %p4992 = pneg %p4991
    $region62: #{_lambda_.1} parent=5 // pred_check_branch
      %4994 = sbr.rel (%p4992) target = $region64
    $region63: #{_lambda_.1} parent=5 // pred_region
      %s4995 = ssub.s32 %s15, 2
      // Predicated region
      $region65: #{_lambda_.1} parent=63 // pred_check
        %p4996 = pneg %p238
      $region66: #{_lambda_.1} parent=63 // pred_check_branch
        %4998 = sbr.rel (%p4996) target = $region68
      $region67: #{_lambda_.1} parent=63 // pred_region
        %p4999 = scmp.lt.s32.totalorder %s21, 1
        %s5000 = scalar_select %p4999, %s21, 1
        %s5001 = smul.addr %s5000, 32
        %s5002 = smul.addr %s5001, 8
        %s5003 = scalar_lea.vmem %s9, %s5002
      $region68: #{_lambda_.1} parent=63 // pred_fallthru
        _
    $region64: #{_lambda_.1} parent=5 // pred_fallthru
      _
  $region6: #{_lambda_.1} parent=0 // loop_footer
    %s19 = sadd.s32 1, %s15
  $region7: #{_lambda_.1} parent=0 // loop_footer_branch
    %14 = sbr.rel target = $region3
  $region8: #{_lambda_.1} parent=0 // loop_exit
    _

</llo_original>
